<compile_context>
chip_gen: v6e
topology: v6e:2x2x1
jax: 0.10.0
libtpu: 0.0.40
codegen_flags: <defaults>
</compile_context>

<pallas_src>
import functools

import jax
import jax.numpy as jnp
from jax.experimental import pallas as pl
from jax.experimental.pallas import tpu as pltpu

NCH = 80                                   # real channel count of the TCN
CP = 128                                   # lane-padded channel count
BLOCK_DILATIONS = (1, 2, 4, 8, 16, 32)     # dilations of blocks 1..6 (block 0: k=1)


def _prelu(x, a):
    return jnp.where(x > 0, x, a * x)


# --------------------------------- kernel ---------------------------------- #

def _disc_kernel(x_ref, scal_ref, taps_ref, w2b0_ref, rows_ref, bias_ref,
                 pw_ref, out_ref, *, dilations, seq_len, batch_tile,
                 split_taps):
    """Fully fused Discriminator forward for one tile of `batch_tile` examples.

    x_ref    : (1, M, 1)    f32   raw input, one value per (example, t) row
    scal_ref : (22,)        f32   SMEM: 21 PReLU alphas + head constant
    taps_ref : (12, 2CP,CP) f32/bf16  tap-fused conv weights of blocks 1..6
    w2b0_ref : (CP, CP)     f32/bf16  block-0 conv2 (80->80, k=1)
    rows_ref : (8, CP)      f32   [0]=blk0 conv1 row, [1]=blk0 downsample row,
                                  [2]=last 1x1 conv (80->1) row
    bias_ref : (16, CP)     f32   [0..2]=blk0 b1,b2,bd; [3+2i],[4+2i]=blk(i+1)
    pw_ref   : (M, 1)       f32   to_prob Linear weight, tiled per example
    out_ref  : (1, Bt, CP)  f32   sigmoid prob, broadcast along lanes
    """
    L = seq_len
    Bt = batch_tile
    M = Bt * L
    mm_dtype = taps_ref.dtype

    x_col = x_ref[0]                         # (M, 1) f32
    rows = rows_ref[...]                     # (8, CP)
    biases = bias_ref[...]                   # (16, CP)
    pw_col = pw_ref[...]                     # (M, 1)

    # Per-example time index (hoisted, reused for every causal mask).
    t_idx = jax.lax.broadcasted_iota(jnp.int32, (Bt, L, CP), 1).reshape(M, CP)

    def causal_shift(v, d):
        # y[b, t] = v[b, t-d], zeros for t < d.  Roll the flattened row axis;
        # rows that would receive data from the previous example (t < d) are
        # exactly the rows the causal mask zeroes, so batches never mix.
        if d >= L:
            return jnp.zeros_like(v)
        return jnp.where(t_idx >= d, pltpu.roll(v, shift=d, axis=0),
                         jnp.zeros_like(v))

    def mm(a, w):
        return jnp.dot(a.astype(mm_dtype), w,
                       preferred_element_type=jnp.float32)

    def tap_mm(v_sh, v, w):
        # k=2 dilated causal conv as one (M,2CP)x(2CP,CP) matmul, or two
        # K=CP matmuls (recommended on v5e, whose MXU is 4x128^2).
        if split_taps:
            return mm(v_sh, w[:CP, :]) + mm(v, w[CP:, :])
        return mm(jnp.concatenate([v_sh, v], axis=-1), w)

    # ---- block 0: kernel_size=1, cin=1 -> VPU broadcast multiplies --------
    a1, a2, ao = scal_ref[0], scal_ref[1], scal_ref[2]
    h1 = _prelu(x_col * rows[0:1, :] + biases[0:1, :], a1)           # (M, CP)
    skip = _prelu(mm(h1, w2b0_ref[...]) + biases[1:2, :], a2)
    res = x_col * rows[1:2, :] + biases[2:3, :]
    x = _prelu(skip + res, ao)
    skip_acc = skip

    # ---- blocks 1..6: k=2 dilated causal convs, identity residual ---------
    for i, d in enumerate(dilations):
        a1 = scal_ref[3 * (i + 1) + 0]
        a2 = scal_ref[3 * (i + 1) + 1]
        ao = scal_ref[3 * (i + 1) + 2]
        b1 = biases[3 + 2 * i:4 + 2 * i, :]
        b2 = biases[4 + 2 * i:5 + 2 * i, :]

        xin = x
        h1 = _prelu(tap_mm(causal_shift(xin, d), xin, taps_ref[2 * i]) + b1, a1)
        skip = _prelu(tap_mm(causal_shift(h1, d), h1, taps_ref[2 * i + 1]) + b2,
                      a2)
        x = _prelu(skip + xin, ao)            # identity residual -- no matmul
        skip_acc = skip_acc + skip

    # ---- head: last 1x1 conv (80->1) + Linear(L->1) + sigmoid -------------
    head_const = scal_ref[3 * (1 + len(dilations))]
    y = x + skip_acc                                               # (M, CP)
    weighted = (y * rows[2:3, :]) * pw_col                         # (M, CP)
    seg = jnp.sum(weighted.reshape(Bt, L, CP), axis=1)             # (Bt, CP)
    logit = jnp.sum(seg, axis=-1, keepdims=True) + head_const      # (Bt, 1)
    out_ref[0] = jnp.broadcast_to(jax.nn.sigmoid(logit), (Bt, CP))


# ----------------------------- pallas wrapper ------------------------------ #

def discriminator_forward(x, params, *, matmul_dtype=jnp.bfloat16,
                          split_tap_matmuls=None):
    """x: (B, 1, seq_len) f32 (PyTorch NCW).  Returns (B,) sigmoid probs."""
    B, C, L = x.shape
    assert C == 1, "Discriminator expects a single input channel"

    if split_tap_matmuls is None:
        try:
            kind = jax.devices()[0].device_kind.lower()
        except Exception:
            kind = ""
        # v5e's MXU is 4x128^2: a 256-deep contraction buys nothing there.
        split_tap_matmuls = ("v5" in kind) or ("v4" in kind)

    # Fold the batch into the matmul M dimension.  Two grid steps when the
    # batch is even (so v7x's two TensorCores both get work), otherwise one.
    G = 2 if (B % 2 == 0 and B >= 2) else 1
    Bt = B // G
    M = Bt * L

    x_col = x.astype(jnp.float32).reshape(G, M, 1)

    taps, w2b0 = params["taps"], params["w2b0"]
    rows, biases = params["rows"], params["biases"]
    scal = params["scalars"]
    if matmul_dtype != jnp.float32:
        taps = taps.astype(matmul_dtype)
        w2b0 = w2b0.astype(matmul_dtype)
    pw_col = jnp.tile(params["lin_w_col"], (Bt, 1))                 # (M, 1)

    kernel = functools.partial(
        _disc_kernel, dilations=BLOCK_DILATIONS, seq_len=L,
        batch_tile=Bt, split_taps=bool(split_tap_matmuls))

    # Advisory cost hint for XLA's scheduler.
    flops = 2 * B * L * (CP * CP + 2 * len(BLOCK_DILATIONS) * 2 * CP * CP)
    weight_bytes = sum(int(a.size) * a.dtype.itemsize
                       for a in (taps, w2b0, rows, biases, scal))
    bytes_accessed = int(weight_bytes + G * M * 4 + M * 4 + B * CP * 4)
    cost = pl.CostEstimate(flops=int(flops), transcendentals=int(B),
                           bytes_accessed=bytes_accessed)

    # VMEM budget: weights (double-buffered) + ~16 live (M, CP) f32 slabs.
    act_bytes = M * CP * 4 * 16
    vmem_limit = int(min(64 * 2 ** 20,
                         max(32 * 2 ** 20, 2 * weight_bytes + act_bytes)))

    out = pl.pallas_call(
        kernel,
        out_shape=jax.ShapeDtypeStruct((G, Bt, CP), jnp.float32),
        grid_spec=pltpu.PrefetchScalarGridSpec(
            num_scalar_prefetch=0,
            grid=(G,),
            in_specs=[
                pl.BlockSpec((1, M, 1), lambda g: (g, 0, 0)),
                pl.BlockSpec(memory_space=pltpu.MemorySpace.SMEM),
                pl.BlockSpec(taps.shape, lambda g: (0, 0, 0)),
                pl.BlockSpec(w2b0.shape, lambda g: (0, 0)),
                pl.BlockSpec(rows.shape, lambda g: (0, 0)),
                pl.BlockSpec(biases.shape, lambda g: (0, 0)),
                pl.BlockSpec((M, 1), lambda g: (0, 0)),
            ],
            out_specs=pl.BlockSpec((1, Bt, CP), lambda g: (g, 0, 0))),
        compiler_params=pltpu.CompilerParams(
            dimension_semantics=("parallel",),
            vmem_limit_bytes=vmem_limit),
        cost_estimate=cost,
    )(x_col, scal, taps, w2b0, rows, biases, pw_col)
    return out.reshape(B, CP)[:, 0]


# --------------------------- parameter handling ----------------------------- #

def _weight_norm(v, g):
    # PyTorch weight_norm, dim=0: w = g * v / ||v||  (norm over (Cin, K) per Cout)
    norm = jnp.sqrt(jnp.sum(v * v, axis=(1, 2), keepdims=True))
    return g[:, None, None] * v / norm


def init_params(seq_len, key):
    """Natural (PyTorch-layout) parameters with effective (weight-normed) weights."""
    keys = iter(jax.random.split(key, 64))
    nk = lambda: next(keys)

    def conv_wn(cout, cin, k):
        v = 0.1 * jax.random.normal(nk(), (cout, cin, k), jnp.float32)
        g = 0.5 + jax.random.uniform(nk(), (cout,), jnp.float32)
        b = 0.1 * jax.random.normal(nk(), (cout,), jnp.float32)
        return _weight_norm(v, g), b

    a = 0.25   # PReLU default init
    blocks = []

    # Block 0: TemporalBlock(1, 80, k=1, dilation=1, padding=0) + downsample(1->80)
    w1, b1 = conv_wn(NCH, 1, 1)
    w2, b2 = conv_wn(NCH, NCH, 1)
    wd = 0.1 * jax.random.normal(nk(), (NCH, 1, 1), jnp.float32)
    bd = 0.1 * jax.random.normal(nk(), (NCH,), jnp.float32)
    blocks.append(dict(w1=w1, b1=b1, w2=w2, b2=b2, wd=wd, bd=bd,
                       a1=a, a2=a, ao=a))

    # Blocks 1..6: TemporalBlock(80, 80, k=2, dilation=d, padding=d)
    for _ in BLOCK_DILATIONS:
        w1, b1 = conv_wn(NCH, NCH, 2)
        w2, b2 = conv_wn(NCH, NCH, 2)
        blocks.append(dict(w1=w1, b1=b1, w2=w2, b2=b2, a1=a, a2=a, ao=a))

    last_w = 0.1 * jax.random.normal(nk(), (1, NCH, 1), jnp.float32)
    last_b = 0.1 * jax.random.normal(nk(), (1,), jnp.float32)
    lin_w = 0.1 * jax.random.normal(nk(), (1, seq_len), jnp.float32)
    lin_b = 0.1 * jax.random.normal(nk(), (1,), jnp.float32)

    return dict(blocks=blocks, last_w=last_w, last_b=last_b,
                lin_w=lin_w, lin_b=lin_b)


def pack_params(natural, seq_len):
    """Pack natural params into the 5-array kernel-ready layout."""
    f32 = jnp.float32
    b0 = natural["blocks"][0]

    def tap_block(w):   # w: (80, 80, 2) -> (2CP, CP); rows 0..127 act on x[t-d]
        m = jnp.zeros((2 * CP, CP), f32)
        m = m.at[:NCH, :NCH].set(w[:, :, 0].T)           # tap on x[t-d]
        m = m.at[CP:CP + NCH, :NCH].set(w[:, :, 1].T)    # tap on x[t]
        return m

    taps = jnp.stack([tap_block(blk[k]) for blk in natural["blocks"][1:]
                      for k in ("w1", "w2")])                        # (12,2CP,CP)

    w2b0 = jnp.zeros((CP, CP), f32).at[:NCH, :NCH].set(b0["w2"][:, :, 0].T)

    rows = jnp.zeros((8, CP), f32)
    rows = rows.at[0, :NCH].set(b0["w1"][:, 0, 0])            # blk0 conv1 (1->80)
    rows = rows.at[1, :NCH].set(b0["wd"][:, 0, 0])            # blk0 downsample
    rows = rows.at[2, :NCH].set(natural["last_w"][0, :, 0])   # last conv (80->1)

    biases = jnp.zeros((16, CP), f32)
    biases = biases.at[0, :NCH].set(b0["b1"])
    biases = biases.at[1, :NCH].set(b0["b2"])
    biases = biases.at[2, :NCH].set(b0["bd"])
    for i, blk in enumerate(natural["blocks"][1:]):
        biases = biases.at[3 + 2 * i, :NCH].set(blk["b1"])
        biases = biases.at[4 + 2 * i, :NCH].set(blk["b2"])

    # Head constant: last_b * sum(lin_w) + lin_b  (last-conv bias folded into
    # the per-example scalar, algebraically identical to the reference).
    head_const = (natural["last_b"][0] * jnp.sum(natural["lin_w"])
                  + natural["lin_b"][0])
    alphas = [b0["a1"], b0["a2"], b0["ao"]]
    for blk in natural["blocks"][1:]:
        alphas += [blk["a1"], blk["a2"], blk["ao"]]
    scalars = jnp.stack([jnp.asarray(s, f32).reshape(()) for s in alphas]
                        + [jnp.asarray(head_const, f32).reshape(())])   # (22,)

    lin_w_col = natural["lin_w"].reshape(seq_len, 1).astype(f32)
    return dict(taps=taps, w2b0=w2b0, rows=rows, biases=biases,
                scalars=scalars, lin_w_col=lin_w_col)


# ---------------------------- pure-JAX reference ---------------------------- #

def _ref_conv1d(x, w, b, dilation, padding):
    y = jax.lax.conv_general_dilated(
        x, w, window_strides=(1,), padding=[(padding, padding)],
        rhs_dilation=(dilation,), dimension_numbers=("NCH", "OIH", "NCH"),
        precision=jax.lax.Precision.HIGHEST)
    return y + b[None, :, None]


def reference_forward(x, natural):
    skips = []
    h = x
    for i, blk in enumerate(natural["blocks"]):
        d = 1 if i == 0 else BLOCK_DILATIONS[i - 1]
        pad = 0 if i == 0 else d
        o = _ref_conv1d(h, blk["w1"], blk["b1"], d, pad)
        if pad:
            o = o[:, :, :-pad]
        o = _prelu(o, blk["a1"])
        o = _ref_conv1d(o, blk["w2"], blk["b2"], d, pad)
        if pad:
            o = o[:, :, :-pad]
        skip = _prelu(o, blk["a2"])
        res = _ref_conv1d(h, blk["wd"], blk["bd"], 1, 0) if "wd" in blk else h
        h = _prelu(skip + res, blk["ao"])
        skips.append(skip)
    y = h + sum(skips)
    z = _ref_conv1d(y, natural["last_w"], natural["last_b"], 1, 0)   # (B, 1, L)
    logits = jnp.dot(z[:, 0, :], natural["lin_w"].T,
                     precision=jax.lax.Precision.HIGHEST) + natural["lin_b"]
    return jax.nn.sigmoid(logits).squeeze()


# ----------------------------------- main ----------------------------------- #

if __name__ == "__main__":
    key = jax.random.PRNGKey(0)
    pkey, xkey = jax.random.split(key)

    batch = 4
    seq_len = 64

    natural = init_params(seq_len, pkey)
    packed = pack_params(natural, seq_len)
    x = jax.random.normal(xkey, (batch, 1, seq_len), jnp.float32)   # NCW input

    ref = reference_forward(x, natural)

    # 1) f32 MXU-operand path (fused K=256 taps) -- strict check vs reference.
    fwd_f32 = jax.jit(functools.partial(discriminator_forward,
                                        matmul_dtype=jnp.float32,
                                        split_tap_matmuls=False))
    out = jax.block_until_ready(fwd_f32(x, packed))
    assert out.shape == (batch,), out.shape
    assert bool(jnp.all(jnp.isfinite(out)))
    assert bool(jnp.all((out > 0.0) & (out < 1.0)))          # sigmoid outputs
    err = float(jnp.max(jnp.abs(out - ref)))
    assert err < 1e-3, f"f32 fused-tap mismatch vs reference: {err}"

    # 2) split-K tap path (two K=128 dots; recommended layout on v5e), f32.
    fwd_split = jax.jit(functools.partial(discriminator_forward,
                                          matmul_dtype=jnp.float32,
                                          split_tap_matmuls=True))
    out_s = jax.block_until_ready(fwd_split(x, packed))
    err_s = float(jnp.max(jnp.abs(out_s - ref)))
    assert err_s < 1e-3, f"f32 split-tap mismatch vs reference: {err_s}"

    # 3) bf16 MXU-operand path (recommended on v6e / v7x); f32 accumulation.
    fwd_bf16 = jax.jit(functools.partial(discriminator_forward,
                                         matmul_dtype=jnp.bfloat16,
                                         split_tap_matmuls=False))
    out_b = jax.block_until_ready(fwd_bf16(x, packed))
    assert bool(jnp.all(jnp.isfinite(out_b)))
    err_b = float(jnp.max(jnp.abs(out_b - ref)))
    assert err_b < 1e-1, f"bf16 mismatch vs reference too large: {err_b}"

    print("KERNEL_OK")
</pallas_src>

<mosaic_0001>
module attributes {stable_mosaic.version = 11 : i64} {
  func.func @_disc_kernel(%arg0: i32, %arg1: memref<1x128x1xf32, #tpu.memory_space<vmem>>, %arg2: memref<22xf32, #tpu.memory_space<smem>>, %arg3: memref<12x256x128xf32, #tpu.memory_space<vmem>>, %arg4: memref<128x128xf32, #tpu.memory_space<vmem>>, %arg5: memref<8x128xf32, #tpu.memory_space<vmem>>, %arg6: memref<16x128xf32, #tpu.memory_space<vmem>>, %arg7: memref<128x1xf32, #tpu.memory_space<vmem>>, %arg8: memref<1x2x128xf32, #tpu.memory_space<vmem>>) attributes {dimension_semantics = [#tpu.dimension_semantics<parallel>], iteration_bounds = array<i64: 2>, scalar_prefetch = 0 : i64, scratch_operands = 0 : i64, tpu.core_type = #tpu.core_type<tc>, window_params = [{transform_indices = @transform_0, window_bounds = array<i64: 1, 128, 1>}, {transform_indices = @transform_1, window_bounds = array<i64: 22>}, {pipeline_mode = #tpu.pipeline_mode<synchronous>, transform_indices = @transform_2, window_bounds = array<i64: 12, 256, 128>}, {pipeline_mode = #tpu.pipeline_mode<synchronous>, transform_indices = @transform_3, window_bounds = array<i64: 128, 128>}, {pipeline_mode = #tpu.pipeline_mode<synchronous>, transform_indices = @transform_4, window_bounds = array<i64: 8, 128>}, {pipeline_mode = #tpu.pipeline_mode<synchronous>, transform_indices = @transform_5, window_bounds = array<i64: 16, 128>}, {pipeline_mode = #tpu.pipeline_mode<synchronous>, transform_indices = @transform_6, window_bounds = array<i64: 128, 1>}, {transform_indices = @transform_7, window_bounds = array<i64: 1, 2, 128>}]} {
    %c0 = arith.constant 0 : index
    %c0_0 = arith.constant 0 : index
    %c0_1 = arith.constant 0 : index
    %0 = vector.load %arg1[%c0, %c0_0, %c0_1] : memref<1x128x1xf32, #tpu.memory_space<vmem>>, vector<1x128x1xf32>
    %1 = vector.shape_cast %0 : vector<1x128x1xf32> to vector<128x1xf32>
    %c0_2 = arith.constant 0 : index
    %c0_3 = arith.constant 0 : index
    %2 = vector.load %arg5[%c0_2, %c0_3] : memref<8x128xf32, #tpu.memory_space<vmem>>, vector<8x128xf32>
    %c0_4 = arith.constant 0 : index
    %c0_5 = arith.constant 0 : index
    %3 = vector.load %arg6[%c0_4, %c0_5] : memref<16x128xf32, #tpu.memory_space<vmem>>, vector<16x128xf32>
    %c0_6 = arith.constant 0 : index
    %c0_7 = arith.constant 0 : index
    %4 = vector.load %arg7[%c0_6, %c0_7] : memref<128x1xf32, #tpu.memory_space<vmem>>, vector<128x1xf32>
    %5 = tpu.iota {dimensions = array<i32: 1>} : vector<2x64x128xi32>
    %6 = vector.shape_cast %5 : vector<2x64x128xi32> to vector<128x128xi32>
    %c0_8 = arith.constant 0 : index
    %7 = memref.load %arg2[%c0_8] : memref<22xf32, #tpu.memory_space<smem>>
    %c1 = arith.constant 1 : index
    %8 = memref.load %arg2[%c1] : memref<22xf32, #tpu.memory_space<smem>>
    %c2 = arith.constant 2 : index
    %9 = memref.load %arg2[%c2] : memref<22xf32, #tpu.memory_space<smem>>
    %10 = vector.extract_strided_slice %2 {offsets = [0, 0], sizes = [1, 128], strides = [1, 1]} : vector<8x128xf32> to vector<1x128xf32>
    %11 = vector.broadcast %1 : vector<128x1xf32> to vector<128x128xf32>
    %12 = vector.broadcast %10 : vector<1x128xf32> to vector<128x128xf32>
    %13 = arith.mulf %11, %12 : vector<128x128xf32>
    %14 = vector.extract_strided_slice %3 {offsets = [0, 0], sizes = [1, 128], strides = [1, 1]} : vector<16x128xf32> to vector<1x128xf32>
    %15 = vector.broadcast %14 : vector<1x128xf32> to vector<128x128xf32>
    %16 = arith.addf %13, %15 : vector<128x128xf32>
    %cst = arith.constant 0.000000e+00 : f32
    %17 = vector.broadcast %cst : f32 to vector<128x128xf32>
    %18 = arith.cmpf ogt, %16, %17 : vector<128x128xf32>
    %19 = vector.broadcast %7 : f32 to vector<128x128xf32>
    %20 = arith.mulf %19, %16 : vector<128x128xf32>
    %21 = arith.select %18, %16, %20 : vector<128x128xi1>, vector<128x128xf32>
    %c0_9 = arith.constant 0 : index
    %c0_10 = arith.constant 0 : index
    %22 = vector.load %arg4[%c0_9, %c0_10] : memref<128x128xf32, #tpu.memory_space<vmem>>, vector<128x128xf32>
    %cst_11 = arith.constant dense<0.000000e+00> : vector<128x128xf32>
    %23 = tpu.matmul %21, %22, %cst_11 {dimension_numbers = #tpu.dot_dimension_numbers<[1], [0], [0], [1], [0, 0, 1, 1], [], []>} : vector<128x128xf32>, vector<128x128xf32>, vector<128x128xf32> -> vector<128x128xf32>
    %24 = vector.extract_strided_slice %3 {offsets = [1, 0], sizes = [1, 128], strides = [1, 1]} : vector<16x128xf32> to vector<1x128xf32>
    %25 = vector.broadcast %24 : vector<1x128xf32> to vector<128x128xf32>
    %26 = arith.addf %23, %25 : vector<128x128xf32>
    %cst_12 = arith.constant 0.000000e+00 : f32
    %27 = vector.broadcast %cst_12 : f32 to vector<128x128xf32>
    %28 = arith.cmpf ogt, %26, %27 : vector<128x128xf32>
    %29 = vector.broadcast %8 : f32 to vector<128x128xf32>
    %30 = arith.mulf %29, %26 : vector<128x128xf32>
    %31 = arith.select %28, %26, %30 : vector<128x128xi1>, vector<128x128xf32>
    %32 = vector.extract_strided_slice %2 {offsets = [1, 0], sizes = [1, 128], strides = [1, 1]} : vector<8x128xf32> to vector<1x128xf32>
    %33 = vector.broadcast %1 : vector<128x1xf32> to vector<128x128xf32>
    %34 = vector.broadcast %32 : vector<1x128xf32> to vector<128x128xf32>
    %35 = arith.mulf %33, %34 : vector<128x128xf32>
    %36 = vector.extract_strided_slice %3 {offsets = [2, 0], sizes = [1, 128], strides = [1, 1]} : vector<16x128xf32> to vector<1x128xf32>
    %37 = vector.broadcast %36 : vector<1x128xf32> to vector<128x128xf32>
    %38 = arith.addf %35, %37 : vector<128x128xf32>
    %39 = arith.addf %31, %38 : vector<128x128xf32>
    %cst_13 = arith.constant 0.000000e+00 : f32
    %40 = vector.broadcast %cst_13 : f32 to vector<128x128xf32>
    %41 = arith.cmpf ogt, %39, %40 : vector<128x128xf32>
    %42 = vector.broadcast %9 : f32 to vector<128x128xf32>
    %43 = arith.mulf %42, %39 : vector<128x128xf32>
    %44 = arith.select %41, %39, %43 : vector<128x128xi1>, vector<128x128xf32>
    %c3 = arith.constant 3 : index
    %45 = memref.load %arg2[%c3] : memref<22xf32, #tpu.memory_space<smem>>
    %c4 = arith.constant 4 : index
    %46 = memref.load %arg2[%c4] : memref<22xf32, #tpu.memory_space<smem>>
    %c5 = arith.constant 5 : index
    %47 = memref.load %arg2[%c5] : memref<22xf32, #tpu.memory_space<smem>>
    %48 = vector.extract_strided_slice %3 {offsets = [3, 0], sizes = [1, 128], strides = [1, 1]} : vector<16x128xf32> to vector<1x128xf32>
    %49 = vector.extract_strided_slice %3 {offsets = [4, 0], sizes = [1, 128], strides = [1, 1]} : vector<16x128xf32> to vector<1x128xf32>
    %c1_i32 = arith.constant 1 : i32
    %50 = vector.broadcast %c1_i32 : i32 to vector<128x128xi32>
    %51 = arith.cmpi sge, %6, %50 : vector<128x128xi32>
    %c1_i32_14 = arith.constant 1 : i32
    %52 = tpu.dynamic_rotate %44 by %c1_i32_14 dim 0 : vector<128x128xf32>, i32 -> vector<128x128xf32>
    %cst_15 = arith.constant 0.000000e+00 : f32
    %53 = vector.broadcast %cst_15 : f32 to vector<128x128xf32>
    %54 = arith.select %51, %52, %53 : vector<128x128xi1>, vector<128x128xf32>
    %c0_16 = arith.constant 0 : index
    %c0_17 = arith.constant 0 : index
    %c0_18 = arith.constant 0 : index
    %55 = vector.load %arg3[%c0_16, %c0_17, %c0_18] : memref<12x256x128xf32, #tpu.memory_space<vmem>>, vector<1x256x128xf32>
    %56 = vector.shape_cast %55 : vector<1x256x128xf32> to vector<256x128xf32>
    %57 = tpu.concatenate %54, %44 in 1 : vector<128x128xf32>, vector<128x128xf32> -> vector<128x256xf32>
    %cst_19 = arith.constant dense<0.000000e+00> : vector<128x128xf32>
    %58 = tpu.matmul %57, %56, %cst_19 {dimension_numbers = #tpu.dot_dimension_numbers<[1], [0], [0], [1], [0, 0, 1, 1], [], []>} : vector<128x256xf32>, vector<256x128xf32>, vector<128x128xf32> -> vector<128x128xf32>
    %59 = vector.broadcast %48 : vector<1x128xf32> to vector<128x128xf32>
    %60 = arith.addf %58, %59 : vector<128x128xf32>
    %cst_20 = arith.constant 0.000000e+00 : f32
    %61 = vector.broadcast %cst_20 : f32 to vector<128x128xf32>
    %62 = arith.cmpf ogt, %60, %61 : vector<128x128xf32>
    %63 = vector.broadcast %45 : f32 to vector<128x128xf32>
    %64 = arith.mulf %63, %60 : vector<128x128xf32>
    %65 = arith.select %62, %60, %64 : vector<128x128xi1>, vector<128x128xf32>
    %c1_i32_21 = arith.constant 1 : i32
    %66 = vector.broadcast %c1_i32_21 : i32 to vector<128x128xi32>
    %67 = arith.cmpi sge, %6, %66 : vector<128x128xi32>
    %c1_i32_22 = arith.constant 1 : i32
    %68 = tpu.dynamic_rotate %65 by %c1_i32_22 dim 0 : vector<128x128xf32>, i32 -> vector<128x128xf32>
    %cst_23 = arith.constant 0.000000e+00 : f32
    %69 = vector.broadcast %cst_23 : f32 to vector<128x128xf32>
    %70 = arith.select %67, %68, %69 : vector<128x128xi1>, vector<128x128xf32>
    %c1_24 = arith.constant 1 : index
    %c0_25 = arith.constant 0 : index
    %c0_26 = arith.constant 0 : index
    %71 = vector.load %arg3[%c1_24, %c0_25, %c0_26] : memref<12x256x128xf32, #tpu.memory_space<vmem>>, vector<1x256x128xf32>
    %72 = vector.shape_cast %71 : vector<1x256x128xf32> to vector<256x128xf32>
    %73 = tpu.concatenate %70, %65 in 1 : vector<128x128xf32>, vector<128x128xf32> -> vector<128x256xf32>
    %cst_27 = arith.constant dense<0.000000e+00> : vector<128x128xf32>
    %74 = tpu.matmul %73, %72, %cst_27 {dimension_numbers = #tpu.dot_dimension_numbers<[1], [0], [0], [1], [0, 0, 1, 1], [], []>} : vector<128x256xf32>, vector<256x128xf32>, vector<128x128xf32> -> vector<128x128xf32>
    %75 = vector.broadcast %49 : vector<1x128xf32> to vector<128x128xf32>
    %76 = arith.addf %74, %75 : vector<128x128xf32>
    %cst_28 = arith.constant 0.000000e+00 : f32
    %77 = vector.broadcast %cst_28 : f32 to vector<128x128xf32>
    %78 = arith.cmpf ogt, %76, %77 : vector<128x128xf32>
    %79 = vector.broadcast %46 : f32 to vector<128x128xf32>
    %80 = arith.mulf %79, %76 : vector<128x128xf32>
    %81 = arith.select %78, %76, %80 : vector<128x128xi1>, vector<128x128xf32>
    %82 = arith.addf %81, %44 : vector<128x128xf32>
    %cst_29 = arith.constant 0.000000e+00 : f32
    %83 = vector.broadcast %cst_29 : f32 to vector<128x128xf32>
    %84 = arith.cmpf ogt, %82, %83 : vector<128x128xf32>
    %85 = vector.broadcast %47 : f32 to vector<128x128xf32>
    %86 = arith.mulf %85, %82 : vector<128x128xf32>
    %87 = arith.select %84, %82, %86 : vector<128x128xi1>, vector<128x128xf32>
    %88 = arith.addf %31, %81 : vector<128x128xf32>
    %c6 = arith.constant 6 : index
    %89 = memref.load %arg2[%c6] : memref<22xf32, #tpu.memory_space<smem>>
    %c7 = arith.constant 7 : index
    %90 = memref.load %arg2[%c7] : memref<22xf32, #tpu.memory_space<smem>>
    %c8 = arith.constant 8 : index
    %91 = memref.load %arg2[%c8] : memref<22xf32, #tpu.memory_space<smem>>
    %92 = vector.extract_strided_slice %3 {offsets = [5, 0], sizes = [1, 128], strides = [1, 1]} : vector<16x128xf32> to vector<1x128xf32>
    %93 = vector.extract_strided_slice %3 {offsets = [6, 0], sizes = [1, 128], strides = [1, 1]} : vector<16x128xf32> to vector<1x128xf32>
    %c2_i32 = arith.constant 2 : i32
    %94 = vector.broadcast %c2_i32 : i32 to vector<128x128xi32>
    %95 = arith.cmpi sge, %6, %94 : vector<128x128xi32>
    %c2_i32_30 = arith.constant 2 : i32
    %96 = tpu.dynamic_rotate %87 by %c2_i32_30 dim 0 : vector<128x128xf32>, i32 -> vector<128x128xf32>
    %cst_31 = arith.constant 0.000000e+00 : f32
    %97 = vector.broadcast %cst_31 : f32 to vector<128x128xf32>
    %98 = arith.select %95, %96, %97 : vector<128x128xi1>, vector<128x128xf32>
    %c2_32 = arith.constant 2 : index
    %c0_33 = arith.constant 0 : index
    %c0_34 = arith.constant 0 : index
    %99 = vector.load %arg3[%c2_32, %c0_33, %c0_34] : memref<12x256x128xf32, #tpu.memory_space<vmem>>, vector<1x256x128xf32>
    %100 = vector.shape_cast %99 : vector<1x256x128xf32> to vector<256x128xf32>
    %101 = tpu.concatenate %98, %87 in 1 : vector<128x128xf32>, vector<128x128xf32> -> vector<128x256xf32>
    %cst_35 = arith.constant dense<0.000000e+00> : vector<128x128xf32>
    %102 = tpu.matmul %101, %100, %cst_35 {dimension_numbers = #tpu.dot_dimension_numbers<[1], [0], [0], [1], [0, 0, 1, 1], [], []>} : vector<128x256xf32>, vector<256x128xf32>, vector<128x128xf32> -> vector<128x128xf32>
    %103 = vector.broadcast %92 : vector<1x128xf32> to vector<128x128xf32>
    %104 = arith.addf %102, %103 : vector<128x128xf32>
    %cst_36 = arith.constant 0.000000e+00 : f32
    %105 = vector.broadcast %cst_36 : f32 to vector<128x128xf32>
    %106 = arith.cmpf ogt, %104, %105 : vector<128x128xf32>
    %107 = vector.broadcast %89 : f32 to vector<128x128xf32>
    %108 = arith.mulf %107, %104 : vector<128x128xf32>
    %109 = arith.select %106, %104, %108 : vector<128x128xi1>, vector<128x128xf32>
    %c2_i32_37 = arith.constant 2 : i32
    %110 = vector.broadcast %c2_i32_37 : i32 to vector<128x128xi32>
    %111 = arith.cmpi sge, %6, %110 : vector<128x128xi32>
    %c2_i32_38 = arith.constant 2 : i32
    %112 = tpu.dynamic_rotate %109 by %c2_i32_38 dim 0 : vector<128x128xf32>, i32 -> vector<128x128xf32>
    %cst_39 = arith.constant 0.000000e+00 : f32
    %113 = vector.broadcast %cst_39 : f32 to vector<128x128xf32>
    %114 = arith.select %111, %112, %113 : vector<128x128xi1>, vector<128x128xf32>
    %c3_40 = arith.constant 3 : index
    %c0_41 = arith.constant 0 : index
    %c0_42 = arith.constant 0 : index
    %115 = vector.load %arg3[%c3_40, %c0_41, %c0_42] : memref<12x256x128xf32, #tpu.memory_space<vmem>>, vector<1x256x128xf32>
    %116 = vector.shape_cast %115 : vector<1x256x128xf32> to vector<256x128xf32>
    %117 = tpu.concatenate %114, %109 in 1 : vector<128x128xf32>, vector<128x128xf32> -> vector<128x256xf32>
    %cst_43 = arith.constant dense<0.000000e+00> : vector<128x128xf32>
    %118 = tpu.matmul %117, %116, %cst_43 {dimension_numbers = #tpu.dot_dimension_numbers<[1], [0], [0], [1], [0, 0, 1, 1], [], []>} : vector<128x256xf32>, vector<256x128xf32>, vector<128x128xf32> -> vector<128x128xf32>
    %119 = vector.broadcast %93 : vector<1x128xf32> to vector<128x128xf32>
    %120 = arith.addf %118, %119 : vector<128x128xf32>
    %cst_44 = arith.constant 0.000000e+00 : f32
    %121 = vector.broadcast %cst_44 : f32 to vector<128x128xf32>
    %122 = arith.cmpf ogt, %120, %121 : vector<128x128xf32>
    %123 = vector.broadcast %90 : f32 to vector<128x128xf32>
    %124 = arith.mulf %123, %120 : vector<128x128xf32>
    %125 = arith.select %122, %120, %124 : vector<128x128xi1>, vector<128x128xf32>
    %126 = arith.addf %125, %87 : vector<128x128xf32>
    %cst_45 = arith.constant 0.000000e+00 : f32
    %127 = vector.broadcast %cst_45 : f32 to vector<128x128xf32>
    %128 = arith.cmpf ogt, %126, %127 : vector<128x128xf32>
    %129 = vector.broadcast %91 : f32 to vector<128x128xf32>
    %130 = arith.mulf %129, %126 : vector<128x128xf32>
    %131 = arith.select %128, %126, %130 : vector<128x128xi1>, vector<128x128xf32>
    %132 = arith.addf %88, %125 : vector<128x128xf32>
    %c9 = arith.constant 9 : index
    %133 = memref.load %arg2[%c9] : memref<22xf32, #tpu.memory_space<smem>>
    %c10 = arith.constant 10 : index
    %134 = memref.load %arg2[%c10] : memref<22xf32, #tpu.memory_space<smem>>
    %c11 = arith.constant 11 : index
    %135 = memref.load %arg2[%c11] : memref<22xf32, #tpu.memory_space<smem>>
    %136 = vector.extract_strided_slice %3 {offsets = [7, 0], sizes = [1, 128], strides = [1, 1]} : vector<16x128xf32> to vector<1x128xf32>
    %137 = vector.extract_strided_slice %3 {offsets = [8, 0], sizes = [1, 128], strides = [1, 1]} : vector<16x128xf32> to vector<1x128xf32>
    %c4_i32 = arith.constant 4 : i32
    %138 = vector.broadcast %c4_i32 : i32 to vector<128x128xi32>
    %139 = arith.cmpi sge, %6, %138 : vector<128x128xi32>
    %c4_i32_46 = arith.constant 4 : i32
    %140 = tpu.dynamic_rotate %131 by %c4_i32_46 dim 0 : vector<128x128xf32>, i32 -> vector<128x128xf32>
    %cst_47 = arith.constant 0.000000e+00 : f32
    %141 = vector.broadcast %cst_47 : f32 to vector<128x128xf32>
    %142 = arith.select %139, %140, %141 : vector<128x128xi1>, vector<128x128xf32>
    %c4_48 = arith.constant 4 : index
    %c0_49 = arith.constant 0 : index
    %c0_50 = arith.constant 0 : index
    %143 = vector.load %arg3[%c4_48, %c0_49, %c0_50] : memref<12x256x128xf32, #tpu.memory_space<vmem>>, vector<1x256x128xf32>
    %144 = vector.shape_cast %143 : vector<1x256x128xf32> to vector<256x128xf32>
    %145 = tpu.concatenate %142, %131 in 1 : vector<128x128xf32>, vector<128x128xf32> -> vector<128x256xf32>
    %cst_51 = arith.constant dense<0.000000e+00> : vector<128x128xf32>
    %146 = tpu.matmul %145, %144, %cst_51 {dimension_numbers = #tpu.dot_dimension_numbers<[1], [0], [0], [1], [0, 0, 1, 1], [], []>} : vector<128x256xf32>, vector<256x128xf32>, vector<128x128xf32> -> vector<128x128xf32>
    %147 = vector.broadcast %136 : vector<1x128xf32> to vector<128x128xf32>
    %148 = arith.addf %146, %147 : vector<128x128xf32>
    %cst_52 = arith.constant 0.000000e+00 : f32
    %149 = vector.broadcast %cst_52 : f32 to vector<128x128xf32>
    %150 = arith.cmpf ogt, %148, %149 : vector<128x128xf32>
    %151 = vector.broadcast %133 : f32 to vector<128x128xf32>
    %152 = arith.mulf %151, %148 : vector<128x128xf32>
    %153 = arith.select %150, %148, %152 : vector<128x128xi1>, vector<128x128xf32>
    %c4_i32_53 = arith.constant 4 : i32
    %154 = vector.broadcast %c4_i32_53 : i32 to vector<128x128xi32>
    %155 = arith.cmpi sge, %6, %154 : vector<128x128xi32>
    %c4_i32_54 = arith.constant 4 : i32
    %156 = tpu.dynamic_rotate %153 by %c4_i32_54 dim 0 : vector<128x128xf32>, i32 -> vector<128x128xf32>
    %cst_55 = arith.constant 0.000000e+00 : f32
    %157 = vector.broadcast %cst_55 : f32 to vector<128x128xf32>
    %158 = arith.select %155, %156, %157 : vector<128x128xi1>, vector<128x128xf32>
    %c5_56 = arith.constant 5 : index
    %c0_57 = arith.constant 0 : index
    %c0_58 = arith.constant 0 : index
    %159 = vector.load %arg3[%c5_56, %c0_57, %c0_58] : memref<12x256x128xf32, #tpu.memory_space<vmem>>, vector<1x256x128xf32>
    %160 = vector.shape_cast %159 : vector<1x256x128xf32> to vector<256x128xf32>
    %161 = tpu.concatenate %158, %153 in 1 : vector<128x128xf32>, vector<128x128xf32> -> vector<128x256xf32>
    %cst_59 = arith.constant dense<0.000000e+00> : vector<128x128xf32>
    %162 = tpu.matmul %161, %160, %cst_59 {dimension_numbers = #tpu.dot_dimension_numbers<[1], [0], [0], [1], [0, 0, 1, 1], [], []>} : vector<128x256xf32>, vector<256x128xf32>, vector<128x128xf32> -> vector<128x128xf32>
    %163 = vector.broadcast %137 : vector<1x128xf32> to vector<128x128xf32>
    %164 = arith.addf %162, %163 : vector<128x128xf32>
    %cst_60 = arith.constant 0.000000e+00 : f32
    %165 = vector.broadcast %cst_60 : f32 to vector<128x128xf32>
    %166 = arith.cmpf ogt, %164, %165 : vector<128x128xf32>
    %167 = vector.broadcast %134 : f32 to vector<128x128xf32>
    %168 = arith.mulf %167, %164 : vector<128x128xf32>
    %169 = arith.select %166, %164, %168 : vector<128x128xi1>, vector<128x128xf32>
    %170 = arith.addf %169, %131 : vector<128x128xf32>
    %cst_61 = arith.constant 0.000000e+00 : f32
    %171 = vector.broadcast %cst_61 : f32 to vector<128x128xf32>
    %172 = arith.cmpf ogt, %170, %171 : vector<128x128xf32>
    %173 = vector.broadcast %135 : f32 to vector<128x128xf32>
    %174 = arith.mulf %173, %170 : vector<128x128xf32>
    %175 = arith.select %172, %170, %174 : vector<128x128xi1>, vector<128x128xf32>
    %176 = arith.addf %132, %169 : vector<128x128xf32>
    %c12 = arith.constant 12 : index
    %177 = memref.load %arg2[%c12] : memref<22xf32, #tpu.memory_space<smem>>
    %c13 = arith.constant 13 : index
    %178 = memref.load %arg2[%c13] : memref<22xf32, #tpu.memory_space<smem>>
    %c14 = arith.constant 14 : index
    %179 = memref.load %arg2[%c14] : memref<22xf32, #tpu.memory_space<smem>>
    %180 = vector.extract_strided_slice %3 {offsets = [9, 0], sizes = [1, 128], strides = [1, 1]} : vector<16x128xf32> to vector<1x128xf32>
    %181 = vector.extract_strided_slice %3 {offsets = [10, 0], sizes = [1, 128], strides = [1, 1]} : vector<16x128xf32> to vector<1x128xf32>
    %c8_i32 = arith.constant 8 : i32
    %182 = vector.broadcast %c8_i32 : i32 to vector<128x128xi32>
    %183 = arith.cmpi sge, %6, %182 : vector<128x128xi32>
    %c8_i32_62 = arith.constant 8 : i32
    %184 = tpu.dynamic_rotate %175 by %c8_i32_62 dim 0 : vector<128x128xf32>, i32 -> vector<128x128xf32>
    %cst_63 = arith.constant 0.000000e+00 : f32
    %185 = vector.broadcast %cst_63 : f32 to vector<128x128xf32>
    %186 = arith.select %183, %184, %185 : vector<128x128xi1>, vector<128x128xf32>
    %c6_64 = arith.constant 6 : index
    %c0_65 = arith.constant 0 : index
    %c0_66 = arith.constant 0 : index
    %187 = vector.load %arg3[%c6_64, %c0_65, %c0_66] : memref<12x256x128xf32, #tpu.memory_space<vmem>>, vector<1x256x128xf32>
    %188 = vector.shape_cast %187 : vector<1x256x128xf32> to vector<256x128xf32>
    %189 = tpu.concatenate %186, %175 in 1 : vector<128x128xf32>, vector<128x128xf32> -> vector<128x256xf32>
    %cst_67 = arith.constant dense<0.000000e+00> : vector<128x128xf32>
    %190 = tpu.matmul %189, %188, %cst_67 {dimension_numbers = #tpu.dot_dimension_numbers<[1], [0], [0], [1], [0, 0, 1, 1], [], []>} : vector<128x256xf32>, vector<256x128xf32>, vector<128x128xf32> -> vector<128x128xf32>
    %191 = vector.broadcast %180 : vector<1x128xf32> to vector<128x128xf32>
    %192 = arith.addf %190, %191 : vector<128x128xf32>
    %cst_68 = arith.constant 0.000000e+00 : f32
    %193 = vector.broadcast %cst_68 : f32 to vector<128x128xf32>
    %194 = arith.cmpf ogt, %192, %193 : vector<128x128xf32>
    %195 = vector.broadcast %177 : f32 to vector<128x128xf32>
    %196 = arith.mulf %195, %192 : vector<128x128xf32>
    %197 = arith.select %194, %192, %196 : vector<128x128xi1>, vector<128x128xf32>
    %c8_i32_69 = arith.constant 8 : i32
    %198 = vector.broadcast %c8_i32_69 : i32 to vector<128x128xi32>
    %199 = arith.cmpi sge, %6, %198 : vector<128x128xi32>
    %c8_i32_70 = arith.constant 8 : i32
    %200 = tpu.dynamic_rotate %197 by %c8_i32_70 dim 0 : vector<128x128xf32>, i32 -> vector<128x128xf32>
    %cst_71 = arith.constant 0.000000e+00 : f32
    %201 = vector.broadcast %cst_71 : f32 to vector<128x128xf32>
    %202 = arith.select %199, %200, %201 : vector<128x128xi1>, vector<128x128xf32>
    %c7_72 = arith.constant 7 : index
    %c0_73 = arith.constant 0 : index
    %c0_74 = arith.constant 0 : index
    %203 = vector.load %arg3[%c7_72, %c0_73, %c0_74] : memref<12x256x128xf32, #tpu.memory_space<vmem>>, vector<1x256x128xf32>
    %204 = vector.shape_cast %203 : vector<1x256x128xf32> to vector<256x128xf32>
    %205 = tpu.concatenate %202, %197 in 1 : vector<128x128xf32>, vector<128x128xf32> -> vector<128x256xf32>
    %cst_75 = arith.constant dense<0.000000e+00> : vector<128x128xf32>
    %206 = tpu.matmul %205, %204, %cst_75 {dimension_numbers = #tpu.dot_dimension_numbers<[1], [0], [0], [1], [0, 0, 1, 1], [], []>} : vector<128x256xf32>, vector<256x128xf32>, vector<128x128xf32> -> vector<128x128xf32>
    %207 = vector.broadcast %181 : vector<1x128xf32> to vector<128x128xf32>
    %208 = arith.addf %206, %207 : vector<128x128xf32>
    %cst_76 = arith.constant 0.000000e+00 : f32
    %209 = vector.broadcast %cst_76 : f32 to vector<128x128xf32>
    %210 = arith.cmpf ogt, %208, %209 : vector<128x128xf32>
    %211 = vector.broadcast %178 : f32 to vector<128x128xf32>
    %212 = arith.mulf %211, %208 : vector<128x128xf32>
    %213 = arith.select %210, %208, %212 : vector<128x128xi1>, vector<128x128xf32>
    %214 = arith.addf %213, %175 : vector<128x128xf32>
    %cst_77 = arith.constant 0.000000e+00 : f32
    %215 = vector.broadcast %cst_77 : f32 to vector<128x128xf32>
    %216 = arith.cmpf ogt, %214, %215 : vector<128x128xf32>
    %217 = vector.broadcast %179 : f32 to vector<128x128xf32>
    %218 = arith.mulf %217, %214 : vector<128x128xf32>
    %219 = arith.select %216, %214, %218 : vector<128x128xi1>, vector<128x128xf32>
    %220 = arith.addf %176, %213 : vector<128x128xf32>
    %c15 = arith.constant 15 : index
    %221 = memref.load %arg2[%c15] : memref<22xf32, #tpu.memory_space<smem>>
    %c16 = arith.constant 16 : index
    %222 = memref.load %arg2[%c16] : memref<22xf32, #tpu.memory_space<smem>>
    %c17 = arith.constant 17 : index
    %223 = memref.load %arg2[%c17] : memref<22xf32, #tpu.memory_space<smem>>
    %224 = vector.extract_strided_slice %3 {offsets = [11, 0], sizes = [1, 128], strides = [1, 1]} : vector<16x128xf32> to vector<1x128xf32>
    %225 = vector.extract_strided_slice %3 {offsets = [12, 0], sizes = [1, 128], strides = [1, 1]} : vector<16x128xf32> to vector<1x128xf32>
    %c16_i32 = arith.constant 16 : i32
    %226 = vector.broadcast %c16_i32 : i32 to vector<128x128xi32>
    %227 = arith.cmpi sge, %6, %226 : vector<128x128xi32>
    %c16_i32_78 = arith.constant 16 : i32
    %228 = tpu.dynamic_rotate %219 by %c16_i32_78 dim 0 : vector<128x128xf32>, i32 -> vector<128x128xf32>
    %cst_79 = arith.constant 0.000000e+00 : f32
    %229 = vector.broadcast %cst_79 : f32 to vector<128x128xf32>
    %230 = arith.select %227, %228, %229 : vector<128x128xi1>, vector<128x128xf32>
    %c8_80 = arith.constant 8 : index
    %c0_81 = arith.constant 0 : index
    %c0_82 = arith.constant 0 : index
    %231 = vector.load %arg3[%c8_80, %c0_81, %c0_82] : memref<12x256x128xf32, #tpu.memory_space<vmem>>, vector<1x256x128xf32>
    %232 = vector.shape_cast %231 : vector<1x256x128xf32> to vector<256x128xf32>
    %233 = tpu.concatenate %230, %219 in 1 : vector<128x128xf32>, vector<128x128xf32> -> vector<128x256xf32>
    %cst_83 = arith.constant dense<0.000000e+00> : vector<128x128xf32>
    %234 = tpu.matmul %233, %232, %cst_83 {dimension_numbers = #tpu.dot_dimension_numbers<[1], [0], [0], [1], [0, 0, 1, 1], [], []>} : vector<128x256xf32>, vector<256x128xf32>, vector<128x128xf32> -> vector<128x128xf32>
    %235 = vector.broadcast %224 : vector<1x128xf32> to vector<128x128xf32>
    %236 = arith.addf %234, %235 : vector<128x128xf32>
    %cst_84 = arith.constant 0.000000e+00 : f32
    %237 = vector.broadcast %cst_84 : f32 to vector<128x128xf32>
    %238 = arith.cmpf ogt, %236, %237 : vector<128x128xf32>
    %239 = vector.broadcast %221 : f32 to vector<128x128xf32>
    %240 = arith.mulf %239, %236 : vector<128x128xf32>
    %241 = arith.select %238, %236, %240 : vector<128x128xi1>, vector<128x128xf32>
    %c16_i32_85 = arith.constant 16 : i32
    %242 = vector.broadcast %c16_i32_85 : i32 to vector<128x128xi32>
    %243 = arith.cmpi sge, %6, %242 : vector<128x128xi32>
    %c16_i32_86 = arith.constant 16 : i32
    %244 = tpu.dynamic_rotate %241 by %c16_i32_86 dim 0 : vector<128x128xf32>, i32 -> vector<128x128xf32>
    %cst_87 = arith.constant 0.000000e+00 : f32
    %245 = vector.broadcast %cst_87 : f32 to vector<128x128xf32>
    %246 = arith.select %243, %244, %245 : vector<128x128xi1>, vector<128x128xf32>
    %c9_88 = arith.constant 9 : index
    %c0_89 = arith.constant 0 : index
    %c0_90 = arith.constant 0 : index
    %247 = vector.load %arg3[%c9_88, %c0_89, %c0_90] : memref<12x256x128xf32, #tpu.memory_space<vmem>>, vector<1x256x128xf32>
    %248 = vector.shape_cast %247 : vector<1x256x128xf32> to vector<256x128xf32>
    %249 = tpu.concatenate %246, %241 in 1 : vector<128x128xf32>, vector<128x128xf32> -> vector<128x256xf32>
    %cst_91 = arith.constant dense<0.000000e+00> : vector<128x128xf32>
    %250 = tpu.matmul %249, %248, %cst_91 {dimension_numbers = #tpu.dot_dimension_numbers<[1], [0], [0], [1], [0, 0, 1, 1], [], []>} : vector<128x256xf32>, vector<256x128xf32>, vector<128x128xf32> -> vector<128x128xf32>
    %251 = vector.broadcast %225 : vector<1x128xf32> to vector<128x128xf32>
    %252 = arith.addf %250, %251 : vector<128x128xf32>
    %cst_92 = arith.constant 0.000000e+00 : f32
    %253 = vector.broadcast %cst_92 : f32 to vector<128x128xf32>
    %254 = arith.cmpf ogt, %252, %253 : vector<128x128xf32>
    %255 = vector.broadcast %222 : f32 to vector<128x128xf32>
    %256 = arith.mulf %255, %252 : vector<128x128xf32>
    %257 = arith.select %254, %252, %256 : vector<128x128xi1>, vector<128x128xf32>
    %258 = arith.addf %257, %219 : vector<128x128xf32>
    %cst_93 = arith.constant 0.000000e+00 : f32
    %259 = vector.broadcast %cst_93 : f32 to vector<128x128xf32>
    %260 = arith.cmpf ogt, %258, %259 : vector<128x128xf32>
    %261 = vector.broadcast %223 : f32 to vector<128x128xf32>
    %262 = arith.mulf %261, %258 : vector<128x128xf32>
    %263 = arith.select %260, %258, %262 : vector<128x128xi1>, vector<128x128xf32>
    %264 = arith.addf %220, %257 : vector<128x128xf32>
    %c18 = arith.constant 18 : index
    %265 = memref.load %arg2[%c18] : memref<22xf32, #tpu.memory_space<smem>>
    %c19 = arith.constant 19 : index
    %266 = memref.load %arg2[%c19] : memref<22xf32, #tpu.memory_space<smem>>
    %c20 = arith.constant 20 : index
    %267 = memref.load %arg2[%c20] : memref<22xf32, #tpu.memory_space<smem>>
    %268 = vector.extract_strided_slice %3 {offsets = [13, 0], sizes = [1, 128], strides = [1, 1]} : vector<16x128xf32> to vector<1x128xf32>
    %269 = vector.extract_strided_slice %3 {offsets = [14, 0], sizes = [1, 128], strides = [1, 1]} : vector<16x128xf32> to vector<1x128xf32>
    %c32_i32 = arith.constant 32 : i32
    %270 = vector.broadcast %c32_i32 : i32 to vector<128x128xi32>
    %271 = arith.cmpi sge, %6, %270 : vector<128x128xi32>
    %c32_i32_94 = arith.constant 32 : i32
    %272 = tpu.dynamic_rotate %263 by %c32_i32_94 dim 0 : vector<128x128xf32>, i32 -> vector<128x128xf32>
    %cst_95 = arith.constant 0.000000e+00 : f32
    %273 = vector.broadcast %cst_95 : f32 to vector<128x128xf32>
    %274 = arith.select %271, %272, %273 : vector<128x128xi1>, vector<128x128xf32>
    %c10_96 = arith.constant 10 : index
    %c0_97 = arith.constant 0 : index
    %c0_98 = arith.constant 0 : index
    %275 = vector.load %arg3[%c10_96, %c0_97, %c0_98] : memref<12x256x128xf32, #tpu.memory_space<vmem>>, vector<1x256x128xf32>
    %276 = vector.shape_cast %275 : vector<1x256x128xf32> to vector<256x128xf32>
    %277 = tpu.concatenate %274, %263 in 1 : vector<128x128xf32>, vector<128x128xf32> -> vector<128x256xf32>
    %cst_99 = arith.constant dense<0.000000e+00> : vector<128x128xf32>
    %278 = tpu.matmul %277, %276, %cst_99 {dimension_numbers = #tpu.dot_dimension_numbers<[1], [0], [0], [1], [0, 0, 1, 1], [], []>} : vector<128x256xf32>, vector<256x128xf32>, vector<128x128xf32> -> vector<128x128xf32>
    %279 = vector.broadcast %268 : vector<1x128xf32> to vector<128x128xf32>
    %280 = arith.addf %278, %279 : vector<128x128xf32>
    %cst_100 = arith.constant 0.000000e+00 : f32
    %281 = vector.broadcast %cst_100 : f32 to vector<128x128xf32>
    %282 = arith.cmpf ogt, %280, %281 : vector<128x128xf32>
    %283 = vector.broadcast %265 : f32 to vector<128x128xf32>
    %284 = arith.mulf %283, %280 : vector<128x128xf32>
    %285 = arith.select %282, %280, %284 : vector<128x128xi1>, vector<128x128xf32>
    %c32_i32_101 = arith.constant 32 : i32
    %286 = vector.broadcast %c32_i32_101 : i32 to vector<128x128xi32>
    %287 = arith.cmpi sge, %6, %286 : vector<128x128xi32>
    %c32_i32_102 = arith.constant 32 : i32
    %288 = tpu.dynamic_rotate %285 by %c32_i32_102 dim 0 : vector<128x128xf32>, i32 -> vector<128x128xf32>
    %cst_103 = arith.constant 0.000000e+00 : f32
    %289 = vector.broadcast %cst_103 : f32 to vector<128x128xf32>
    %290 = arith.select %287, %288, %289 : vector<128x128xi1>, vector<128x128xf32>
    %c11_104 = arith.constant 11 : index
    %c0_105 = arith.constant 0 : index
    %c0_106 = arith.constant 0 : index
    %291 = vector.load %arg3[%c11_104, %c0_105, %c0_106] : memref<12x256x128xf32, #tpu.memory_space<vmem>>, vector<1x256x128xf32>
    %292 = vector.shape_cast %291 : vector<1x256x128xf32> to vector<256x128xf32>
    %293 = tpu.concatenate %290, %285 in 1 : vector<128x128xf32>, vector<128x128xf32> -> vector<128x256xf32>
    %cst_107 = arith.constant dense<0.000000e+00> : vector<128x128xf32>
    %294 = tpu.matmul %293, %292, %cst_107 {dimension_numbers = #tpu.dot_dimension_numbers<[1], [0], [0], [1], [0, 0, 1, 1], [], []>} : vector<128x256xf32>, vector<256x128xf32>, vector<128x128xf32> -> vector<128x128xf32>
    %295 = vector.broadcast %269 : vector<1x128xf32> to vector<128x128xf32>
    %296 = arith.addf %294, %295 : vector<128x128xf32>
    %cst_108 = arith.constant 0.000000e+00 : f32
    %297 = vector.broadcast %cst_108 : f32 to vector<128x128xf32>
    %298 = arith.cmpf ogt, %296, %297 : vector<128x128xf32>
    %299 = vector.broadcast %266 : f32 to vector<128x128xf32>
    %300 = arith.mulf %299, %296 : vector<128x128xf32>
    %301 = arith.select %298, %296, %300 : vector<128x128xi1>, vector<128x128xf32>
    %302 = arith.addf %301, %263 : vector<128x128xf32>
    %cst_109 = arith.constant 0.000000e+00 : f32
    %303 = vector.broadcast %cst_109 : f32 to vector<128x128xf32>
    %304 = arith.cmpf ogt, %302, %303 : vector<128x128xf32>
    %305 = vector.broadcast %267 : f32 to vector<128x128xf32>
    %306 = arith.mulf %305, %302 : vector<128x128xf32>
    %307 = arith.select %304, %302, %306 : vector<128x128xi1>, vector<128x128xf32>
    %308 = arith.addf %264, %301 : vector<128x128xf32>
    %c21 = arith.constant 21 : index
    %309 = memref.load %arg2[%c21] : memref<22xf32, #tpu.memory_space<smem>>
    %310 = arith.addf %307, %308 : vector<128x128xf32>
    %311 = vector.extract_strided_slice %2 {offsets = [2, 0], sizes = [1, 128], strides = [1, 1]} : vector<8x128xf32> to vector<1x128xf32>
    %312 = vector.broadcast %311 : vector<1x128xf32> to vector<128x128xf32>
    %313 = arith.mulf %310, %312 : vector<128x128xf32>
    %314 = vector.broadcast %4 : vector<128x1xf32> to vector<128x128xf32>
    %315 = arith.mulf %313, %314 : vector<128x128xf32>
    %316 = vector.shape_cast %315 : vector<128x128xf32> to vector<2x64x128xf32>
    %cst_110 = arith.constant dense<0.000000e+00> : vector<2x128xf32>
    %317 = vector.multi_reduction <add>, %316, %cst_110 [1] : vector<2x64x128xf32> to vector<2x128xf32>
    %cst_111 = arith.constant dense<0.000000e+00> : vector<2xf32>
    %318 = vector.multi_reduction <add>, %317, %cst_111 [1] : vector<2x128xf32> to vector<2xf32>
    %319 = vector.shape_cast %318 : vector<2xf32> to vector<2x1xf32>
    %320 = vector.broadcast %309 : f32 to vector<2x1xf32>
    %321 = arith.addf %319, %320 : vector<2x1xf32>
    %322 = arith.negf %321 : vector<2x1xf32>
    %323 = math.exp %322 : vector<2x1xf32>
    %cst_112 = arith.constant 1.000000e+00 : f32
    %324 = vector.broadcast %cst_112 : f32 to vector<2x1xf32>
    %325 = arith.addf %324, %323 : vector<2x1xf32>
    %326 = arith.divf %324, %325 : vector<2x1xf32>
    %327 = vector.shape_cast %326 : vector<2x1xf32> to vector<2x1xf32>
    %328 = vector.broadcast %327 : vector<2x1xf32> to vector<2x128xf32>
    %c0_113 = arith.constant 0 : index
    %c0_114 = arith.constant 0 : index
    %c0_115 = arith.constant 0 : index
    %329 = vector.load %arg8[%c0_113, %c0_114, %c0_115] : memref<1x2x128xf32, #tpu.memory_space<vmem>>, vector<1x2x128xf32>
    %330 = vector.shape_cast %329 : vector<1x2x128xf32> to vector<2x128xf32>
    %331 = vector.shape_cast %328 : vector<2x128xf32> to vector<1x2x128xf32>
    tpu.vector_store %arg8[%c0_113, %c0_114, %c0_115], %331 {strides = array<i32>} : memref<1x2x128xf32, #tpu.memory_space<vmem>>, vector<1x2x128xf32>,
    return
  }
  func.func @transform_0(%arg0: i32) -> (i32, i32, i32) {
    %c0_i32 = arith.constant 0 : i32
    %c0_i32_0 = arith.constant 0 : i32
    %c0_i32_1 = arith.constant 0 : i32
    return %arg0, %c0_i32, %c0_i32_0 : i32, i32, i32
  }
  func.func @transform_1(%arg0: i32) -> i32 {
    %c0_i32 = arith.constant 0 : i32
    %c0_i32_0 = arith.constant 0 : i32
    return %c0_i32 : i32
  }
  func.func @transform_2(%arg0: i32) -> (i32, i32, i32) {
    %c0_i32 = arith.constant 0 : i32
    %c0_i32_0 = arith.constant 0 : i32
    %c0_i32_1 = arith.constant 0 : i32
    %c0_i32_2 = arith.constant 0 : i32
    return %c0_i32, %c0_i32_0, %c0_i32_1 : i32, i32, i32
  }
  func.func @transform_3(%arg0: i32) -> (i32, i32) {
    %c0_i32 = arith.constant 0 : i32
    %c0_i32_0 = arith.constant 0 : i32
    %c0_i32_1 = arith.constant 0 : i32
    return %c0_i32, %c0_i32_0 : i32, i32
  }
  func.func @transform_4(%arg0: i32) -> (i32, i32) {
    %c0_i32 = arith.constant 0 : i32
    %c0_i32_0 = arith.constant 0 : i32
    %c0_i32_1 = arith.constant 0 : i32
    return %c0_i32, %c0_i32_0 : i32, i32
  }
  func.func @transform_5(%arg0: i32) -> (i32, i32) {
    %c0_i32 = arith.constant 0 : i32
    %c0_i32_0 = arith.constant 0 : i32
    %c0_i32_1 = arith.constant 0 : i32
    return %c0_i32, %c0_i32_0 : i32, i32
  }
  func.func @transform_6(%arg0: i32) -> (i32, i32) {
    %c0_i32 = arith.constant 0 : i32
    %c0_i32_0 = arith.constant 0 : i32
    %c0_i32_1 = arith.constant 0 : i32
    return %c0_i32, %c0_i32_0 : i32, i32
  }
  func.func @transform_7(%arg0: i32) -> (i32, i32, i32) {
    %c0_i32 = arith.constant 0 : i32
    %c0_i32_0 = arith.constant 0 : i32
    %c0_i32_1 = arith.constant 0 : i32
    return %arg0, %c0_i32, %c0_i32_0 : i32, i32, i32
  }
}

</mosaic_0001>

<llo_original>
// kernel: discriminator_forward.1
$region0: #{discriminator_forward.1}
  #allocation0 [shape = 'u32[]', space=smem, size = 0x4, offset = 0x4, fixed_abs, tag = 'smem constant byte address 0x4 - core index']
  #allocation1 [shape = 'u32[144,128]{1,0:T(1,128)}', space=vmem, size = 0x12000, scoped, tag = 'internal scratch']
  %s0 = inlined_call_operand.vmem [shape: f32[2,128,1], index: 0, kind: input, shape index: {}]
  %s1 = inlined_call_operand.hbm [shape: f32[22], index: 1, kind: input, shape index: {}]
  %s2 = inlined_call_operand.hbm [shape: f32[12,256,128], index: 2, kind: input, shape index: {}]
  %s3 = inlined_call_operand.hbm [shape: f32[128,128], index: 3, kind: input, shape index: {}]
  %s4 = inlined_call_operand.hbm [shape: f32[8,128], index: 4, kind: input, shape index: {}]
  %s5 = inlined_call_operand.hbm [shape: f32[16,128], index: 5, kind: input, shape index: {}]
  %s6 = inlined_call_operand.vmem [shape: f32[128,1], index: 6, kind: input, shape index: {}]
  %s7 = inlined_call_operand.vmem [shape: f32[2,2,128], index: 7, kind: output, shape index: {}]
  %s8 = sld [smem:[#allocation0]]
  $region81: #{discriminator_forward.1} parent=0
    _
  %s10 = ssub.s32 1, %s8
  %s11 = scalar_select 0, %s10, %s8
  $region1: #{discriminator_forward.1} parent=0
    #allocation2 [shape = 'u8[512]{0}', space=smem, size = 0x200, scoped, tag = 'input window, operand 1, single buffered']
    #allocation3 [shape = 's32[2]{0}', space=sflag, size = 0x8, scoped, tag = 'scoped memory for discriminator_forward.1']
    #allocation4 [shape = 's32[2]{0}', space=sflag, size = 0x8, scoped, tag = 'scoped memory for discriminator_forward.1']
    #allocation5 [shape = 'u8[1572864]{0}', space=vmem, size = 0x180000, scoped, tag = 'input window, operand 2, single buffered']
    #allocation6 [shape = 'u8[65536]{0}', space=vmem, size = 0x10000, scoped, tag = 'input window, operand 3, single buffered']
    #allocation7 [shape = 's32[1]{0}', space=sflag, size = 0x4, scoped, tag = 'scoped memory for discriminator_forward.1']
    #allocation8 [shape = 'u8[4096]{0}', space=vmem, size = 0x1000, scoped, tag = 'input window, operand 4, single buffered']
    #allocation9 [shape = 'u8[8192]{0}', space=vmem, size = 0x2000, scoped, tag = 'input window, operand 5, single buffered']
    #allocation10 [shape = 's32[1]{0}', space=sflag, size = 0x4, scoped, tag = 'scoped memory for discriminator_forward.1']
    %12 = vsyncpa [#allocation4], 0
    %13 = vsyncpa [#allocation3], 0
    %14 = vsyncpa [#allocation7], 0
    %15 = vsyncpa [#allocation10], 0
    loop: start=0, step=1, limit=4
    $region2: #{discriminator_forward.1} parent=1 // loop_pre_header
      _
    $region3: #{discriminator_forward.1} parent=1 // loop_header
      %s17 = sphi 0, %s21
      %p18 = scmp.ge.s32.totalorder %s17, 4
      %s27 = sphi 0, %s29
      %s30 = sphi 0, %s27
      %s31 = sphi 0, %s30
      %s47 = sphi 0, %s31
      %s51 = sphi 0, %s51
      %s53 = sphi 0, %s51
      %s54 = sphi 0, %s53
      %s68 = sphi 0, %s54
      %s72 = sphi 0, %s72
      %s74 = sphi 0, %s72
      %s75 = sphi 0, %s74
      %s89 = sphi 0, %s75
      %s93 = sphi 0, %s93
      %s95 = sphi 0, %s93
      %s96 = sphi 0, %s95
      %s110 = sphi 0, %s96
      %s114 = sphi 0, %s114
      %s116 = sphi 0, %s114
      %s117 = sphi 0, %s116
      %s131 = sphi 0, %s117
      %s135 = sphi 0, %s135
      %s137 = sphi 0, %s135
      %s138 = sphi 0, %s137
      %s152 = sphi 0, %s138
      %s156 = sphi 0, %s156
      %s158 = sphi 0, %s156
      %s159 = sphi 0, %s158
      %s173 = sphi 0, %s159
      %s179 = sphi 0, %s181
      %s182 = sphi 0, %s179
      %s183 = sphi 0, %s182
      %s199 = sphi 0, %s183
    $region4: #{discriminator_forward.1} parent=1 // loop_header_branch
      %20 = sbr.rel (%p18) target = $region8
    $region5: #{discriminator_forward.1} parent=1 // loop_body
      %s22 = ssub.s32 %s17, 1
      %s23 = ssub.s32 %s17, 2
      %s24 = sadd.s32 %s17, 1
      %s25 = ssub.s32 %s17, %s24
      %p26 = scmp.eq.s32.totalorder %s25, 0
      %s28 = sadd.s32 %s27, 1
      %s29 = scalar_select %p26, %s27, %s28
      %p32 = pneg %p26
      %p33 = scmp.eq.s32.totalorder %s17, 1
      %p34 = por %p32, %p33
      %p35 = scmp.ne.s32.totalorder %s27, %s30
      %p36 = scmp.eq.s32.totalorder %s17, 0
      %p37 = por %p35, %p36
      %p38 = scmp.ne.s32.totalorder %s27, %s30
      %p39 = scmp.eq.s32.totalorder %s22, 1
      %p40 = por %p38, %p39
      %p41 = scmp.ne.s32.totalorder %s30, %s31
      %p42 = scmp.eq.s32.totalorder %s22, 0
      %p43 = por %p41, %p42
      %p44 = scmp.ne.s32.totalorder %s30, %s31
      %p45 = scmp.eq.s32.totalorder %s23, 1
      %p46 = por %p44, %p45
      %p48 = scmp.ne.s32.totalorder %s31, %s47
      %p49 = scmp.eq.s32.totalorder %s23, 0
      %p50 = por %p48, %p49
      %s52 = sadd.s32 %s51, 1
      %p55 = scmp.eq.s32.totalorder %s17, 1
      %p56 = scmp.ne.s32.totalorder %s51, %s53
      %p57 = scmp.eq.s32.totalorder %s17, 0
      %p58 = por %p56, %p57
      %p59 = scmp.ne.s32.totalorder %s51, %s53
      %p60 = scmp.eq.s32.totalorder %s22, 1
      %p61 = por %p59, %p60
      %p62 = scmp.ne.s32.totalorder %s53, %s54
      %p63 = scmp.eq.s32.totalorder %s22, 0
      %p64 = por %p62, %p63
      %p65 = scmp.ne.s32.totalorder %s53, %s54
      %p66 = scmp.eq.s32.totalorder %s23, 1
      %p67 = por %p65, %p66
      %p69 = scmp.ne.s32.totalorder %s54, %s68
      %p70 = scmp.eq.s32.totalorder %s23, 0
      %p71 = por %p69, %p70
      %s73 = sadd.s32 %s72, 1
      %p76 = scmp.eq.s32.totalorder %s17, 1
      %p77 = scmp.ne.s32.totalorder %s72, %s74
      %p78 = scmp.eq.s32.totalorder %s17, 0
      %p79 = por %p77, %p78
      %p80 = scmp.ne.s32.totalorder %s72, %s74
      %p81 = scmp.eq.s32.totalorder %s22, 1
      %p82 = por %p80, %p81
      %p83 = scmp.ne.s32.totalorder %s74, %s75
      %p84 = scmp.eq.s32.totalorder %s22, 0
      %p85 = por %p83, %p84
      %p86 = scmp.ne.s32.totalorder %s74, %s75
      %p87 = scmp.eq.s32.totalorder %s23, 1
      %p88 = por %p86, %p87
      %p90 = scmp.ne.s32.totalorder %s75, %s89
      %p91 = scmp.eq.s32.totalorder %s23, 0
      %p92 = por %p90, %p91
      %s94 = sadd.s32 %s93, 1
      %p97 = scmp.eq.s32.totalorder %s17, 1
      %p98 = scmp.ne.s32.totalorder %s93, %s95
      %p99 = scmp.eq.s32.totalorder %s17, 0
      %p100 = por %p98, %p99
      %p101 = scmp.ne.s32.totalorder %s93, %s95
      %p102 = scmp.eq.s32.totalorder %s22, 1
      %p103 = por %p101, %p102
      %p104 = scmp.ne.s32.totalorder %s95, %s96
      %p105 = scmp.eq.s32.totalorder %s22, 0
      %p106 = por %p104, %p105
      %p107 = scmp.ne.s32.totalorder %s95, %s96
      %p108 = scmp.eq.s32.totalorder %s23, 1
      %p109 = por %p107, %p108
      %p111 = scmp.ne.s32.totalorder %s96, %s110
      %p112 = scmp.eq.s32.totalorder %s23, 0
      %p113 = por %p111, %p112
      %s115 = sadd.s32 %s114, 1
      %p118 = scmp.eq.s32.totalorder %s17, 1
      %p119 = scmp.ne.s32.totalorder %s114, %s116
      %p120 = scmp.eq.s32.totalorder %s17, 0
      %p121 = por %p119, %p120
      %p122 = scmp.ne.s32.totalorder %s114, %s116
      %p123 = scmp.eq.s32.totalorder %s22, 1
      %p124 = por %p122, %p123
      %p125 = scmp.ne.s32.totalorder %s116, %s117
      %p126 = scmp.eq.s32.totalorder %s22, 0
      %p127 = por %p125, %p126
      %p128 = scmp.ne.s32.totalorder %s116, %s117
      %p129 = scmp.eq.s32.totalorder %s23, 1
      %p130 = por %p128, %p129
      %p132 = scmp.ne.s32.totalorder %s117, %s131
      %p133 = scmp.eq.s32.totalorder %s23, 0
      %p134 = por %p132, %p133
      %s136 = sadd.s32 %s135, 1
      %p139 = scmp.eq.s32.totalorder %s17, 1
      %p140 = scmp.ne.s32.totalorder %s135, %s137
      %p141 = scmp.eq.s32.totalorder %s17, 0
      %p142 = por %p140, %p141
      %p143 = scmp.ne.s32.totalorder %s135, %s137
      %p144 = scmp.eq.s32.totalorder %s22, 1
      %p145 = por %p143, %p144
      %p146 = scmp.ne.s32.totalorder %s137, %s138
      %p147 = scmp.eq.s32.totalorder %s22, 0
      %p148 = por %p146, %p147
      %p149 = scmp.ne.s32.totalorder %s137, %s138
      %p150 = scmp.eq.s32.totalorder %s23, 1
      %p151 = por %p149, %p150
      %p153 = scmp.ne.s32.totalorder %s138, %s152
      %p154 = scmp.eq.s32.totalorder %s23, 0
      %p155 = por %p153, %p154
      %s157 = sadd.s32 %s156, 1
      %p160 = scmp.eq.s32.totalorder %s17, 1
      %p161 = scmp.ne.s32.totalorder %s156, %s158
      %p162 = scmp.eq.s32.totalorder %s17, 0
      %p163 = por %p161, %p162
      %p164 = scmp.ne.s32.totalorder %s156, %s158
      %p165 = scmp.eq.s32.totalorder %s22, 1
      %p166 = por %p164, %p165
      %p167 = scmp.ne.s32.totalorder %s158, %s159
      %p168 = scmp.eq.s32.totalorder %s22, 0
      %p169 = por %p167, %p168
      %p170 = scmp.ne.s32.totalorder %s158, %s159
      %p171 = scmp.eq.s32.totalorder %s23, 1
      %p172 = por %p170, %p171
      %p174 = scmp.ne.s32.totalorder %s159, %s173
      %p175 = scmp.eq.s32.totalorder %s23, 0
      %p176 = por %p174, %p175
      %s177 = ssub.s32 %s17, %s24
      %p178 = scmp.eq.s32.totalorder %s177, 0
      %s180 = sadd.s32 %s179, 1
      %s181 = scalar_select %p178, %s179, %s180
      %p184 = pneg %p178
      %p185 = scmp.eq.s32.totalorder %s17, 1
      %p186 = por %p184, %p185
      %p187 = scmp.ne.s32.totalorder %s179, %s182
      %p188 = scmp.eq.s32.totalorder %s17, 0
      %p189 = por %p187, %p188
      %p190 = scmp.ne.s32.totalorder %s179, %s182
      %p191 = scmp.eq.s32.totalorder %s22, 1
      %p192 = por %p190, %p191
      %p193 = scmp.ne.s32.totalorder %s182, %s183
      %p194 = scmp.eq.s32.totalorder %s22, 0
      %p195 = por %p193, %p194
      %p196 = scmp.ne.s32.totalorder %s182, %s183
      %p197 = scmp.eq.s32.totalorder %s23, 1
      %p198 = por %p196, %p197
      %p200 = scmp.ne.s32.totalorder %s183, %s199
      %p201 = scmp.eq.s32.totalorder %s23, 0
      %p202 = por %p200, %p201
      %p203 = scmp.le.s32.totalorder 1, %s17
      %p204 = scmp.lt.s32.totalorder %s17, 3
      %p205 = pnand %p203, %p204
      %p206 = pneg %p205
      // Predicated region
      $region9: #{discriminator_forward.1} parent=5 // pred_check
        _
      $region10: #{discriminator_forward.1} parent=5 // pred_check_branch
        %208 = sbr.rel (%p205) target = $region12
      $region11: #{discriminator_forward.1} parent=5 // pred_region
        %s209 = ssub.s32 %s17, 1
        // Predicated region
        $region13: #{discriminator_forward.1} parent=11 // pred_check
          %p210 = pneg %p64
        $region14: #{discriminator_forward.1} parent=11 // pred_check_branch
          %212 = sbr.rel (%p210) target = $region16
        $region15: #{discriminator_forward.1} parent=11 // pred_region
          %s214 = ssub.s32 16, 16
          %215 = vsyncadd [#allocation4], %s214
          %218 = dma.hbm_to_smem %s1, 16, [#allocation2], [#allocation4]
        $region16: #{discriminator_forward.1} parent=11 // pred_fallthru
          _
        // Predicated region
        $region17: #{discriminator_forward.1} parent=11 // pred_check
          %p219 = pneg %p85
        $region18: #{discriminator_forward.1} parent=11 // pred_check_branch
          %221 = sbr.rel (%p219) target = $region20
        $region19: #{discriminator_forward.1} parent=11 // pred_region
          %s223 = ssub.s32 49152, 49152
          %224 = vsyncadd [#allocation3], %s223
          %s225 = sshll.u32 [#allocation5], 4
          %s226 = int_to_ptr.vmem [resolvable:$true] %s225
          %231 = dma.hbm_to_vmem [thread:$0]  %s2, 49152, %s226, [#allocation3], 128, 128, 8
        $region20: #{discriminator_forward.1} parent=11 // pred_fallthru
          _
        // Predicated region
        $region21: #{discriminator_forward.1} parent=11 // pred_check
          %p232 = pneg %p106
        $region22: #{discriminator_forward.1} parent=11 // pred_check_branch
          %234 = sbr.rel (%p232) target = $region24
        $region23: #{discriminator_forward.1} parent=11 // pred_region
          %s236 = ssub.s32 2048, 2048
          %237 = vsyncadd [#allocation7], %s236
          %s238 = sshll.u32 [#allocation6], 4
          %s239 = int_to_ptr.vmem [resolvable:$true] %s238
          %244 = dma.hbm_to_vmem [thread:$0]  %s3, 2048, %s239, [#allocation7], 128, 128, 8
        $region24: #{discriminator_forward.1} parent=11 // pred_fallthru
          _
        // Predicated region
        $region25: #{discriminator_forward.1} parent=11 // pred_check
          %p245 = pneg %p127
        $region26: #{discriminator_forward.1} parent=11 // pred_check_branch
          %247 = sbr.rel (%p245) target = $region28
        $region27: #{discriminator_forward.1} parent=11 // pred_region
          %s249 = ssub.s32 128, 128
          %250 = vsyncadd [#allocation7], %s249
          %s252 = sshll.u32 [#allocation8], 4
          %s253 = int_to_ptr.vmem [resolvable:$true] %s252
          %255 = dma.hbm_to_vmem [thread:$0]  %s4, 128, %s253, [#allocation7]
        $region28: #{discriminator_forward.1} parent=11 // pred_fallthru
          _
        // Predicated region
        $region29: #{discriminator_forward.1} parent=11 // pred_check
          %p256 = pneg %p148
        $region30: #{discriminator_forward.1} parent=11 // pred_check_branch
          %258 = sbr.rel (%p256) target = $region32
        $region31: #{discriminator_forward.1} parent=11 // pred_region
          %s260 = ssub.s32 256, 256
          %261 = vsyncadd [#allocation10], %s260
          %s262 = sshll.u32 [#allocation9], 4
          %s263 = int_to_ptr.vmem [resolvable:$true] %s262
          %268 = dma.hbm_to_vmem [thread:$0]  %s5, 256, %s263, [#allocation10], 128, 128, 8
        $region32: #{discriminator_forward.1} parent=11 // pred_fallthru
          _
        // Predicated region
        $region33: #{discriminator_forward.1} parent=11 // pred_check
          %p269 = pneg %p169
        $region34: #{discriminator_forward.1} parent=11 // pred_check_branch
          %271 = sbr.rel (%p269) target = $region36
        $region35: #{discriminator_forward.1} parent=11 // pred_region
          _
        $region36: #{discriminator_forward.1} parent=11 // pred_fallthru
          _
      $region12: #{discriminator_forward.1} parent=5 // pred_fallthru
        _
      %p272 = scmp.lt.s32.totalorder %s17, 2
      // Predicated region
      $region37: #{discriminator_forward.1} parent=5 // pred_check
        %p273 = pneg %p272
      $region38: #{discriminator_forward.1} parent=5 // pred_check_branch
        %275 = sbr.rel (%p273) target = $region40
      $region39: #{discriminator_forward.1} parent=5 // pred_region
        // Predicated region
        $region41: #{discriminator_forward.1} parent=39 // pred_check
          %p276 = pneg %p37
        $region42: #{discriminator_forward.1} parent=39 // pred_check_branch
          %278 = sbr.rel (%p276) target = $region44
        $region43: #{discriminator_forward.1} parent=39 // pred_region
          %p279 = scmp.lt.s32.totalorder %s17, 1
          %s280 = scalar_select %p279, %s17, 1
          %s281 = smul.addr %s280, 16
          %s282 = smul.addr %s281, 8
          %s283 = scalar_lea.vmem %s0, %s282
        $region44: #{discriminator_forward.1} parent=39 // pred_fallthru
          _
      $region40: #{discriminator_forward.1} parent=5 // pred_fallthru
        _
      %p284 = scmp.le.s32.totalorder 1, %s17
      %p285 = scmp.lt.s32.totalorder %s17, 3
      %p286 = pnand %p284, %p285
      %p287 = pneg %p286
      // Predicated region
      $region45: #{discriminator_forward.1} parent=5 // pred_check
        _
      $region46: #{discriminator_forward.1} parent=5 // pred_check_branch
        %289 = sbr.rel (%p286) target = $region48
      $region47: #{discriminator_forward.1} parent=5 // pred_region
        %s290 = ssub.s32 %s17, 1
        // Predicated region
        $region49: #{discriminator_forward.1} parent=47 // pred_check
          %p291 = pneg %p64
        $region50: #{discriminator_forward.1} parent=47 // pred_check_branch
          %293 = sbr.rel (%p291) target = $region52
        $region51: #{discriminator_forward.1} parent=47 // pred_region
          %294 = dma.done [#allocation4], 16
        $region52: #{discriminator_forward.1} parent=47 // pred_fallthru
          _
        // Predicated region
        $region53: #{discriminator_forward.1} parent=47 // pred_check
          %p295 = pneg %p85
        $region54: #{discriminator_forward.1} parent=47 // pred_check_branch
          %297 = sbr.rel (%p295) target = $region56
        $region55: #{discriminator_forward.1} parent=47 // pred_region
          %298 = dma.done [#allocation3], 49152
        $region56: #{discriminator_forward.1} parent=47 // pred_fallthru
          _
        // Predicated region
        $region57: #{discriminator_forward.1} parent=47 // pred_check
          %p299 = pneg %p106
        $region58: #{discriminator_forward.1} parent=47 // pred_check_branch
          %301 = sbr.rel (%p299) target = $region60
        $region59: #{discriminator_forward.1} parent=47 // pred_region
          %302 = dma.done [#allocation7], 2048
        $region60: #{discriminator_forward.1} parent=47 // pred_fallthru
          _
        // Predicated region
        $region61: #{discriminator_forward.1} parent=47 // pred_check
          %p303 = pneg %p127
        $region62: #{discriminator_forward.1} parent=47 // pred_check_branch
          %305 = sbr.rel (%p303) target = $region64
        $region63: #{discriminator_forward.1} parent=47 // pred_region
          %306 = dma.done [#allocation7], 128
        $region64: #{discriminator_forward.1} parent=47 // pred_fallthru
          _
        // Predicated region
        $region65: #{discriminator_forward.1} parent=47 // pred_check
          %p307 = pneg %p148
        $region66: #{discriminator_forward.1} parent=47 // pred_check_branch
          %309 = sbr.rel (%p307) target = $region68
        $region67: #{discriminator_forward.1} parent=47 // pred_region
          %310 = dma.done [#allocation10], 256
        $region68: #{discriminator_forward.1} parent=47 // pred_fallthru
          _
        %311 = sfence
        %p312 = scmp.lt.s32.totalorder %s22, 1
        %s313 = scalar_select %p312, %s22, 1
        %s314 = smul.addr %s313, 16
        %s315 = smul.addr %s314, 8
        %s316 = scalar_lea.vmem %s0, %s315
        %p317 = pneg %p43
        %p318 = pneg %p40
        %p319 = pneg %p64
        %p320 = pneg %p61
        %p321 = pneg %p85
        %p322 = pneg %p82
        %p323 = pneg %p106
        %p324 = pneg %p103
        %p325 = pneg %p127
        %p326 = pneg %p124
        %p327 = pneg %p148
        %p328 = pneg %p145
        %p329 = pneg %p169
        %p330 = pneg %p166
        %p331 = pneg %p195
        %p332 = pneg %p192
        %p333 = scmp.lt.s32.totalorder %s22, 1
        %s334 = scalar_select %p333, %s22, 1
        %s335 = smul.addr %s334, 2
        %s336 = scalar_lea.vmem %s7, %s335
        %p337 = scmp.lt.s32.totalorder %s22, 1
        %s338 = scalar_select %p337, %s22, 1
        %s339 = smul.addr %s338, 16
        %s340 = smul.addr %s339, 8
        %s341 = scalar_lea.vmem %s0, %s340
        %p342 = scmp.lt.s32.totalorder %s22, 1
        %s343 = scalar_select %p342, %s22, 1
        %s344 = smul.addr %s343, 2
        %s345 = scalar_lea.vmem %s7, %s344
        %v346 = vld [vmem:[%s341] sm:$0xff]
        %v347 = vld [vmem:[%s341 + $0x8] sm:$0xff]
        %v348 = vld [vmem:[%s341 + $0x10] sm:$0xff]
        %v349 = vld [vmem:[%s341 + $0x18] sm:$0xff]
        %v350 = vld [vmem:[%s341 + $0x20] sm:$0xff]
        %v351 = vld [vmem:[%s341 + $0x28] sm:$0xff]
        %v352 = vld [vmem:[%s341 + $0x30] sm:$0xff]
        %v353 = vld [vmem:[%s341 + $0x38] sm:$0xff]
        %v354 = vld [vmem:[%s341 + $0x40] sm:$0xff]
        %v355 = vld [vmem:[%s341 + $0x48] sm:$0xff]
        %v356 = vld [vmem:[%s341 + $0x50] sm:$0xff]
        %v357 = vld [vmem:[%s341 + $0x58] sm:$0xff]
        %v358 = vld [vmem:[%s341 + $0x60] sm:$0xff]
        %v359 = vld [vmem:[%s341 + $0x68] sm:$0xff]
        %v360 = vld [vmem:[%s341 + $0x70] sm:$0xff]
        %v361 = vld [vmem:[%s341 + $0x78] sm:$0xff]
        %v362 = vld [vmem:[#allocation8] sm:$0xff]
        %v363 = vld [vmem:[#allocation9] sm:$0xff]
        %v364 = vld [vmem:[#allocation9 + $0x8] sm:$0xff]
        %v365 = vld [vmem:[%s6] sm:$0xff]
        %v366 = vld [vmem:[%s6 + $0x8] sm:$0xff]
        %v367 = vld [vmem:[%s6 + $0x10] sm:$0xff]
        %v368 = vld [vmem:[%s6 + $0x18] sm:$0xff]
        %v369 = vld [vmem:[%s6 + $0x20] sm:$0xff]
        %v370 = vld [vmem:[%s6 + $0x28] sm:$0xff]
        %v371 = vld [vmem:[%s6 + $0x30] sm:$0xff]
        %v372 = vld [vmem:[%s6 + $0x38] sm:$0xff]
        %v373 = vld [vmem:[%s6 + $0x40] sm:$0xff]
        %v374 = vld [vmem:[%s6 + $0x48] sm:$0xff]
        %v375 = vld [vmem:[%s6 + $0x50] sm:$0xff]
        %v376 = vld [vmem:[%s6 + $0x58] sm:$0xff]
        %v377 = vld [vmem:[%s6 + $0x60] sm:$0xff]
        %v378 = vld [vmem:[%s6 + $0x68] sm:$0xff]
        %v379 = vld [vmem:[%s6 + $0x70] sm:$0xff]
        %v380 = vld [vmem:[%s6 + $0x78] sm:$0xff]
        %v381 = vlaneseq
        %v382 = vshrl.u32 %v381, 7
        %v383 = vadd.s32 %v382, 8
        %v384 = vadd.s32 %v382, 16
        %v385 = vadd.s32 %v382, 24
        %v386 = vadd.s32 %v382, 32
        %v387 = vadd.s32 %v382, 40
        %v388 = vadd.s32 %v382, 48
        %v389 = vadd.s32 %v382, 56
        %s390 = sld [smem:[#allocation2]]
        %s391 = sld [smem:[#allocation2 + $0x1]]
        %s392 = sld [smem:[#allocation2 + $0x2]]
        %394 = vset.pattern.permute.xlu0 0
        %395 = vperm.xlu0 %394, %v346
        %v396 = vpop.permute.xlu0 %395
        %399 = vset.pattern.permute.xlu0 0
        %400 = vperm.xlu0 %399, %v347
        %v401 = vpop.permute.xlu0 %400
        %404 = vset.pattern.permute.xlu0 0
        %405 = vperm.xlu0 %404, %v348
        %v406 = vpop.permute.xlu0 %405
        %409 = vset.pattern.permute.xlu0 0
        %410 = vperm.xlu0 %409, %v349
        %v411 = vpop.permute.xlu0 %410
        %414 = vset.pattern.permute.xlu0 0
        %415 = vperm.xlu0 %414, %v350
        %v416 = vpop.permute.xlu0 %415
        %419 = vset.pattern.permute.xlu0 0
        %420 = vperm.xlu0 %419, %v351
        %v421 = vpop.permute.xlu0 %420
        %424 = vset.pattern.permute.xlu0 0
        %425 = vperm.xlu0 %424, %v352
        %v426 = vpop.permute.xlu0 %425
        %429 = vset.pattern.permute.xlu0 0
        %430 = vperm.xlu0 %429, %v353
        %v431 = vpop.permute.xlu0 %430
        %434 = vset.pattern.permute.xlu0 0
        %435 = vperm.xlu0 %434, %v354
        %v436 = vpop.permute.xlu0 %435
        %439 = vset.pattern.permute.xlu0 0
        %440 = vperm.xlu0 %439, %v355
        %v441 = vpop.permute.xlu0 %440
        %444 = vset.pattern.permute.xlu0 0
        %445 = vperm.xlu0 %444, %v356
        %v446 = vpop.permute.xlu0 %445
        %449 = vset.pattern.permute.xlu0 0
        %450 = vperm.xlu0 %449, %v357
        %v451 = vpop.permute.xlu0 %450
        %454 = vset.pattern.permute.xlu0 0
        %455 = vperm.xlu0 %454, %v358
        %v456 = vpop.permute.xlu0 %455
        %459 = vset.pattern.permute.xlu0 0
        %460 = vperm.xlu0 %459, %v359
        %v461 = vpop.permute.xlu0 %460
        %464 = vset.pattern.permute.xlu0 0
        %465 = vperm.xlu0 %464, %v360
        %v466 = vpop.permute.xlu0 %465
        %469 = vset.pattern.permute.xlu0 0
        %470 = vperm.xlu0 %469, %v361
        %v471 = vpop.permute.xlu0 %470
        %v473 = vlaneseq
        %v474 = vshrl.u32 %v473, 7
        %v475 = vsub.s32 0, %v474
        %v476 = vrot.slane %v362, %v475
        %v477 = vmul.f32 %v396, %v476
        %v478 = vmul.f32 %v401, %v476
        %v479 = vmul.f32 %v406, %v476
        %v480 = vmul.f32 %v411, %v476
        %v481 = vmul.f32 %v416, %v476
        %v482 = vmul.f32 %v421, %v476
        %v483 = vmul.f32 %v426, %v476
        %v484 = vmul.f32 %v431, %v476
        %v485 = vmul.f32 %v436, %v476
        %v486 = vmul.f32 %v441, %v476
        %v487 = vmul.f32 %v446, %v476
        %v488 = vmul.f32 %v451, %v476
        %v489 = vmul.f32 %v456, %v476
        %v490 = vmul.f32 %v461, %v476
        %v491 = vmul.f32 %v466, %v476
        %v492 = vmul.f32 %v471, %v476
        %v493 = vlaneseq
        %v494 = vshrl.u32 %v493, 7
        %v495 = vsub.s32 0, %v494
        %v496 = vrot.slane %v363, %v495
        %v497 = vadd.f32 %v477, %v496
        %v498 = vadd.f32 %v478, %v496
        %v499 = vadd.f32 %v479, %v496
        %v500 = vadd.f32 %v480, %v496
        %v501 = vadd.f32 %v481, %v496
        %v502 = vadd.f32 %v482, %v496
        %v503 = vadd.f32 %v483, %v496
        %v504 = vadd.f32 %v484, %v496
        %v505 = vadd.f32 %v485, %v496
        %v506 = vadd.f32 %v486, %v496
        %v507 = vadd.f32 %v487, %v496
        %v508 = vadd.f32 %v488, %v496
        %v509 = vadd.f32 %v489, %v496
        %v510 = vadd.f32 %v490, %v496
        %v511 = vadd.f32 %v491, %v496
        %v512 = vadd.f32 %v492, %v496
        %vm513 = vcmp.gt.f32.partialorder %v497, 0.0
        %vm514 = vcmp.gt.f32.partialorder %v498, 0.0
        %vm515 = vcmp.gt.f32.partialorder %v499, 0.0
        %vm516 = vcmp.gt.f32.partialorder %v500, 0.0
        %vm517 = vcmp.gt.f32.partialorder %v501, 0.0
        %vm518 = vcmp.gt.f32.partialorder %v502, 0.0
        %vm519 = vcmp.gt.f32.partialorder %v503, 0.0
        %vm520 = vcmp.gt.f32.partialorder %v504, 0.0
        %vm521 = vcmp.gt.f32.partialorder %v505, 0.0
        %vm522 = vcmp.gt.f32.partialorder %v506, 0.0
        %vm523 = vcmp.gt.f32.partialorder %v507, 0.0
        %vm524 = vcmp.gt.f32.partialorder %v508, 0.0
        %vm525 = vcmp.gt.f32.partialorder %v509, 0.0
        %vm526 = vcmp.gt.f32.partialorder %v510, 0.0
        %vm527 = vcmp.gt.f32.partialorder %v511, 0.0
        %vm528 = vcmp.gt.f32.partialorder %v512, 0.0
        %v529 = vstv %s390
        %v530 = vmul.f32 %v529, %v497
        %v531 = vmul.f32 %v529, %v498
        %v532 = vmul.f32 %v529, %v499
        %v533 = vmul.f32 %v529, %v500
        %v534 = vmul.f32 %v529, %v501
        %v535 = vmul.f32 %v529, %v502
        %v536 = vmul.f32 %v529, %v503
        %v537 = vmul.f32 %v529, %v504
        %v538 = vmul.f32 %v529, %v505
        %v539 = vmul.f32 %v529, %v506
        %v540 = vmul.f32 %v529, %v507
        %v541 = vmul.f32 %v529, %v508
        %v542 = vmul.f32 %v529, %v509
        %v543 = vmul.f32 %v529, %v510
        %v544 = vmul.f32 %v529, %v511
        %v545 = vmul.f32 %v529, %v512
        %v546 = vsel %vm513, %v497, %v530
        %v547 = vsel %vm514, %v498, %v531
        %v548 = vsel %vm515, %v499, %v532
        %v549 = vsel %vm516, %v500, %v533
        %v550 = vsel %vm517, %v501, %v534
        %v551 = vsel %vm518, %v502, %v535
        %v552 = vsel %vm519, %v503, %v536
        %v553 = vsel %vm520, %v504, %v537
        %v554 = vsel %vm521, %v505, %v538
        %v555 = vsel %vm522, %v506, %v539
        %v556 = vsel %vm523, %v507, %v540
        %v557 = vsel %vm524, %v508, %v541
        %v558 = vsel %vm525, %v509, %v542
        %v559 = vsel %vm526, %v510, %v543
        %v560 = vsel %vm527, %v511, %v544
        %v561 = vsel %vm528, %v512, %v545
        %v562 = vld [vmem:[#allocation6] sm:$0xff]
        %v563 = vld [vmem:[#allocation6 + $0x8] sm:$0xff]
        %v564 = vld [vmem:[#allocation6 + $0x10] sm:$0xff]
        %v565 = vld [vmem:[#allocation6 + $0x18] sm:$0xff]
        %v566 = vld [vmem:[#allocation6 + $0x20] sm:$0xff]
        %v567 = vld [vmem:[#allocation6 + $0x28] sm:$0xff]
        %v568 = vld [vmem:[#allocation6 + $0x30] sm:$0xff]
        %v569 = vld [vmem:[#allocation6 + $0x38] sm:$0xff]
        %v570 = vld [vmem:[#allocation6 + $0x40] sm:$0xff]
        %v571 = vld [vmem:[#allocation6 + $0x48] sm:$0xff]
        %v572 = vld [vmem:[#allocation6 + $0x50] sm:$0xff]
        %v573 = vld [vmem:[#allocation6 + $0x58] sm:$0xff]
        %v574 = vld [vmem:[#allocation6 + $0x60] sm:$0xff]
        %v575 = vld [vmem:[#allocation6 + $0x68] sm:$0xff]
        %v576 = vld [vmem:[#allocation6 + $0x70] sm:$0xff]
        %v577 = vld [vmem:[#allocation6 + $0x78] sm:$0xff]
        %v578 = vlaneseq
        %v579 = vshrl.u32 %v578, 7
        %v580 = vsub.s32 1, %v579
        %v581 = vrot.slane %v363, %v580
        %582 = vmatprep.subr.mxu0 0.0
        %583 = vmatpush1.msra.mxu0 %v577
        %584 = vmatprep.subr.mxu0 0.0
        %585 = vmatpush1.msra.mxu0 %v576
        %586 = vmatprep.subr.mxu0 0.0
        %587 = vmatpush1.msra.mxu0 %v575
        %588 = vmatprep.subr.mxu0 0.0
        %589 = vmatpush1.msra.mxu0 %v574
        %590 = vmatprep.subr.mxu0 0.0
        %591 = vmatpush1.msra.mxu0 %v573
        %592 = vmatprep.subr.mxu0 0.0
        %593 = vmatpush1.msra.mxu0 %v572
        %594 = vmatprep.subr.mxu0 0.0
        %595 = vmatpush1.msra.mxu0 %v571
        %596 = vmatprep.subr.mxu0 0.0
        %597 = vmatpush1.msra.mxu0 %v570
        %598 = vmatprep.subr.mxu0 0.0
        %599 = vmatpush1.msra.mxu0 %v569
        %600 = vmatprep.subr.mxu0 0.0
        %601 = vmatpush1.msra.mxu0 %v568
        %602 = vmatprep.subr.mxu0 0.0
        %603 = vmatpush1.msra.mxu0 %v567
        %604 = vmatprep.subr.mxu0 0.0
        %605 = vmatpush1.msra.mxu0 %v566
        %606 = vmatprep.subr.mxu0 0.0
        %607 = vmatpush1.msra.mxu0 %v565
        %608 = vmatprep.subr.mxu0 0.0
        %609 = vmatpush1.msra.mxu0 %v564
        %610 = vmatprep.subr.mxu0 0.0
        %611 = vmatpush1.msra.mxu0 %v563
        %612 = vmatprep.subr.mxu0 0.0
        %613 = vmatpush1.msra.mxu0 %v562
        %614 = vmatprep.subr.mxu0 0.0
        %615 = vmatpush2.msra.mxu0 0.0
        %616 = vmatprep.subr.mxu0 0.0
        %617 = vmatpush2.msra.mxu0 0.0
        %618 = vmatprep.subr.mxu0 0.0
        %619 = vmatpush2.msra.mxu0 0.0
        %620 = vmatprep.subr.mxu0 0.0
        %621 = vmatpush2.msra.mxu0 0.0
        %622 = vmatprep.subr.mxu0 0.0
        %623 = vmatpush2.msra.mxu0 0.0
        %624 = vmatprep.subr.mxu0 0.0
        %625 = vmatpush2.msra.mxu0 0.0
        %626 = vmatprep.subr.mxu0 0.0
        %627 = vmatpush2.msra.mxu0 0.0
        %628 = vmatprep.subr.mxu0 0.0
        %629 = vmatpush2.msra.mxu0 0.0
        %630 = vmatprep.subr.mxu0 0.0
        %631 = vmatpush2.msra.mxu0 0.0
        %632 = vmatprep.subr.mxu0 0.0
        %633 = vmatpush2.msra.mxu0 0.0
        %634 = vmatprep.subr.mxu0 0.0
        %635 = vmatpush2.msra.mxu0 0.0
        %636 = vmatprep.subr.mxu0 0.0
        %637 = vmatpush2.msra.mxu0 0.0
        %638 = vmatprep.subr.mxu0 0.0
        %639 = vmatpush2.msra.mxu0 0.0
        %640 = vmatprep.subr.mxu0 0.0
        %641 = vmatpush2.msra.mxu0 0.0
        %642 = vmatprep.subr.mxu0 0.0
        %643 = vmatpush2.msra.mxu0 0.0
        %644 = vmatprep.subr.mxu0 0.0
        %645 = vmatpush2.msra.mxu0 0.0
        %646 = vmatprep.mubr.f32.mxu0 0.0
        %647 = vmatmul.mubr.f32.gmra.mxu0 %v546
        %v648 = vpop.f32.mrf.mxu0
        %v649 = vadd.f32 %v581, %v648
        %v650 = vpop.f32.mrf.mxu0
        %651 = vmatprep.mubr.f32.mxu0 0.0
        %652 = vmatmul.mubr.f32.gmra.mxu0 %v547
        %v653 = vpop.f32.mrf.mxu0
        %v654 = vadd.f32 %v581, %v653
        %v655 = vpop.f32.mrf.mxu0
        %656 = vmatprep.mubr.f32.mxu0 0.0
        %657 = vmatmul.mubr.f32.gmra.mxu0 %v548
        %v658 = vpop.f32.mrf.mxu0
        %v659 = vadd.f32 %v581, %v658
        %v660 = vpop.f32.mrf.mxu0
        %661 = vmatprep.mubr.f32.mxu0 0.0
        %662 = vmatmul.mubr.f32.gmra.mxu0 %v549
        %v663 = vpop.f32.mrf.mxu0
        %v664 = vadd.f32 %v581, %v663
        %v665 = vpop.f32.mrf.mxu0
        %666 = vmatprep.mubr.f32.mxu0 0.0
        %667 = vmatmul.mubr.f32.gmra.mxu0 %v550
        %v668 = vpop.f32.mrf.mxu0
        %v669 = vadd.f32 %v581, %v668
        %v670 = vpop.f32.mrf.mxu0
        %671 = vmatprep.mubr.f32.mxu0 0.0
        %672 = vmatmul.mubr.f32.gmra.mxu0 %v551
        %v673 = vpop.f32.mrf.mxu0
        %v674 = vadd.f32 %v581, %v673
        %v675 = vpop.f32.mrf.mxu0
        %676 = vmatprep.mubr.f32.mxu0 0.0
        %677 = vmatmul.mubr.f32.gmra.mxu0 %v552
        %v678 = vpop.f32.mrf.mxu0
        %v679 = vadd.f32 %v581, %v678
        %v680 = vpop.f32.mrf.mxu0
        %681 = vmatprep.mubr.f32.mxu0 0.0
        %682 = vmatmul.mubr.f32.gmra.mxu0 %v553
        %v683 = vpop.f32.mrf.mxu0
        %v684 = vadd.f32 %v581, %v683
        %v685 = vpop.f32.mrf.mxu0
        %686 = vmatprep.mubr.f32.mxu0 0.0
        %687 = vmatmul.mubr.f32.gmra.mxu0 %v554
        %v688 = vpop.f32.mrf.mxu0
        %v689 = vadd.f32 %v581, %v688
        %v690 = vpop.f32.mrf.mxu0
        %691 = vmatprep.mubr.f32.mxu0 0.0
        %692 = vmatmul.mubr.f32.gmra.mxu0 %v555
        %v693 = vpop.f32.mrf.mxu0
        %v694 = vadd.f32 %v581, %v693
        %v695 = vpop.f32.mrf.mxu0
        %696 = vmatprep.mubr.f32.mxu0 0.0
        %697 = vmatmul.mubr.f32.gmra.mxu0 %v556
        %v698 = vpop.f32.mrf.mxu0
        %v699 = vadd.f32 %v581, %v698
        %v700 = vpop.f32.mrf.mxu0
        %701 = vmatprep.mubr.f32.mxu0 0.0
        %702 = vmatmul.mubr.f32.gmra.mxu0 %v557
        %v703 = vpop.f32.mrf.mxu0
        %v704 = vadd.f32 %v581, %v703
        %v705 = vpop.f32.mrf.mxu0
        %706 = vmatprep.mubr.f32.mxu0 0.0
        %707 = vmatmul.mubr.f32.gmra.mxu0 %v558
        %v708 = vpop.f32.mrf.mxu0
        %v709 = vadd.f32 %v581, %v708
        %v710 = vpop.f32.mrf.mxu0
        %711 = vmatprep.mubr.f32.mxu0 0.0
        %712 = vmatmul.mubr.f32.gmra.mxu0 %v559
        %v713 = vpop.f32.mrf.mxu0
        %v714 = vadd.f32 %v581, %v713
        %v715 = vpop.f32.mrf.mxu0
        %716 = vmatprep.mubr.f32.mxu0 0.0
        %717 = vmatmul.mubr.f32.gmra.mxu0 %v560
        %v718 = vpop.f32.mrf.mxu0
        %v719 = vadd.f32 %v581, %v718
        %v720 = vpop.f32.mrf.mxu0
        %721 = vmatprep.mubr.f32.mxu0 0.0
        %722 = vmatmul.mubr.f32.gmra.mxu0 %v561
        %v723 = vpop.f32.mrf.mxu0
        %v724 = vadd.f32 %v581, %v723
        %v725 = vpop.f32.mrf.mxu0
        %726 = vdwg.mxu0
        %vm727 = vcmp.gt.f32.partialorder %v649, 0.0
        %vm728 = vcmp.gt.f32.partialorder %v654, 0.0
        %vm729 = vcmp.gt.f32.partialorder %v659, 0.0
        %vm730 = vcmp.gt.f32.partialorder %v664, 0.0
        %vm731 = vcmp.gt.f32.partialorder %v669, 0.0
        %vm732 = vcmp.gt.f32.partialorder %v674, 0.0
        %vm733 = vcmp.gt.f32.partialorder %v679, 0.0
        %vm734 = vcmp.gt.f32.partialorder %v684, 0.0
        %vm735 = vcmp.gt.f32.partialorder %v689, 0.0
        %vm736 = vcmp.gt.f32.partialorder %v694, 0.0
        %vm737 = vcmp.gt.f32.partialorder %v699, 0.0
        %vm738 = vcmp.gt.f32.partialorder %v704, 0.0
        %vm739 = vcmp.gt.f32.partialorder %v709, 0.0
        %vm740 = vcmp.gt.f32.partialorder %v714, 0.0
        %vm741 = vcmp.gt.f32.partialorder %v719, 0.0
        %vm742 = vcmp.gt.f32.partialorder %v724, 0.0
        %v743 = vstv %s391
        %v744 = vmul.f32 %v743, %v649
        %v745 = vmul.f32 %v743, %v654
        %v746 = vmul.f32 %v743, %v659
        %v747 = vmul.f32 %v743, %v664
        %v748 = vmul.f32 %v743, %v669
        %v749 = vmul.f32 %v743, %v674
        %v750 = vmul.f32 %v743, %v679
        %v751 = vmul.f32 %v743, %v684
        %v752 = vmul.f32 %v743, %v689
        %v753 = vmul.f32 %v743, %v694
        %v754 = vmul.f32 %v743, %v699
        %v755 = vmul.f32 %v743, %v704
        %v756 = vmul.f32 %v743, %v709
        %v757 = vmul.f32 %v743, %v714
        %v758 = vmul.f32 %v743, %v719
        %v759 = vmul.f32 %v743, %v724
        %v760 = vsel %vm727, %v649, %v744
        %v761 = vsel %vm728, %v654, %v745
        %v762 = vsel %vm729, %v659, %v746
        %v763 = vsel %vm730, %v664, %v747
        %v764 = vsel %vm731, %v669, %v748
        %v765 = vsel %vm732, %v674, %v749
        %v766 = vsel %vm733, %v679, %v750
        %v767 = vsel %vm734, %v684, %v751
        %v768 = vsel %vm735, %v689, %v752
        %v769 = vsel %vm736, %v694, %v753
        %v770 = vsel %vm737, %v699, %v754
        %v771 = vsel %vm738, %v704, %v755
        %v772 = vsel %vm739, %v709, %v756
        %v773 = vsel %vm740, %v714, %v757
        %v774 = vsel %vm741, %v719, %v758
        %v775 = vsel %vm742, %v724, %v759
        %v776 = vlaneseq
        %v777 = vshrl.u32 %v776, 7
        %v778 = vsub.s32 1, %v777
        %v779 = vrot.slane %v362, %v778
        %v780 = vmul.f32 %v396, %v779
        %v781 = vmul.f32 %v401, %v779
        %v782 = vmul.f32 %v406, %v779
        %v783 = vmul.f32 %v411, %v779
        %v784 = vmul.f32 %v416, %v779
        %v785 = vmul.f32 %v421, %v779
        %v786 = vmul.f32 %v426, %v779
        %v787 = vmul.f32 %v431, %v779
        %v788 = vmul.f32 %v436, %v779
        %v789 = vmul.f32 %v441, %v779
        %v790 = vmul.f32 %v446, %v779
        %v791 = vmul.f32 %v451, %v779
        %v792 = vmul.f32 %v456, %v779
        %v793 = vmul.f32 %v461, %v779
        %v794 = vmul.f32 %v466, %v779
        %v795 = vmul.f32 %v471, %v779
        %v796 = vlaneseq
        %v797 = vshrl.u32 %v796, 7
        %v798 = vsub.s32 2, %v797
        %v799 = vrot.slane %v363, %v798
        %v800 = vadd.f32 %v780, %v799
        %v801 = vadd.f32 %v781, %v799
        %v802 = vadd.f32 %v782, %v799
        %v803 = vadd.f32 %v783, %v799
        %v804 = vadd.f32 %v784, %v799
        %v805 = vadd.f32 %v785, %v799
        %v806 = vadd.f32 %v786, %v799
        %v807 = vadd.f32 %v787, %v799
        %v808 = vadd.f32 %v788, %v799
        %v809 = vadd.f32 %v789, %v799
        %v810 = vadd.f32 %v790, %v799
        %v811 = vadd.f32 %v791, %v799
        %v812 = vadd.f32 %v792, %v799
        %v813 = vadd.f32 %v793, %v799
        %v814 = vadd.f32 %v794, %v799
        %v815 = vadd.f32 %v795, %v799
        %v816 = vadd.f32 %v760, %v800
        %v817 = vadd.f32 %v761, %v801
        %v818 = vadd.f32 %v762, %v802
        %v819 = vadd.f32 %v763, %v803
        %v820 = vadd.f32 %v764, %v804
        %v821 = vadd.f32 %v765, %v805
        %v822 = vadd.f32 %v766, %v806
        %v823 = vadd.f32 %v767, %v807
        %v824 = vadd.f32 %v768, %v808
        %v825 = vadd.f32 %v769, %v809
        %v826 = vadd.f32 %v770, %v810
        %v827 = vadd.f32 %v771, %v811
        %v828 = vadd.f32 %v772, %v812
        %v829 = vadd.f32 %v773, %v813
        %v830 = vadd.f32 %v774, %v814
        %v831 = vadd.f32 %v775, %v815
        %vm832 = vcmp.gt.f32.partialorder %v816, 0.0
        %vm833 = vcmp.gt.f32.partialorder %v817, 0.0
        %vm834 = vcmp.gt.f32.partialorder %v818, 0.0
        %vm835 = vcmp.gt.f32.partialorder %v819, 0.0
        %vm836 = vcmp.gt.f32.partialorder %v820, 0.0
        %vm837 = vcmp.gt.f32.partialorder %v821, 0.0
        %vm838 = vcmp.gt.f32.partialorder %v822, 0.0
        %vm839 = vcmp.gt.f32.partialorder %v823, 0.0
        %vm840 = vcmp.gt.f32.partialorder %v824, 0.0
        %vm841 = vcmp.gt.f32.partialorder %v825, 0.0
        %vm842 = vcmp.gt.f32.partialorder %v826, 0.0
        %vm843 = vcmp.gt.f32.partialorder %v827, 0.0
        %vm844 = vcmp.gt.f32.partialorder %v828, 0.0
        %vm845 = vcmp.gt.f32.partialorder %v829, 0.0
        %vm846 = vcmp.gt.f32.partialorder %v830, 0.0
        %vm847 = vcmp.gt.f32.partialorder %v831, 0.0
        %v848 = vstv %s392
        %v849 = vmul.f32 %v848, %v816
        %v850 = vmul.f32 %v848, %v817
        %v851 = vmul.f32 %v848, %v818
        %v852 = vmul.f32 %v848, %v819
        %v853 = vmul.f32 %v848, %v820
        %v854 = vmul.f32 %v848, %v821
        %v855 = vmul.f32 %v848, %v822
        %v856 = vmul.f32 %v848, %v823
        %v857 = vmul.f32 %v848, %v824
        %v858 = vmul.f32 %v848, %v825
        %v859 = vmul.f32 %v848, %v826
        %v860 = vmul.f32 %v848, %v827
        %v861 = vmul.f32 %v848, %v828
        %v862 = vmul.f32 %v848, %v829
        %v863 = vmul.f32 %v848, %v830
        %v864 = vmul.f32 %v848, %v831
        %v865 = vsel %vm832, %v816, %v849
        %v866 = vsel %vm833, %v817, %v850
        %v867 = vsel %vm834, %v818, %v851
        %v868 = vsel %vm835, %v819, %v852
        %v869 = vsel %vm836, %v820, %v853
        %v870 = vsel %vm837, %v821, %v854
        %v871 = vsel %vm838, %v822, %v855
        %v872 = vsel %vm839, %v823, %v856
        %v873 = vsel %vm840, %v824, %v857
        %v874 = vsel %vm841, %v825, %v858
        %v875 = vsel %vm842, %v826, %v859
        %v876 = vsel %vm843, %v827, %v860
        %v877 = vsel %vm844, %v828, %v861
        %v878 = vsel %vm845, %v829, %v862
        %v879 = vsel %vm846, %v830, %v863
        %v880 = vsel %vm847, %v831, %v864
        %s881 = sld [smem:[#allocation2 + $0x3]]
        %s882 = sld [smem:[#allocation2 + $0x4]]
        %s883 = sld [smem:[#allocation2 + $0x5]]
        %vm884 = vcmp.ge.s32.totalorder %v382, 1
        %vm885 = vcmp.ge.s32.totalorder %v383, 1
        %vm886 = vcmp.ge.s32.totalorder %v384, 1
        %vm887 = vcmp.ge.s32.totalorder %v385, 1
        %vm888 = vcmp.ge.s32.totalorder %v386, 1
        %vm889 = vcmp.ge.s32.totalorder %v387, 1
        %vm890 = vcmp.ge.s32.totalorder %v388, 1
        %vm891 = vcmp.ge.s32.totalorder %v389, 1
        %v892 = vrot.slane %v865, 7
        %v893 = vrot.slane %v866, 7
        %v894 = vrot.slane %v867, 7
        %v895 = vrot.slane %v868, 7
        %v896 = vrot.slane %v869, 7
        %v897 = vrot.slane %v870, 7
        %v898 = vrot.slane %v871, 7
        %v899 = vrot.slane %v872, 7
        %v900 = vrot.slane %v873, 7
        %v901 = vrot.slane %v874, 7
        %v902 = vrot.slane %v875, 7
        %v903 = vrot.slane %v876, 7
        %v904 = vrot.slane %v877, 7
        %v905 = vrot.slane %v878, 7
        %v906 = vrot.slane %v879, 7
        %v907 = vrot.slane %v880, 7
        %vm908 = vcmp.lt.s32.totalorder %v382, 1
        %v909 = vsel %vm908, %v906, %v907
        %v910 = vsel %vm908, %v905, %v906
        %v911 = vsel %vm908, %v904, %v905
        %v912 = vsel %vm908, %v903, %v904
        %v913 = vsel %vm908, %v902, %v903
        %v914 = vsel %vm908, %v901, %v902
        %v915 = vsel %vm908, %v900, %v901
        %v916 = vsel %vm908, %v899, %v900
        %v917 = vsel %vm908, %v898, %v899
        %v918 = vsel %vm908, %v897, %v898
        %v919 = vsel %vm908, %v896, %v897
        %v920 = vsel %vm908, %v895, %v896
        %v921 = vsel %vm908, %v894, %v895
        %v922 = vsel %vm908, %v893, %v894
        %v923 = vsel %vm908, %v892, %v893
        %v924 = vsel %vm908, %v907, %v892
        %v925 = vsel %vm884, %v924, 0.0
        %v926 = vsel %vm885, %v923, 0.0
        %v927 = vsel %vm886, %v922, 0.0
        %v928 = vsel %vm887, %v921, 0.0
        %v929 = vsel %vm888, %v920, 0.0
        %v930 = vsel %vm889, %v919, 0.0
        %v931 = vsel %vm890, %v918, 0.0
        %v932 = vsel %vm891, %v917, 0.0
        %v933 = vsel %vm884, %v916, 0.0
        %v934 = vsel %vm885, %v915, 0.0
        %v935 = vsel %vm886, %v914, 0.0
        %v936 = vsel %vm887, %v913, 0.0
        %v937 = vsel %vm888, %v912, 0.0
        %v938 = vsel %vm889, %v911, 0.0
        %v939 = vsel %vm890, %v910, 0.0
        %v940 = vsel %vm891, %v909, 0.0
        %v941 = vld [vmem:[#allocation5] sm:$0xff]
        %v942 = vld [vmem:[#allocation5 + $0x8] sm:$0xff]
        %v943 = vld [vmem:[#allocation5 + $0x10] sm:$0xff]
        %v944 = vld [vmem:[#allocation5 + $0x18] sm:$0xff]
        %v945 = vld [vmem:[#allocation5 + $0x20] sm:$0xff]
        %v946 = vld [vmem:[#allocation5 + $0x28] sm:$0xff]
        %v947 = vld [vmem:[#allocation5 + $0x30] sm:$0xff]
        %v948 = vld [vmem:[#allocation5 + $0x38] sm:$0xff]
        %v949 = vld [vmem:[#allocation5 + $0x40] sm:$0xff]
        %v950 = vld [vmem:[#allocation5 + $0x48] sm:$0xff]
        %v951 = vld [vmem:[#allocation5 + $0x50] sm:$0xff]
        %v952 = vld [vmem:[#allocation5 + $0x58] sm:$0xff]
        %v953 = vld [vmem:[#allocation5 + $0x60] sm:$0xff]
        %v954 = vld [vmem:[#allocation5 + $0x68] sm:$0xff]
        %v955 = vld [vmem:[#allocation5 + $0x70] sm:$0xff]
        %v956 = vld [vmem:[#allocation5 + $0x78] sm:$0xff]
        %v957 = vld [vmem:[#allocation5 + $0x80] sm:$0xff]
        %v958 = vld [vmem:[#allocation5 + $0x88] sm:$0xff]
        %v959 = vld [vmem:[#allocation5 + $0x90] sm:$0xff]
        %v960 = vld [vmem:[#allocation5 + $0x98] sm:$0xff]
        %v961 = vld [vmem:[#allocation5 + $0xa0] sm:$0xff]
        %v962 = vld [vmem:[#allocation5 + $0xa8] sm:$0xff]
        %v963 = vld [vmem:[#allocation5 + $0xb0] sm:$0xff]
        %v964 = vld [vmem:[#allocation5 + $0xb8] sm:$0xff]
        %v965 = vld [vmem:[#allocation5 + $0xc0] sm:$0xff]
        %v966 = vld [vmem:[#allocation5 + $0xc8] sm:$0xff]
        %v967 = vld [vmem:[#allocation5 + $0xd0] sm:$0xff]
        %v968 = vld [vmem:[#allocation5 + $0xd8] sm:$0xff]
        %v969 = vld [vmem:[#allocation5 + $0xe0] sm:$0xff]
        %v970 = vld [vmem:[#allocation5 + $0xe8] sm:$0xff]
        %v971 = vld [vmem:[#allocation5 + $0xf0] sm:$0xff]
        %v972 = vld [vmem:[#allocation5 + $0xf8] sm:$0xff]
        %v973 = vlaneseq
        %v974 = vshrl.u32 %v973, 7
        %v975 = vsub.s32 3, %v974
        %v976 = vrot.slane %v363, %v975
        %977 = vmatprep.subr.mxu0 0.0
        %978 = vmatpush1.msra.mxu0 %v956
        %979 = vmatprep.subr.mxu0 0.0
        %980 = vmatpush1.msra.mxu0 %v955
        %981 = vmatprep.subr.mxu0 0.0
        %982 = vmatpush1.msra.mxu0 %v954
        %983 = vmatprep.subr.mxu0 0.0
        %984 = vmatpush1.msra.mxu0 %v953
        %985 = vmatprep.subr.mxu0 0.0
        %986 = vmatpush1.msra.mxu0 %v952
        %987 = vmatprep.subr.mxu0 0.0
        %988 = vmatpush1.msra.mxu0 %v951
        %989 = vmatprep.subr.mxu0 0.0
        %990 = vmatpush1.msra.mxu0 %v950
        %991 = vmatprep.subr.mxu0 0.0
        %992 = vmatpush1.msra.mxu0 %v949
        %993 = vmatprep.subr.mxu0 0.0
        %994 = vmatpush1.msra.mxu0 %v948
        %995 = vmatprep.subr.mxu0 0.0
        %996 = vmatpush1.msra.mxu0 %v947
        %997 = vmatprep.subr.mxu0 0.0
        %998 = vmatpush1.msra.mxu0 %v946
        %999 = vmatprep.subr.mxu0 0.0
        %1000 = vmatpush1.msra.mxu0 %v945
        %1001 = vmatprep.subr.mxu0 0.0
        %1002 = vmatpush1.msra.mxu0 %v944
        %1003 = vmatprep.subr.mxu0 0.0
        %1004 = vmatpush1.msra.mxu0 %v943
        %1005 = vmatprep.subr.mxu0 0.0
        %1006 = vmatpush1.msra.mxu0 %v942
        %1007 = vmatprep.subr.mxu0 0.0
        %1008 = vmatpush1.msra.mxu0 %v941
        %1009 = vmatprep.subr.mxu0 0.0
        %1010 = vmatpush2.msra.mxu0 %v972
        %1011 = vmatprep.subr.mxu0 0.0
        %1012 = vmatpush2.msra.mxu0 %v971
        %1013 = vmatprep.subr.mxu0 0.0
        %1014 = vmatpush2.msra.mxu0 %v970
        %1015 = vmatprep.subr.mxu0 0.0
        %1016 = vmatpush2.msra.mxu0 %v969
        %1017 = vmatprep.subr.mxu0 0.0
        %1018 = vmatpush2.msra.mxu0 %v968
        %1019 = vmatprep.subr.mxu0 0.0
        %1020 = vmatpush2.msra.mxu0 %v967
        %1021 = vmatprep.subr.mxu0 0.0
        %1022 = vmatpush2.msra.mxu0 %v966
        %1023 = vmatprep.subr.mxu0 0.0
        %1024 = vmatpush2.msra.mxu0 %v965
        %1025 = vmatprep.subr.mxu0 0.0
        %1026 = vmatpush2.msra.mxu0 %v964
        %1027 = vmatprep.subr.mxu0 0.0
        %1028 = vmatpush2.msra.mxu0 %v963
        %1029 = vmatprep.subr.mxu0 0.0
        %1030 = vmatpush2.msra.mxu0 %v962
        %1031 = vmatprep.subr.mxu0 0.0
        %1032 = vmatpush2.msra.mxu0 %v961
        %1033 = vmatprep.subr.mxu0 0.0
        %1034 = vmatpush2.msra.mxu0 %v960
        %1035 = vmatprep.subr.mxu0 0.0
        %1036 = vmatpush2.msra.mxu0 %v959
        %1037 = vmatprep.subr.mxu0 0.0
        %1038 = vmatpush2.msra.mxu0 %v958
        %1039 = vmatprep.subr.mxu0 0.0
        %1040 = vmatpush2.msra.mxu0 %v957
        %1041 = vmatprep.mubr.f32.mxu0 %v865
        %1042 = vmatmul.mubr.f32.gmra.mxu0 %v925
        %v1043 = vpop.f32.mrf.mxu0
        %v1044 = vadd.f32 %v976, %v1043
        %v1045 = vpop.f32.mrf.mxu0
        %1046 = vmatprep.mubr.f32.mxu0 %v866
        %1047 = vmatmul.mubr.f32.gmra.mxu0 %v926
        %v1048 = vpop.f32.mrf.mxu0
        %v1049 = vadd.f32 %v976, %v1048
        %v1050 = vpop.f32.mrf.mxu0
        %1051 = vmatprep.mubr.f32.mxu0 %v867
        %1052 = vmatmul.mubr.f32.gmra.mxu0 %v927
        %v1053 = vpop.f32.mrf.mxu0
        %v1054 = vadd.f32 %v976, %v1053
        %v1055 = vpop.f32.mrf.mxu0
        %1056 = vmatprep.mubr.f32.mxu0 %v868
        %1057 = vmatmul.mubr.f32.gmra.mxu0 %v928
        %v1058 = vpop.f32.mrf.mxu0
        %v1059 = vadd.f32 %v976, %v1058
        %v1060 = vpop.f32.mrf.mxu0
        %1061 = vmatprep.mubr.f32.mxu0 %v869
        %1062 = vmatmul.mubr.f32.gmra.mxu0 %v929
        %v1063 = vpop.f32.mrf.mxu0
        %v1064 = vadd.f32 %v976, %v1063
        %v1065 = vpop.f32.mrf.mxu0
        %1066 = vmatprep.mubr.f32.mxu0 %v870
        %1067 = vmatmul.mubr.f32.gmra.mxu0 %v930
        %v1068 = vpop.f32.mrf.mxu0
        %v1069 = vadd.f32 %v976, %v1068
        %v1070 = vpop.f32.mrf.mxu0
        %1071 = vmatprep.mubr.f32.mxu0 %v871
        %1072 = vmatmul.mubr.f32.gmra.mxu0 %v931
        %v1073 = vpop.f32.mrf.mxu0
        %v1074 = vadd.f32 %v976, %v1073
        %v1075 = vpop.f32.mrf.mxu0
        %1076 = vmatprep.mubr.f32.mxu0 %v872
        %1077 = vmatmul.mubr.f32.gmra.mxu0 %v932
        %v1078 = vpop.f32.mrf.mxu0
        %v1079 = vadd.f32 %v976, %v1078
        %v1080 = vpop.f32.mrf.mxu0
        %1081 = vmatprep.mubr.f32.mxu0 %v873
        %1082 = vmatmul.mubr.f32.gmra.mxu0 %v933
        %v1083 = vpop.f32.mrf.mxu0
        %v1084 = vadd.f32 %v976, %v1083
        %v1085 = vpop.f32.mrf.mxu0
        %1086 = vmatprep.mubr.f32.mxu0 %v874
        %1087 = vmatmul.mubr.f32.gmra.mxu0 %v934
        %v1088 = vpop.f32.mrf.mxu0
        %v1089 = vadd.f32 %v976, %v1088
        %v1090 = vpop.f32.mrf.mxu0
        %1091 = vmatprep.mubr.f32.mxu0 %v875
        %1092 = vmatmul.mubr.f32.gmra.mxu0 %v935
        %v1093 = vpop.f32.mrf.mxu0
        %v1094 = vadd.f32 %v976, %v1093
        %v1095 = vpop.f32.mrf.mxu0
        %1096 = vmatprep.mubr.f32.mxu0 %v876
        %1097 = vmatmul.mubr.f32.gmra.mxu0 %v936
        %v1098 = vpop.f32.mrf.mxu0
        %v1099 = vadd.f32 %v976, %v1098
        %v1100 = vpop.f32.mrf.mxu0
        %1101 = vmatprep.mubr.f32.mxu0 %v877
        %1102 = vmatmul.mubr.f32.gmra.mxu0 %v937
        %v1103 = vpop.f32.mrf.mxu0
        %v1104 = vadd.f32 %v976, %v1103
        %v1105 = vpop.f32.mrf.mxu0
        %1106 = vmatprep.mubr.f32.mxu0 %v878
        %1107 = vmatmul.mubr.f32.gmra.mxu0 %v938
        %v1108 = vpop.f32.mrf.mxu0
        %v1109 = vadd.f32 %v976, %v1108
        %v1110 = vpop.f32.mrf.mxu0
        %1111 = vmatprep.mubr.f32.mxu0 %v879
        %1112 = vmatmul.mubr.f32.gmra.mxu0 %v939
        %v1113 = vpop.f32.mrf.mxu0
        %v1114 = vadd.f32 %v976, %v1113
        %v1115 = vpop.f32.mrf.mxu0
        %1116 = vmatprep.mubr.f32.mxu0 %v880
        %1117 = vmatmul.mubr.f32.gmra.mxu0 %v940
        %v1118 = vpop.f32.mrf.mxu0
        %v1119 = vadd.f32 %v976, %v1118
        %v1120 = vpop.f32.mrf.mxu0
        %1121 = vdwg.mxu0
        %vm1122 = vcmp.gt.f32.partialorder %v1044, 0.0
        %vm1123 = vcmp.gt.f32.partialorder %v1049, 0.0
        %vm1124 = vcmp.gt.f32.partialorder %v1054, 0.0
        %vm1125 = vcmp.gt.f32.partialorder %v1059, 0.0
        %vm1126 = vcmp.gt.f32.partialorder %v1064, 0.0
        %vm1127 = vcmp.gt.f32.partialorder %v1069, 0.0
        %vm1128 = vcmp.gt.f32.partialorder %v1074, 0.0
        %vm1129 = vcmp.gt.f32.partialorder %v1079, 0.0
        %vm1130 = vcmp.gt.f32.partialorder %v1084, 0.0
        %vm1131 = vcmp.gt.f32.partialorder %v1089, 0.0
        %vm1132 = vcmp.gt.f32.partialorder %v1094, 0.0
        %vm1133 = vcmp.gt.f32.partialorder %v1099, 0.0
        %vm1134 = vcmp.gt.f32.partialorder %v1104, 0.0
        %vm1135 = vcmp.gt.f32.partialorder %v1109, 0.0
        %vm1136 = vcmp.gt.f32.partialorder %v1114, 0.0
        %vm1137 = vcmp.gt.f32.partialorder %v1119, 0.0
        %v1138 = vstv %s881
        %v1139 = vmul.f32 %v1138, %v1044
        %v1140 = vmul.f32 %v1138, %v1049
        %v1141 = vmul.f32 %v1138, %v1054
        %v1142 = vmul.f32 %v1138, %v1059
        %v1143 = vmul.f32 %v1138, %v1064
        %v1144 = vmul.f32 %v1138, %v1069
        %v1145 = vmul.f32 %v1138, %v1074
        %v1146 = vmul.f32 %v1138, %v1079
        %v1147 = vmul.f32 %v1138, %v1084
        %v1148 = vmul.f32 %v1138, %v1089
        %v1149 = vmul.f32 %v1138, %v1094
        %v1150 = vmul.f32 %v1138, %v1099
        %v1151 = vmul.f32 %v1138, %v1104
        %v1152 = vmul.f32 %v1138, %v1109
        %v1153 = vmul.f32 %v1138, %v1114
        %v1154 = vmul.f32 %v1138, %v1119
        %v1155 = vsel %vm1122, %v1044, %v1139
        %v1156 = vsel %vm1123, %v1049, %v1140
        %v1157 = vsel %vm1124, %v1054, %v1141
        %v1158 = vsel %vm1125, %v1059, %v1142
        %v1159 = vsel %vm1126, %v1064, %v1143
        %v1160 = vsel %vm1127, %v1069, %v1144
        %v1161 = vsel %vm1128, %v1074, %v1145
        %v1162 = vsel %vm1129, %v1079, %v1146
        %v1163 = vsel %vm1130, %v1084, %v1147
        %v1164 = vsel %vm1131, %v1089, %v1148
        %v1165 = vsel %vm1132, %v1094, %v1149
        %v1166 = vsel %vm1133, %v1099, %v1150
        %v1167 = vsel %vm1134, %v1104, %v1151
        %v1168 = vsel %vm1135, %v1109, %v1152
        %v1169 = vsel %vm1136, %v1114, %v1153
        %v1170 = vsel %vm1137, %v1119, %v1154
        %v1171 = vrot.slane %v1155, 7
        %v1172 = vrot.slane %v1156, 7
        %v1173 = vrot.slane %v1157, 7
        %v1174 = vrot.slane %v1158, 7
        %v1175 = vrot.slane %v1159, 7
        %v1176 = vrot.slane %v1160, 7
        %v1177 = vrot.slane %v1161, 7
        %v1178 = vrot.slane %v1162, 7
        %v1179 = vrot.slane %v1163, 7
        %v1180 = vrot.slane %v1164, 7
        %v1181 = vrot.slane %v1165, 7
        %v1182 = vrot.slane %v1166, 7
        %v1183 = vrot.slane %v1167, 7
        %v1184 = vrot.slane %v1168, 7
        %v1185 = vrot.slane %v1169, 7
        %v1186 = vrot.slane %v1170, 7
        %v1187 = vsel %vm908, %v1185, %v1186
        %v1188 = vsel %vm908, %v1184, %v1185
        %v1189 = vsel %vm908, %v1183, %v1184
        %v1190 = vsel %vm908, %v1182, %v1183
        %v1191 = vsel %vm908, %v1181, %v1182
        %v1192 = vsel %vm908, %v1180, %v1181
        %v1193 = vsel %vm908, %v1179, %v1180
        %v1194 = vsel %vm908, %v1178, %v1179
        %v1195 = vsel %vm908, %v1177, %v1178
        %v1196 = vsel %vm908, %v1176, %v1177
        %v1197 = vsel %vm908, %v1175, %v1176
        %v1198 = vsel %vm908, %v1174, %v1175
        %v1199 = vsel %vm908, %v1173, %v1174
        %v1200 = vsel %vm908, %v1172, %v1173
        %v1201 = vsel %vm908, %v1171, %v1172
        %v1202 = vsel %vm908, %v1186, %v1171
        %v1203 = vsel %vm884, %v1202, 0.0
        %v1204 = vsel %vm885, %v1201, 0.0
        %v1205 = vsel %vm886, %v1200, 0.0
        %v1206 = vsel %vm887, %v1199, 0.0
        %v1207 = vsel %vm888, %v1198, 0.0
        %v1208 = vsel %vm889, %v1197, 0.0
        %v1209 = vsel %vm890, %v1196, 0.0
        %v1210 = vsel %vm891, %v1195, 0.0
        %v1211 = vsel %vm884, %v1194, 0.0
        %v1212 = vsel %vm885, %v1193, 0.0
        %v1213 = vsel %vm886, %v1192, 0.0
        %v1214 = vsel %vm887, %v1191, 0.0
        %v1215 = vsel %vm888, %v1190, 0.0
        %v1216 = vsel %vm889, %v1189, 0.0
        %v1217 = vsel %vm890, %v1188, 0.0
        %v1218 = vsel %vm891, %v1187, 0.0
        %s1219 = scalar_lea.vmem [#allocation5], 256
        %v1220 = vld [vmem:[%s1219] sm:$0xff]
        %v1221 = vld [vmem:[%s1219 + $0x8] sm:$0xff]
        %v1222 = vld [vmem:[%s1219 + $0x10] sm:$0xff]
        %v1223 = vld [vmem:[%s1219 + $0x18] sm:$0xff]
        %v1224 = vld [vmem:[%s1219 + $0x20] sm:$0xff]
        %v1225 = vld [vmem:[%s1219 + $0x28] sm:$0xff]
        %v1226 = vld [vmem:[%s1219 + $0x30] sm:$0xff]
        %v1227 = vld [vmem:[%s1219 + $0x38] sm:$0xff]
        %v1228 = vld [vmem:[%s1219 + $0x40] sm:$0xff]
        %v1229 = vld [vmem:[%s1219 + $0x48] sm:$0xff]
        %v1230 = vld [vmem:[%s1219 + $0x50] sm:$0xff]
        %v1231 = vld [vmem:[%s1219 + $0x58] sm:$0xff]
        %v1232 = vld [vmem:[%s1219 + $0x60] sm:$0xff]
        %v1233 = vld [vmem:[%s1219 + $0x68] sm:$0xff]
        %v1234 = vld [vmem:[%s1219 + $0x70] sm:$0xff]
        %v1235 = vld [vmem:[%s1219 + $0x78] sm:$0xff]
        %v1236 = vld [vmem:[%s1219 + $0x80] sm:$0xff]
        %v1237 = vld [vmem:[%s1219 + $0x88] sm:$0xff]
        %v1238 = vld [vmem:[%s1219 + $0x90] sm:$0xff]
        %v1239 = vld [vmem:[%s1219 + $0x98] sm:$0xff]
        %v1240 = vld [vmem:[%s1219 + $0xa0] sm:$0xff]
        %v1241 = vld [vmem:[%s1219 + $0xa8] sm:$0xff]
        %v1242 = vld [vmem:[%s1219 + $0xb0] sm:$0xff]
        %v1243 = vld [vmem:[%s1219 + $0xb8] sm:$0xff]
        %v1244 = vld [vmem:[%s1219 + $0xc0] sm:$0xff]
        %v1245 = vld [vmem:[%s1219 + $0xc8] sm:$0xff]
        %v1246 = vld [vmem:[%s1219 + $0xd0] sm:$0xff]
        %v1247 = vld [vmem:[%s1219 + $0xd8] sm:$0xff]
        %v1248 = vld [vmem:[%s1219 + $0xe0] sm:$0xff]
        %v1249 = vld [vmem:[%s1219 + $0xe8] sm:$0xff]
        %v1250 = vld [vmem:[%s1219 + $0xf0] sm:$0xff]
        %v1251 = vld [vmem:[%s1219 + $0xf8] sm:$0xff]
        %v1252 = vlaneseq
        %v1253 = vshrl.u32 %v1252, 7
        %v1254 = vsub.s32 4, %v1253
        %v1255 = vrot.slane %v363, %v1254
        %1256 = vmatprep.subr.mxu0 0.0
        %1257 = vmatpush1.msra.mxu0 %v1235
        %1258 = vmatprep.subr.mxu0 0.0
        %1259 = vmatpush1.msra.mxu0 %v1234
        %1260 = vmatprep.subr.mxu0 0.0
        %1261 = vmatpush1.msra.mxu0 %v1233
        %1262 = vmatprep.subr.mxu0 0.0
        %1263 = vmatpush1.msra.mxu0 %v1232
        %1264 = vmatprep.subr.mxu0 0.0
        %1265 = vmatpush1.msra.mxu0 %v1231
        %1266 = vmatprep.subr.mxu0 0.0
        %1267 = vmatpush1.msra.mxu0 %v1230
        %1268 = vmatprep.subr.mxu0 0.0
        %1269 = vmatpush1.msra.mxu0 %v1229
        %1270 = vmatprep.subr.mxu0 0.0
        %1271 = vmatpush1.msra.mxu0 %v1228
        %1272 = vmatprep.subr.mxu0 0.0
        %1273 = vmatpush1.msra.mxu0 %v1227
        %1274 = vmatprep.subr.mxu0 0.0
        %1275 = vmatpush1.msra.mxu0 %v1226
        %1276 = vmatprep.subr.mxu0 0.0
        %1277 = vmatpush1.msra.mxu0 %v1225
        %1278 = vmatprep.subr.mxu0 0.0
        %1279 = vmatpush1.msra.mxu0 %v1224
        %1280 = vmatprep.subr.mxu0 0.0
        %1281 = vmatpush1.msra.mxu0 %v1223
        %1282 = vmatprep.subr.mxu0 0.0
        %1283 = vmatpush1.msra.mxu0 %v1222
        %1284 = vmatprep.subr.mxu0 0.0
        %1285 = vmatpush1.msra.mxu0 %v1221
        %1286 = vmatprep.subr.mxu0 0.0
        %1287 = vmatpush1.msra.mxu0 %v1220
        %1288 = vmatprep.subr.mxu0 0.0
        %1289 = vmatpush2.msra.mxu0 %v1251
        %1290 = vmatprep.subr.mxu0 0.0
        %1291 = vmatpush2.msra.mxu0 %v1250
        %1292 = vmatprep.subr.mxu0 0.0
        %1293 = vmatpush2.msra.mxu0 %v1249
        %1294 = vmatprep.subr.mxu0 0.0
        %1295 = vmatpush2.msra.mxu0 %v1248
        %1296 = vmatprep.subr.mxu0 0.0
        %1297 = vmatpush2.msra.mxu0 %v1247
        %1298 = vmatprep.subr.mxu0 0.0
        %1299 = vmatpush2.msra.mxu0 %v1246
        %1300 = vmatprep.subr.mxu0 0.0
        %1301 = vmatpush2.msra.mxu0 %v1245
        %1302 = vmatprep.subr.mxu0 0.0
        %1303 = vmatpush2.msra.mxu0 %v1244
        %1304 = vmatprep.subr.mxu0 0.0
        %1305 = vmatpush2.msra.mxu0 %v1243
        %1306 = vmatprep.subr.mxu0 0.0
        %1307 = vmatpush2.msra.mxu0 %v1242
        %1308 = vmatprep.subr.mxu0 0.0
        %1309 = vmatpush2.msra.mxu0 %v1241
        %1310 = vmatprep.subr.mxu0 0.0
        %1311 = vmatpush2.msra.mxu0 %v1240
        %1312 = vmatprep.subr.mxu0 0.0
        %1313 = vmatpush2.msra.mxu0 %v1239
        %1314 = vmatprep.subr.mxu0 0.0
        %1315 = vmatpush2.msra.mxu0 %v1238
        %1316 = vmatprep.subr.mxu0 0.0
        %1317 = vmatpush2.msra.mxu0 %v1237
        %1318 = vmatprep.subr.mxu0 0.0
        %1319 = vmatpush2.msra.mxu0 %v1236
        %1320 = vmatprep.mubr.f32.mxu0 %v1155
        %1321 = vmatmul.mubr.f32.gmra.mxu0 %v1203
        %v1322 = vpop.f32.mrf.mxu0
        %v1323 = vadd.f32 %v1255, %v1322
        %v1324 = vpop.f32.mrf.mxu0
        %1325 = vmatprep.mubr.f32.mxu0 %v1156
        %1326 = vmatmul.mubr.f32.gmra.mxu0 %v1204
        %v1327 = vpop.f32.mrf.mxu0
        %v1328 = vadd.f32 %v1255, %v1327
        %v1329 = vpop.f32.mrf.mxu0
        %1330 = vmatprep.mubr.f32.mxu0 %v1157
        %1331 = vmatmul.mubr.f32.gmra.mxu0 %v1205
        %v1332 = vpop.f32.mrf.mxu0
        %v1333 = vadd.f32 %v1255, %v1332
        %v1334 = vpop.f32.mrf.mxu0
        %1335 = vmatprep.mubr.f32.mxu0 %v1158
        %1336 = vmatmul.mubr.f32.gmra.mxu0 %v1206
        %v1337 = vpop.f32.mrf.mxu0
        %v1338 = vadd.f32 %v1255, %v1337
        %v1339 = vpop.f32.mrf.mxu0
        %1340 = vmatprep.mubr.f32.mxu0 %v1159
        %1341 = vmatmul.mubr.f32.gmra.mxu0 %v1207
        %v1342 = vpop.f32.mrf.mxu0
        %v1343 = vadd.f32 %v1255, %v1342
        %v1344 = vpop.f32.mrf.mxu0
        %1345 = vmatprep.mubr.f32.mxu0 %v1160
        %1346 = vmatmul.mubr.f32.gmra.mxu0 %v1208
        %v1347 = vpop.f32.mrf.mxu0
        %v1348 = vadd.f32 %v1255, %v1347
        %v1349 = vpop.f32.mrf.mxu0
        %1350 = vmatprep.mubr.f32.mxu0 %v1161
        %1351 = vmatmul.mubr.f32.gmra.mxu0 %v1209
        %v1352 = vpop.f32.mrf.mxu0
        %v1353 = vadd.f32 %v1255, %v1352
        %v1354 = vpop.f32.mrf.mxu0
        %1355 = vmatprep.mubr.f32.mxu0 %v1162
        %1356 = vmatmul.mubr.f32.gmra.mxu0 %v1210
        %v1357 = vpop.f32.mrf.mxu0
        %v1358 = vadd.f32 %v1255, %v1357
        %v1359 = vpop.f32.mrf.mxu0
        %1360 = vmatprep.mubr.f32.mxu0 %v1163
        %1361 = vmatmul.mubr.f32.gmra.mxu0 %v1211
        %v1362 = vpop.f32.mrf.mxu0
        %v1363 = vadd.f32 %v1255, %v1362
        %v1364 = vpop.f32.mrf.mxu0
        %1365 = vmatprep.mubr.f32.mxu0 %v1164
        %1366 = vmatmul.mubr.f32.gmra.mxu0 %v1212
        %v1367 = vpop.f32.mrf.mxu0
        %v1368 = vadd.f32 %v1255, %v1367
        %v1369 = vpop.f32.mrf.mxu0
        %1370 = vmatprep.mubr.f32.mxu0 %v1165
        %1371 = vmatmul.mubr.f32.gmra.mxu0 %v1213
        %v1372 = vpop.f32.mrf.mxu0
        %v1373 = vadd.f32 %v1255, %v1372
        %v1374 = vpop.f32.mrf.mxu0
        %1375 = vmatprep.mubr.f32.mxu0 %v1166
        %1376 = vmatmul.mubr.f32.gmra.mxu0 %v1214
        %v1377 = vpop.f32.mrf.mxu0
        %v1378 = vadd.f32 %v1255, %v1377
        %v1379 = vpop.f32.mrf.mxu0
        %1380 = vmatprep.mubr.f32.mxu0 %v1167
        %1381 = vmatmul.mubr.f32.gmra.mxu0 %v1215
        %v1382 = vpop.f32.mrf.mxu0
        %v1383 = vadd.f32 %v1255, %v1382
        %v1384 = vpop.f32.mrf.mxu0
        %1385 = vmatprep.mubr.f32.mxu0 %v1168
        %1386 = vmatmul.mubr.f32.gmra.mxu0 %v1216
        %v1387 = vpop.f32.mrf.mxu0
        %v1388 = vadd.f32 %v1255, %v1387
        %v1389 = vpop.f32.mrf.mxu0
        %1390 = vmatprep.mubr.f32.mxu0 %v1169
        %1391 = vmatmul.mubr.f32.gmra.mxu0 %v1217
        %v1392 = vpop.f32.mrf.mxu0
        %v1393 = vadd.f32 %v1255, %v1392
        %v1394 = vpop.f32.mrf.mxu0
        %1395 = vmatprep.mubr.f32.mxu0 %v1170
        %1396 = vmatmul.mubr.f32.gmra.mxu0 %v1218
        %v1397 = vpop.f32.mrf.mxu0
        %v1398 = vadd.f32 %v1255, %v1397
        %v1399 = vpop.f32.mrf.mxu0
        %1400 = vdwg.mxu0
        %vm1401 = vcmp.gt.f32.partialorder %v1323, 0.0
        %vm1402 = vcmp.gt.f32.partialorder %v1328, 0.0
        %vm1403 = vcmp.gt.f32.partialorder %v1333, 0.0
        %vm1404 = vcmp.gt.f32.partialorder %v1338, 0.0
        %vm1405 = vcmp.gt.f32.partialorder %v1343, 0.0
        %vm1406 = vcmp.gt.f32.partialorder %v1348, 0.0
        %vm1407 = vcmp.gt.f32.partialorder %v1353, 0.0
        %vm1408 = vcmp.gt.f32.partialorder %v1358, 0.0
        %vm1409 = vcmp.gt.f32.partialorder %v1363, 0.0
        %vm1410 = vcmp.gt.f32.partialorder %v1368, 0.0
        %vm1411 = vcmp.gt.f32.partialorder %v1373, 0.0
        %vm1412 = vcmp.gt.f32.partialorder %v1378, 0.0
        %vm1413 = vcmp.gt.f32.partialorder %v1383, 0.0
        %vm1414 = vcmp.gt.f32.partialorder %v1388, 0.0
        %vm1415 = vcmp.gt.f32.partialorder %v1393, 0.0
        %vm1416 = vcmp.gt.f32.partialorder %v1398, 0.0
        %v1417 = vstv %s882
        %v1418 = vmul.f32 %v1417, %v1323
        %v1419 = vmul.f32 %v1417, %v1328
        %v1420 = vmul.f32 %v1417, %v1333
        %v1421 = vmul.f32 %v1417, %v1338
        %v1422 = vmul.f32 %v1417, %v1343
        %v1423 = vmul.f32 %v1417, %v1348
        %v1424 = vmul.f32 %v1417, %v1353
        %v1425 = vmul.f32 %v1417, %v1358
        %v1426 = vmul.f32 %v1417, %v1363
        %v1427 = vmul.f32 %v1417, %v1368
        %v1428 = vmul.f32 %v1417, %v1373
        %v1429 = vmul.f32 %v1417, %v1378
        %v1430 = vmul.f32 %v1417, %v1383
        %v1431 = vmul.f32 %v1417, %v1388
        %v1432 = vmul.f32 %v1417, %v1393
        %v1433 = vmul.f32 %v1417, %v1398
        %v1434 = vsel %vm1401, %v1323, %v1418
        %v1435 = vsel %vm1402, %v1328, %v1419
        %v1436 = vsel %vm1403, %v1333, %v1420
        %v1437 = vsel %vm1404, %v1338, %v1421
        %v1438 = vsel %vm1405, %v1343, %v1422
        %v1439 = vsel %vm1406, %v1348, %v1423
        %v1440 = vsel %vm1407, %v1353, %v1424
        %v1441 = vsel %vm1408, %v1358, %v1425
        %v1442 = vsel %vm1409, %v1363, %v1426
        %v1443 = vsel %vm1410, %v1368, %v1427
        %v1444 = vsel %vm1411, %v1373, %v1428
        %v1445 = vsel %vm1412, %v1378, %v1429
        %v1446 = vsel %vm1413, %v1383, %v1430
        %v1447 = vsel %vm1414, %v1388, %v1431
        %v1448 = vsel %vm1415, %v1393, %v1432
        %v1449 = vsel %vm1416, %v1398, %v1433
        %v1450 = vadd.f32 %v1434, %v865
        %v1451 = vadd.f32 %v1435, %v866
        %v1452 = vadd.f32 %v1436, %v867
        %v1453 = vadd.f32 %v1437, %v868
        %v1454 = vadd.f32 %v1438, %v869
        %v1455 = vadd.f32 %v1439, %v870
        %v1456 = vadd.f32 %v1440, %v871
        %v1457 = vadd.f32 %v1441, %v872
        %v1458 = vadd.f32 %v1442, %v873
        %v1459 = vadd.f32 %v1443, %v874
        %v1460 = vadd.f32 %v1444, %v875
        %v1461 = vadd.f32 %v1445, %v876
        %v1462 = vadd.f32 %v1446, %v877
        %v1463 = vadd.f32 %v1447, %v878
        %v1464 = vadd.f32 %v1448, %v879
        %v1465 = vadd.f32 %v1449, %v880
        %vm1466 = vcmp.gt.f32.partialorder %v1450, 0.0
        %vm1467 = vcmp.gt.f32.partialorder %v1451, 0.0
        %vm1468 = vcmp.gt.f32.partialorder %v1452, 0.0
        %vm1469 = vcmp.gt.f32.partialorder %v1453, 0.0
        %vm1470 = vcmp.gt.f32.partialorder %v1454, 0.0
        %vm1471 = vcmp.gt.f32.partialorder %v1455, 0.0
        %vm1472 = vcmp.gt.f32.partialorder %v1456, 0.0
        %vm1473 = vcmp.gt.f32.partialorder %v1457, 0.0
        %vm1474 = vcmp.gt.f32.partialorder %v1458, 0.0
        %vm1475 = vcmp.gt.f32.partialorder %v1459, 0.0
        %vm1476 = vcmp.gt.f32.partialorder %v1460, 0.0
        %vm1477 = vcmp.gt.f32.partialorder %v1461, 0.0
        %vm1478 = vcmp.gt.f32.partialorder %v1462, 0.0
        %vm1479 = vcmp.gt.f32.partialorder %v1463, 0.0
        %vm1480 = vcmp.gt.f32.partialorder %v1464, 0.0
        %vm1481 = vcmp.gt.f32.partialorder %v1465, 0.0
        %v1482 = vstv %s883
        %v1483 = vmul.f32 %v1482, %v1450
        %v1484 = vmul.f32 %v1482, %v1451
        %v1485 = vmul.f32 %v1482, %v1452
        %v1486 = vmul.f32 %v1482, %v1453
        %v1487 = vmul.f32 %v1482, %v1454
        %v1488 = vmul.f32 %v1482, %v1455
        %v1489 = vmul.f32 %v1482, %v1456
        %v1490 = vmul.f32 %v1482, %v1457
        %v1491 = vmul.f32 %v1482, %v1458
        %v1492 = vmul.f32 %v1482, %v1459
        %v1493 = vmul.f32 %v1482, %v1460
        %v1494 = vmul.f32 %v1482, %v1461
        %v1495 = vmul.f32 %v1482, %v1462
        %v1496 = vmul.f32 %v1482, %v1463
        %v1497 = vmul.f32 %v1482, %v1464
        %v1498 = vmul.f32 %v1482, %v1465
        %v1499 = vsel %vm1466, %v1450, %v1483
        %v1500 = vsel %vm1467, %v1451, %v1484
        %v1501 = vsel %vm1468, %v1452, %v1485
        %v1502 = vsel %vm1469, %v1453, %v1486
        %v1503 = vsel %vm1470, %v1454, %v1487
        %v1504 = vsel %vm1471, %v1455, %v1488
        %v1505 = vsel %vm1472, %v1456, %v1489
        %v1506 = vsel %vm1473, %v1457, %v1490
        %v1507 = vsel %vm1474, %v1458, %v1491
        %v1508 = vsel %vm1475, %v1459, %v1492
        %v1509 = vsel %vm1476, %v1460, %v1493
        %v1510 = vsel %vm1477, %v1461, %v1494
        %v1511 = vsel %vm1478, %v1462, %v1495
        %v1512 = vsel %vm1479, %v1463, %v1496
        %v1513 = vsel %vm1480, %v1464, %v1497
        %v1514 = vsel %vm1481, %v1465, %v1498
        %v1515 = vadd.f32 %v760, %v1434
        %v1516 = vadd.f32 %v761, %v1435
        %v1517 = vadd.f32 %v762, %v1436
        %v1518 = vadd.f32 %v763, %v1437
        %v1519 = vadd.f32 %v764, %v1438
        %v1520 = vadd.f32 %v765, %v1439
        %v1521 = vadd.f32 %v766, %v1440
        %v1522 = vadd.f32 %v767, %v1441
        %v1523 = vadd.f32 %v768, %v1442
        %v1524 = vadd.f32 %v769, %v1443
        %v1525 = vadd.f32 %v770, %v1444
        %v1526 = vadd.f32 %v771, %v1445
        %v1527 = vadd.f32 %v772, %v1446
        %v1528 = vadd.f32 %v773, %v1447
        %v1529 = vadd.f32 %v774, %v1448
        %v1530 = vadd.f32 %v775, %v1449
        %s1531 = sld [smem:[#allocation2 + $0x6]]
        %s1532 = sld [smem:[#allocation2 + $0x7]]
        %s1533 = sld [smem:[#allocation2 + $0x8]]
        %vm1534 = vcmp.ge.s32.totalorder %v382, 2
        %vm1535 = vcmp.ge.s32.totalorder %v383, 2
        %vm1536 = vcmp.ge.s32.totalorder %v384, 2
        %vm1537 = vcmp.ge.s32.totalorder %v385, 2
        %vm1538 = vcmp.ge.s32.totalorder %v386, 2
        %vm1539 = vcmp.ge.s32.totalorder %v387, 2
        %vm1540 = vcmp.ge.s32.totalorder %v388, 2
        %vm1541 = vcmp.ge.s32.totalorder %v389, 2
        %v1542 = vrot.slane %v1499, 6
        %v1543 = vrot.slane %v1500, 6
        %v1544 = vrot.slane %v1501, 6
        %v1545 = vrot.slane %v1502, 6
        %v1546 = vrot.slane %v1503, 6
        %v1547 = vrot.slane %v1504, 6
        %v1548 = vrot.slane %v1505, 6
        %v1549 = vrot.slane %v1506, 6
        %v1550 = vrot.slane %v1507, 6
        %v1551 = vrot.slane %v1508, 6
        %v1552 = vrot.slane %v1509, 6
        %v1553 = vrot.slane %v1510, 6
        %v1554 = vrot.slane %v1511, 6
        %v1555 = vrot.slane %v1512, 6
        %v1556 = vrot.slane %v1513, 6
        %v1557 = vrot.slane %v1514, 6
        %vm1558 = vcmp.lt.s32.totalorder %v382, 2
        %v1559 = vsel %vm1558, %v1556, %v1557
        %v1560 = vsel %vm1558, %v1555, %v1556
        %v1561 = vsel %vm1558, %v1554, %v1555
        %v1562 = vsel %vm1558, %v1553, %v1554
        %v1563 = vsel %vm1558, %v1552, %v1553
        %v1564 = vsel %vm1558, %v1551, %v1552
        %v1565 = vsel %vm1558, %v1550, %v1551
        %v1566 = vsel %vm1558, %v1549, %v1550
        %v1567 = vsel %vm1558, %v1548, %v1549
        %v1568 = vsel %vm1558, %v1547, %v1548
        %v1569 = vsel %vm1558, %v1546, %v1547
        %v1570 = vsel %vm1558, %v1545, %v1546
        %v1571 = vsel %vm1558, %v1544, %v1545
        %v1572 = vsel %vm1558, %v1543, %v1544
        %v1573 = vsel %vm1558, %v1542, %v1543
        %v1574 = vsel %vm1558, %v1557, %v1542
        %v1575 = vsel %vm1534, %v1574, 0.0
        %v1576 = vsel %vm1535, %v1573, 0.0
        %v1577 = vsel %vm1536, %v1572, 0.0
        %v1578 = vsel %vm1537, %v1571, 0.0
        %v1579 = vsel %vm1538, %v1570, 0.0
        %v1580 = vsel %vm1539, %v1569, 0.0
        %v1581 = vsel %vm1540, %v1568, 0.0
        %v1582 = vsel %vm1541, %v1567, 0.0
        %v1583 = vsel %vm1534, %v1566, 0.0
        %v1584 = vsel %vm1535, %v1565, 0.0
        %v1585 = vsel %vm1536, %v1564, 0.0
        %v1586 = vsel %vm1537, %v1563, 0.0
        %v1587 = vsel %vm1538, %v1562, 0.0
        %v1588 = vsel %vm1539, %v1561, 0.0
        %v1589 = vsel %vm1540, %v1560, 0.0
        %v1590 = vsel %vm1541, %v1559, 0.0
        %s1591 = scalar_lea.vmem [#allocation5], 512
        %v1592 = vld [vmem:[%s1591] sm:$0xff]
        %v1593 = vld [vmem:[%s1591 + $0x8] sm:$0xff]
        %v1594 = vld [vmem:[%s1591 + $0x10] sm:$0xff]
        %v1595 = vld [vmem:[%s1591 + $0x18] sm:$0xff]
        %v1596 = vld [vmem:[%s1591 + $0x20] sm:$0xff]
        %v1597 = vld [vmem:[%s1591 + $0x28] sm:$0xff]
        %v1598 = vld [vmem:[%s1591 + $0x30] sm:$0xff]
        %v1599 = vld [vmem:[%s1591 + $0x38] sm:$0xff]
        %v1600 = vld [vmem:[%s1591 + $0x40] sm:$0xff]
        %v1601 = vld [vmem:[%s1591 + $0x48] sm:$0xff]
        %v1602 = vld [vmem:[%s1591 + $0x50] sm:$0xff]
        %v1603 = vld [vmem:[%s1591 + $0x58] sm:$0xff]
        %v1604 = vld [vmem:[%s1591 + $0x60] sm:$0xff]
        %v1605 = vld [vmem:[%s1591 + $0x68] sm:$0xff]
        %v1606 = vld [vmem:[%s1591 + $0x70] sm:$0xff]
        %v1607 = vld [vmem:[%s1591 + $0x78] sm:$0xff]
        %v1608 = vld [vmem:[%s1591 + $0x80] sm:$0xff]
        %v1609 = vld [vmem:[%s1591 + $0x88] sm:$0xff]
        %v1610 = vld [vmem:[%s1591 + $0x90] sm:$0xff]
        %v1611 = vld [vmem:[%s1591 + $0x98] sm:$0xff]
        %v1612 = vld [vmem:[%s1591 + $0xa0] sm:$0xff]
        %v1613 = vld [vmem:[%s1591 + $0xa8] sm:$0xff]
        %v1614 = vld [vmem:[%s1591 + $0xb0] sm:$0xff]
        %v1615 = vld [vmem:[%s1591 + $0xb8] sm:$0xff]
        %v1616 = vld [vmem:[%s1591 + $0xc0] sm:$0xff]
        %v1617 = vld [vmem:[%s1591 + $0xc8] sm:$0xff]
        %v1618 = vld [vmem:[%s1591 + $0xd0] sm:$0xff]
        %v1619 = vld [vmem:[%s1591 + $0xd8] sm:$0xff]
        %v1620 = vld [vmem:[%s1591 + $0xe0] sm:$0xff]
        %v1621 = vld [vmem:[%s1591 + $0xe8] sm:$0xff]
        %v1622 = vld [vmem:[%s1591 + $0xf0] sm:$0xff]
        %v1623 = vld [vmem:[%s1591 + $0xf8] sm:$0xff]
        %v1624 = vlaneseq
        %v1625 = vshrl.u32 %v1624, 7
        %v1626 = vsub.s32 5, %v1625
        %v1627 = vrot.slane %v363, %v1626
        %1628 = vmatprep.subr.mxu0 0.0
        %1629 = vmatpush1.msra.mxu0 %v1607
        %1630 = vmatprep.subr.mxu0 0.0
        %1631 = vmatpush1.msra.mxu0 %v1606
        %1632 = vmatprep.subr.mxu0 0.0
        %1633 = vmatpush1.msra.mxu0 %v1605
        %1634 = vmatprep.subr.mxu0 0.0
        %1635 = vmatpush1.msra.mxu0 %v1604
        %1636 = vmatprep.subr.mxu0 0.0
        %1637 = vmatpush1.msra.mxu0 %v1603
        %1638 = vmatprep.subr.mxu0 0.0
        %1639 = vmatpush1.msra.mxu0 %v1602
        %1640 = vmatprep.subr.mxu0 0.0
        %1641 = vmatpush1.msra.mxu0 %v1601
        %1642 = vmatprep.subr.mxu0 0.0
        %1643 = vmatpush1.msra.mxu0 %v1600
        %1644 = vmatprep.subr.mxu0 0.0
        %1645 = vmatpush1.msra.mxu0 %v1599
        %1646 = vmatprep.subr.mxu0 0.0
        %1647 = vmatpush1.msra.mxu0 %v1598
        %1648 = vmatprep.subr.mxu0 0.0
        %1649 = vmatpush1.msra.mxu0 %v1597
        %1650 = vmatprep.subr.mxu0 0.0
        %1651 = vmatpush1.msra.mxu0 %v1596
        %1652 = vmatprep.subr.mxu0 0.0
        %1653 = vmatpush1.msra.mxu0 %v1595
        %1654 = vmatprep.subr.mxu0 0.0
        %1655 = vmatpush1.msra.mxu0 %v1594
        %1656 = vmatprep.subr.mxu0 0.0
        %1657 = vmatpush1.msra.mxu0 %v1593
        %1658 = vmatprep.subr.mxu0 0.0
        %1659 = vmatpush1.msra.mxu0 %v1592
        %1660 = vmatprep.subr.mxu0 0.0
        %1661 = vmatpush2.msra.mxu0 %v1623
        %1662 = vmatprep.subr.mxu0 0.0
        %1663 = vmatpush2.msra.mxu0 %v1622
        %1664 = vmatprep.subr.mxu0 0.0
        %1665 = vmatpush2.msra.mxu0 %v1621
        %1666 = vmatprep.subr.mxu0 0.0
        %1667 = vmatpush2.msra.mxu0 %v1620
        %1668 = vmatprep.subr.mxu0 0.0
        %1669 = vmatpush2.msra.mxu0 %v1619
        %1670 = vmatprep.subr.mxu0 0.0
        %1671 = vmatpush2.msra.mxu0 %v1618
        %1672 = vmatprep.subr.mxu0 0.0
        %1673 = vmatpush2.msra.mxu0 %v1617
        %1674 = vmatprep.subr.mxu0 0.0
        %1675 = vmatpush2.msra.mxu0 %v1616
        %1676 = vmatprep.subr.mxu0 0.0
        %1677 = vmatpush2.msra.mxu0 %v1615
        %1678 = vmatprep.subr.mxu0 0.0
        %1679 = vmatpush2.msra.mxu0 %v1614
        %1680 = vmatprep.subr.mxu0 0.0
        %1681 = vmatpush2.msra.mxu0 %v1613
        %1682 = vmatprep.subr.mxu0 0.0
        %1683 = vmatpush2.msra.mxu0 %v1612
        %1684 = vmatprep.subr.mxu0 0.0
        %1685 = vmatpush2.msra.mxu0 %v1611
        %1686 = vmatprep.subr.mxu0 0.0
        %1687 = vmatpush2.msra.mxu0 %v1610
        %1688 = vmatprep.subr.mxu0 0.0
        %1689 = vmatpush2.msra.mxu0 %v1609
        %1690 = vmatprep.subr.mxu0 0.0
        %1691 = vmatpush2.msra.mxu0 %v1608
        %1692 = vmatprep.mubr.f32.mxu0 %v1499
        %1693 = vmatmul.mubr.f32.gmra.mxu0 %v1575
        %v1694 = vpop.f32.mrf.mxu0
        %v1695 = vadd.f32 %v1627, %v1694
        %v1696 = vpop.f32.mrf.mxu0
        %1697 = vmatprep.mubr.f32.mxu0 %v1500
        %1698 = vmatmul.mubr.f32.gmra.mxu0 %v1576
        %v1699 = vpop.f32.mrf.mxu0
        %v1700 = vadd.f32 %v1627, %v1699
        %v1701 = vpop.f32.mrf.mxu0
        %1702 = vmatprep.mubr.f32.mxu0 %v1501
        %1703 = vmatmul.mubr.f32.gmra.mxu0 %v1577
        %v1704 = vpop.f32.mrf.mxu0
        %v1705 = vadd.f32 %v1627, %v1704
        %v1706 = vpop.f32.mrf.mxu0
        %1707 = vmatprep.mubr.f32.mxu0 %v1502
        %1708 = vmatmul.mubr.f32.gmra.mxu0 %v1578
        %v1709 = vpop.f32.mrf.mxu0
        %v1710 = vadd.f32 %v1627, %v1709
        %v1711 = vpop.f32.mrf.mxu0
        %1712 = vmatprep.mubr.f32.mxu0 %v1503
        %1713 = vmatmul.mubr.f32.gmra.mxu0 %v1579
        %v1714 = vpop.f32.mrf.mxu0
        %v1715 = vadd.f32 %v1627, %v1714
        %v1716 = vpop.f32.mrf.mxu0
        %1717 = vmatprep.mubr.f32.mxu0 %v1504
        %1718 = vmatmul.mubr.f32.gmra.mxu0 %v1580
        %v1719 = vpop.f32.mrf.mxu0
        %v1720 = vadd.f32 %v1627, %v1719
        %v1721 = vpop.f32.mrf.mxu0
        %1722 = vmatprep.mubr.f32.mxu0 %v1505
        %1723 = vmatmul.mubr.f32.gmra.mxu0 %v1581
        %v1724 = vpop.f32.mrf.mxu0
        %v1725 = vadd.f32 %v1627, %v1724
        %v1726 = vpop.f32.mrf.mxu0
        %1727 = vmatprep.mubr.f32.mxu0 %v1506
        %1728 = vmatmul.mubr.f32.gmra.mxu0 %v1582
        %v1729 = vpop.f32.mrf.mxu0
        %v1730 = vadd.f32 %v1627, %v1729
        %v1731 = vpop.f32.mrf.mxu0
        %1732 = vmatprep.mubr.f32.mxu0 %v1507
        %1733 = vmatmul.mubr.f32.gmra.mxu0 %v1583
        %v1734 = vpop.f32.mrf.mxu0
        %v1735 = vadd.f32 %v1627, %v1734
        %v1736 = vpop.f32.mrf.mxu0
        %1737 = vmatprep.mubr.f32.mxu0 %v1508
        %1738 = vmatmul.mubr.f32.gmra.mxu0 %v1584
        %v1739 = vpop.f32.mrf.mxu0
        %v1740 = vadd.f32 %v1627, %v1739
        %v1741 = vpop.f32.mrf.mxu0
        %1742 = vmatprep.mubr.f32.mxu0 %v1509
        %1743 = vmatmul.mubr.f32.gmra.mxu0 %v1585
        %v1744 = vpop.f32.mrf.mxu0
        %v1745 = vadd.f32 %v1627, %v1744
        %v1746 = vpop.f32.mrf.mxu0
        %1747 = vmatprep.mubr.f32.mxu0 %v1510
        %1748 = vmatmul.mubr.f32.gmra.mxu0 %v1586
        %v1749 = vpop.f32.mrf.mxu0
        %v1750 = vadd.f32 %v1627, %v1749
        %v1751 = vpop.f32.mrf.mxu0
        %1752 = vmatprep.mubr.f32.mxu0 %v1511
        %1753 = vmatmul.mubr.f32.gmra.mxu0 %v1587
        %v1754 = vpop.f32.mrf.mxu0
        %v1755 = vadd.f32 %v1627, %v1754
        %v1756 = vpop.f32.mrf.mxu0
        %1757 = vmatprep.mubr.f32.mxu0 %v1512
        %1758 = vmatmul.mubr.f32.gmra.mxu0 %v1588
        %v1759 = vpop.f32.mrf.mxu0
        %v1760 = vadd.f32 %v1627, %v1759
        %v1761 = vpop.f32.mrf.mxu0
        %1762 = vmatprep.mubr.f32.mxu0 %v1513
        %1763 = vmatmul.mubr.f32.gmra.mxu0 %v1589
        %v1764 = vpop.f32.mrf.mxu0
        %v1765 = vadd.f32 %v1627, %v1764
        %v1766 = vpop.f32.mrf.mxu0
        %1767 = vmatprep.mubr.f32.mxu0 %v1514
        %1768 = vmatmul.mubr.f32.gmra.mxu0 %v1590
        %v1769 = vpop.f32.mrf.mxu0
        %v1770 = vadd.f32 %v1627, %v1769
        %v1771 = vpop.f32.mrf.mxu0
        %1772 = vdwg.mxu0
        %vm1773 = vcmp.gt.f32.partialorder %v1695, 0.0
        %vm1774 = vcmp.gt.f32.partialorder %v1700, 0.0
        %vm1775 = vcmp.gt.f32.partialorder %v1705, 0.0
        %vm1776 = vcmp.gt.f32.partialorder %v1710, 0.0
        %vm1777 = vcmp.gt.f32.partialorder %v1715, 0.0
        %vm1778 = vcmp.gt.f32.partialorder %v1720, 0.0
        %vm1779 = vcmp.gt.f32.partialorder %v1725, 0.0
        %vm1780 = vcmp.gt.f32.partialorder %v1730, 0.0
        %vm1781 = vcmp.gt.f32.partialorder %v1735, 0.0
        %vm1782 = vcmp.gt.f32.partialorder %v1740, 0.0
        %vm1783 = vcmp.gt.f32.partialorder %v1745, 0.0
        %vm1784 = vcmp.gt.f32.partialorder %v1750, 0.0
        %vm1785 = vcmp.gt.f32.partialorder %v1755, 0.0
        %vm1786 = vcmp.gt.f32.partialorder %v1760, 0.0
        %vm1787 = vcmp.gt.f32.partialorder %v1765, 0.0
        %vm1788 = vcmp.gt.f32.partialorder %v1770, 0.0
        %v1789 = vstv %s1531
        %v1790 = vmul.f32 %v1789, %v1695
        %v1791 = vmul.f32 %v1789, %v1700
        %v1792 = vmul.f32 %v1789, %v1705
        %v1793 = vmul.f32 %v1789, %v1710
        %v1794 = vmul.f32 %v1789, %v1715
        %v1795 = vmul.f32 %v1789, %v1720
        %v1796 = vmul.f32 %v1789, %v1725
        %v1797 = vmul.f32 %v1789, %v1730
        %v1798 = vmul.f32 %v1789, %v1735
        %v1799 = vmul.f32 %v1789, %v1740
        %v1800 = vmul.f32 %v1789, %v1745
        %v1801 = vmul.f32 %v1789, %v1750
        %v1802 = vmul.f32 %v1789, %v1755
        %v1803 = vmul.f32 %v1789, %v1760
        %v1804 = vmul.f32 %v1789, %v1765
        %v1805 = vmul.f32 %v1789, %v1770
        %v1806 = vsel %vm1773, %v1695, %v1790
        %v1807 = vsel %vm1774, %v1700, %v1791
        %v1808 = vsel %vm1775, %v1705, %v1792
        %v1809 = vsel %vm1776, %v1710, %v1793
        %v1810 = vsel %vm1777, %v1715, %v1794
        %v1811 = vsel %vm1778, %v1720, %v1795
        %v1812 = vsel %vm1779, %v1725, %v1796
        %v1813 = vsel %vm1780, %v1730, %v1797
        %v1814 = vsel %vm1781, %v1735, %v1798
        %v1815 = vsel %vm1782, %v1740, %v1799
        %v1816 = vsel %vm1783, %v1745, %v1800
        %v1817 = vsel %vm1784, %v1750, %v1801
        %v1818 = vsel %vm1785, %v1755, %v1802
        %v1819 = vsel %vm1786, %v1760, %v1803
        %v1820 = vsel %vm1787, %v1765, %v1804
        %v1821 = vsel %vm1788, %v1770, %v1805
        %v1822 = vrot.slane %v1806, 6
        %v1823 = vrot.slane %v1807, 6
        %v1824 = vrot.slane %v1808, 6
        %v1825 = vrot.slane %v1809, 6
        %v1826 = vrot.slane %v1810, 6
        %v1827 = vrot.slane %v1811, 6
        %v1828 = vrot.slane %v1812, 6
        %v1829 = vrot.slane %v1813, 6
        %v1830 = vrot.slane %v1814, 6
        %v1831 = vrot.slane %v1815, 6
        %v1832 = vrot.slane %v1816, 6
        %v1833 = vrot.slane %v1817, 6
        %v1834 = vrot.slane %v1818, 6
        %v1835 = vrot.slane %v1819, 6
        %v1836 = vrot.slane %v1820, 6
        %v1837 = vrot.slane %v1821, 6
        %v1838 = vsel %vm1558, %v1836, %v1837
        %v1839 = vsel %vm1558, %v1835, %v1836
        %v1840 = vsel %vm1558, %v1834, %v1835
        %v1841 = vsel %vm1558, %v1833, %v1834
        %v1842 = vsel %vm1558, %v1832, %v1833
        %v1843 = vsel %vm1558, %v1831, %v1832
        %v1844 = vsel %vm1558, %v1830, %v1831
        %v1845 = vsel %vm1558, %v1829, %v1830
        %v1846 = vsel %vm1558, %v1828, %v1829
        %v1847 = vsel %vm1558, %v1827, %v1828
        %v1848 = vsel %vm1558, %v1826, %v1827
        %v1849 = vsel %vm1558, %v1825, %v1826
        %v1850 = vsel %vm1558, %v1824, %v1825
        %v1851 = vsel %vm1558, %v1823, %v1824
        %v1852 = vsel %vm1558, %v1822, %v1823
        %v1853 = vsel %vm1558, %v1837, %v1822
        %v1854 = vsel %vm1534, %v1853, 0.0
        %v1855 = vsel %vm1535, %v1852, 0.0
        %v1856 = vsel %vm1536, %v1851, 0.0
        %v1857 = vsel %vm1537, %v1850, 0.0
        %v1858 = vsel %vm1538, %v1849, 0.0
        %v1859 = vsel %vm1539, %v1848, 0.0
        %v1860 = vsel %vm1540, %v1847, 0.0
        %v1861 = vsel %vm1541, %v1846, 0.0
        %v1862 = vsel %vm1534, %v1845, 0.0
        %v1863 = vsel %vm1535, %v1844, 0.0
        %v1864 = vsel %vm1536, %v1843, 0.0
        %v1865 = vsel %vm1537, %v1842, 0.0
        %v1866 = vsel %vm1538, %v1841, 0.0
        %v1867 = vsel %vm1539, %v1840, 0.0
        %v1868 = vsel %vm1540, %v1839, 0.0
        %v1869 = vsel %vm1541, %v1838, 0.0
        %s1870 = scalar_lea.vmem [#allocation5], 768
        %v1871 = vld [vmem:[%s1870] sm:$0xff]
        %v1872 = vld [vmem:[%s1870 + $0x8] sm:$0xff]
        %v1873 = vld [vmem:[%s1870 + $0x10] sm:$0xff]
        %v1874 = vld [vmem:[%s1870 + $0x18] sm:$0xff]
        %v1875 = vld [vmem:[%s1870 + $0x20] sm:$0xff]
        %v1876 = vld [vmem:[%s1870 + $0x28] sm:$0xff]
        %v1877 = vld [vmem:[%s1870 + $0x30] sm:$0xff]
        %v1878 = vld [vmem:[%s1870 + $0x38] sm:$0xff]
        %v1879 = vld [vmem:[%s1870 + $0x40] sm:$0xff]
        %v1880 = vld [vmem:[%s1870 + $0x48] sm:$0xff]
        %v1881 = vld [vmem:[%s1870 + $0x50] sm:$0xff]
        %v1882 = vld [vmem:[%s1870 + $0x58] sm:$0xff]
        %v1883 = vld [vmem:[%s1870 + $0x60] sm:$0xff]
        %v1884 = vld [vmem:[%s1870 + $0x68] sm:$0xff]
        %v1885 = vld [vmem:[%s1870 + $0x70] sm:$0xff]
        %v1886 = vld [vmem:[%s1870 + $0x78] sm:$0xff]
        %v1887 = vld [vmem:[%s1870 + $0x80] sm:$0xff]
        %v1888 = vld [vmem:[%s1870 + $0x88] sm:$0xff]
        %v1889 = vld [vmem:[%s1870 + $0x90] sm:$0xff]
        %v1890 = vld [vmem:[%s1870 + $0x98] sm:$0xff]
        %v1891 = vld [vmem:[%s1870 + $0xa0] sm:$0xff]
        %v1892 = vld [vmem:[%s1870 + $0xa8] sm:$0xff]
        %v1893 = vld [vmem:[%s1870 + $0xb0] sm:$0xff]
        %v1894 = vld [vmem:[%s1870 + $0xb8] sm:$0xff]
        %v1895 = vld [vmem:[%s1870 + $0xc0] sm:$0xff]
        %v1896 = vld [vmem:[%s1870 + $0xc8] sm:$0xff]
        %v1897 = vld [vmem:[%s1870 + $0xd0] sm:$0xff]
        %v1898 = vld [vmem:[%s1870 + $0xd8] sm:$0xff]
        %v1899 = vld [vmem:[%s1870 + $0xe0] sm:$0xff]
        %v1900 = vld [vmem:[%s1870 + $0xe8] sm:$0xff]
        %v1901 = vld [vmem:[%s1870 + $0xf0] sm:$0xff]
        %v1902 = vld [vmem:[%s1870 + $0xf8] sm:$0xff]
        %v1903 = vlaneseq
        %v1904 = vshrl.u32 %v1903, 7
        %v1905 = vsub.s32 6, %v1904
        %v1906 = vrot.slane %v363, %v1905
        %1907 = vmatprep.subr.mxu0 0.0
        %1908 = vmatpush1.msra.mxu0 %v1886
        %1909 = vmatprep.subr.mxu0 0.0
        %1910 = vmatpush1.msra.mxu0 %v1885
        %1911 = vmatprep.subr.mxu0 0.0
        %1912 = vmatpush1.msra.mxu0 %v1884
        %1913 = vmatprep.subr.mxu0 0.0
        %1914 = vmatpush1.msra.mxu0 %v1883
        %1915 = vmatprep.subr.mxu0 0.0
        %1916 = vmatpush1.msra.mxu0 %v1882
        %1917 = vmatprep.subr.mxu0 0.0
        %1918 = vmatpush1.msra.mxu0 %v1881
        %1919 = vmatprep.subr.mxu0 0.0
        %1920 = vmatpush1.msra.mxu0 %v1880
        %1921 = vmatprep.subr.mxu0 0.0
        %1922 = vmatpush1.msra.mxu0 %v1879
        %1923 = vmatprep.subr.mxu0 0.0
        %1924 = vmatpush1.msra.mxu0 %v1878
        %1925 = vmatprep.subr.mxu0 0.0
        %1926 = vmatpush1.msra.mxu0 %v1877
        %1927 = vmatprep.subr.mxu0 0.0
        %1928 = vmatpush1.msra.mxu0 %v1876
        %1929 = vmatprep.subr.mxu0 0.0
        %1930 = vmatpush1.msra.mxu0 %v1875
        %1931 = vmatprep.subr.mxu0 0.0
        %1932 = vmatpush1.msra.mxu0 %v1874
        %1933 = vmatprep.subr.mxu0 0.0
        %1934 = vmatpush1.msra.mxu0 %v1873
        %1935 = vmatprep.subr.mxu0 0.0
        %1936 = vmatpush1.msra.mxu0 %v1872
        %1937 = vmatprep.subr.mxu0 0.0
        %1938 = vmatpush1.msra.mxu0 %v1871
        %1939 = vmatprep.subr.mxu0 0.0
        %1940 = vmatpush2.msra.mxu0 %v1902
        %1941 = vmatprep.subr.mxu0 0.0
        %1942 = vmatpush2.msra.mxu0 %v1901
        %1943 = vmatprep.subr.mxu0 0.0
        %1944 = vmatpush2.msra.mxu0 %v1900
        %1945 = vmatprep.subr.mxu0 0.0
        %1946 = vmatpush2.msra.mxu0 %v1899
        %1947 = vmatprep.subr.mxu0 0.0
        %1948 = vmatpush2.msra.mxu0 %v1898
        %1949 = vmatprep.subr.mxu0 0.0
        %1950 = vmatpush2.msra.mxu0 %v1897
        %1951 = vmatprep.subr.mxu0 0.0
        %1952 = vmatpush2.msra.mxu0 %v1896
        %1953 = vmatprep.subr.mxu0 0.0
        %1954 = vmatpush2.msra.mxu0 %v1895
        %1955 = vmatprep.subr.mxu0 0.0
        %1956 = vmatpush2.msra.mxu0 %v1894
        %1957 = vmatprep.subr.mxu0 0.0
        %1958 = vmatpush2.msra.mxu0 %v1893
        %1959 = vmatprep.subr.mxu0 0.0
        %1960 = vmatpush2.msra.mxu0 %v1892
        %1961 = vmatprep.subr.mxu0 0.0
        %1962 = vmatpush2.msra.mxu0 %v1891
        %1963 = vmatprep.subr.mxu0 0.0
        %1964 = vmatpush2.msra.mxu0 %v1890
        %1965 = vmatprep.subr.mxu0 0.0
        %1966 = vmatpush2.msra.mxu0 %v1889
        %1967 = vmatprep.subr.mxu0 0.0
        %1968 = vmatpush2.msra.mxu0 %v1888
        %1969 = vmatprep.subr.mxu0 0.0
        %1970 = vmatpush2.msra.mxu0 %v1887
        %1971 = vmatprep.mubr.f32.mxu0 %v1806
        %1972 = vmatmul.mubr.f32.gmra.mxu0 %v1854
        %v1973 = vpop.f32.mrf.mxu0
        %v1974 = vadd.f32 %v1906, %v1973
        %v1975 = vpop.f32.mrf.mxu0
        %1976 = vmatprep.mubr.f32.mxu0 %v1807
        %1977 = vmatmul.mubr.f32.gmra.mxu0 %v1855
        %v1978 = vpop.f32.mrf.mxu0
        %v1979 = vadd.f32 %v1906, %v1978
        %v1980 = vpop.f32.mrf.mxu0
        %1981 = vmatprep.mubr.f32.mxu0 %v1808
        %1982 = vmatmul.mubr.f32.gmra.mxu0 %v1856
        %v1983 = vpop.f32.mrf.mxu0
        %v1984 = vadd.f32 %v1906, %v1983
        %v1985 = vpop.f32.mrf.mxu0
        %1986 = vmatprep.mubr.f32.mxu0 %v1809
        %1987 = vmatmul.mubr.f32.gmra.mxu0 %v1857
        %v1988 = vpop.f32.mrf.mxu0
        %v1989 = vadd.f32 %v1906, %v1988
        %v1990 = vpop.f32.mrf.mxu0
        %1991 = vmatprep.mubr.f32.mxu0 %v1810
        %1992 = vmatmul.mubr.f32.gmra.mxu0 %v1858
        %v1993 = vpop.f32.mrf.mxu0
        %v1994 = vadd.f32 %v1906, %v1993
        %v1995 = vpop.f32.mrf.mxu0
        %1996 = vmatprep.mubr.f32.mxu0 %v1811
        %1997 = vmatmul.mubr.f32.gmra.mxu0 %v1859
        %v1998 = vpop.f32.mrf.mxu0
        %v1999 = vadd.f32 %v1906, %v1998
        %v2000 = vpop.f32.mrf.mxu0
        %2001 = vmatprep.mubr.f32.mxu0 %v1812
        %2002 = vmatmul.mubr.f32.gmra.mxu0 %v1860
        %v2003 = vpop.f32.mrf.mxu0
        %v2004 = vadd.f32 %v1906, %v2003
        %v2005 = vpop.f32.mrf.mxu0
        %2006 = vmatprep.mubr.f32.mxu0 %v1813
        %2007 = vmatmul.mubr.f32.gmra.mxu0 %v1861
        %v2008 = vpop.f32.mrf.mxu0
        %v2009 = vadd.f32 %v1906, %v2008
        %v2010 = vpop.f32.mrf.mxu0
        %2011 = vmatprep.mubr.f32.mxu0 %v1814
        %2012 = vmatmul.mubr.f32.gmra.mxu0 %v1862
        %v2013 = vpop.f32.mrf.mxu0
        %v2014 = vadd.f32 %v1906, %v2013
        %v2015 = vpop.f32.mrf.mxu0
        %2016 = vmatprep.mubr.f32.mxu0 %v1815
        %2017 = vmatmul.mubr.f32.gmra.mxu0 %v1863
        %v2018 = vpop.f32.mrf.mxu0
        %v2019 = vadd.f32 %v1906, %v2018
        %v2020 = vpop.f32.mrf.mxu0
        %2021 = vmatprep.mubr.f32.mxu0 %v1816
        %2022 = vmatmul.mubr.f32.gmra.mxu0 %v1864
        %v2023 = vpop.f32.mrf.mxu0
        %v2024 = vadd.f32 %v1906, %v2023
        %v2025 = vpop.f32.mrf.mxu0
        %2026 = vmatprep.mubr.f32.mxu0 %v1817
        %2027 = vmatmul.mubr.f32.gmra.mxu0 %v1865
        %v2028 = vpop.f32.mrf.mxu0
        %v2029 = vadd.f32 %v1906, %v2028
        %v2030 = vpop.f32.mrf.mxu0
        %2031 = vmatprep.mubr.f32.mxu0 %v1818
        %2032 = vmatmul.mubr.f32.gmra.mxu0 %v1866
        %v2033 = vpop.f32.mrf.mxu0
        %v2034 = vadd.f32 %v1906, %v2033
        %v2035 = vpop.f32.mrf.mxu0
        %2036 = vmatprep.mubr.f32.mxu0 %v1819
        %2037 = vmatmul.mubr.f32.gmra.mxu0 %v1867
        %v2038 = vpop.f32.mrf.mxu0
        %v2039 = vadd.f32 %v1906, %v2038
        %v2040 = vpop.f32.mrf.mxu0
        %2041 = vmatprep.mubr.f32.mxu0 %v1820
        %2042 = vmatmul.mubr.f32.gmra.mxu0 %v1868
        %v2043 = vpop.f32.mrf.mxu0
        %v2044 = vadd.f32 %v1906, %v2043
        %v2045 = vpop.f32.mrf.mxu0
        %2046 = vmatprep.mubr.f32.mxu0 %v1821
        %2047 = vmatmul.mubr.f32.gmra.mxu0 %v1869
        %v2048 = vpop.f32.mrf.mxu0
        %v2049 = vadd.f32 %v1906, %v2048
        %v2050 = vpop.f32.mrf.mxu0
        %2051 = vdwg.mxu0
        %vm2052 = vcmp.gt.f32.partialorder %v1974, 0.0
        %vm2053 = vcmp.gt.f32.partialorder %v1979, 0.0
        %vm2054 = vcmp.gt.f32.partialorder %v1984, 0.0
        %vm2055 = vcmp.gt.f32.partialorder %v1989, 0.0
        %vm2056 = vcmp.gt.f32.partialorder %v1994, 0.0
        %vm2057 = vcmp.gt.f32.partialorder %v1999, 0.0
        %vm2058 = vcmp.gt.f32.partialorder %v2004, 0.0
        %vm2059 = vcmp.gt.f32.partialorder %v2009, 0.0
        %vm2060 = vcmp.gt.f32.partialorder %v2014, 0.0
        %vm2061 = vcmp.gt.f32.partialorder %v2019, 0.0
        %vm2062 = vcmp.gt.f32.partialorder %v2024, 0.0
        %vm2063 = vcmp.gt.f32.partialorder %v2029, 0.0
        %vm2064 = vcmp.gt.f32.partialorder %v2034, 0.0
        %vm2065 = vcmp.gt.f32.partialorder %v2039, 0.0
        %vm2066 = vcmp.gt.f32.partialorder %v2044, 0.0
        %vm2067 = vcmp.gt.f32.partialorder %v2049, 0.0
        %v2068 = vstv %s1532
        %v2069 = vmul.f32 %v2068, %v1974
        %v2070 = vmul.f32 %v2068, %v1979
        %v2071 = vmul.f32 %v2068, %v1984
        %v2072 = vmul.f32 %v2068, %v1989
        %v2073 = vmul.f32 %v2068, %v1994
        %v2074 = vmul.f32 %v2068, %v1999
        %v2075 = vmul.f32 %v2068, %v2004
        %v2076 = vmul.f32 %v2068, %v2009
        %v2077 = vmul.f32 %v2068, %v2014
        %v2078 = vmul.f32 %v2068, %v2019
        %v2079 = vmul.f32 %v2068, %v2024
        %v2080 = vmul.f32 %v2068, %v2029
        %v2081 = vmul.f32 %v2068, %v2034
        %v2082 = vmul.f32 %v2068, %v2039
        %v2083 = vmul.f32 %v2068, %v2044
        %v2084 = vmul.f32 %v2068, %v2049
        %v2085 = vsel %vm2052, %v1974, %v2069
        %v2086 = vsel %vm2053, %v1979, %v2070
        %v2087 = vsel %vm2054, %v1984, %v2071
        %v2088 = vsel %vm2055, %v1989, %v2072
        %v2089 = vsel %vm2056, %v1994, %v2073
        %v2090 = vsel %vm2057, %v1999, %v2074
        %v2091 = vsel %vm2058, %v2004, %v2075
        %v2092 = vsel %vm2059, %v2009, %v2076
        %v2093 = vsel %vm2060, %v2014, %v2077
        %v2094 = vsel %vm2061, %v2019, %v2078
        %v2095 = vsel %vm2062, %v2024, %v2079
        %v2096 = vsel %vm2063, %v2029, %v2080
        %v2097 = vsel %vm2064, %v2034, %v2081
        %v2098 = vsel %vm2065, %v2039, %v2082
        %v2099 = vsel %vm2066, %v2044, %v2083
        %v2100 = vsel %vm2067, %v2049, %v2084
        %v2101 = vadd.f32 %v2085, %v1499
        %v2102 = vadd.f32 %v2086, %v1500
        %v2103 = vadd.f32 %v2087, %v1501
        %v2104 = vadd.f32 %v2088, %v1502
        %v2105 = vadd.f32 %v2089, %v1503
        %v2106 = vadd.f32 %v2090, %v1504
        %v2107 = vadd.f32 %v2091, %v1505
        %v2108 = vadd.f32 %v2092, %v1506
        %v2109 = vadd.f32 %v2093, %v1507
        %v2110 = vadd.f32 %v2094, %v1508
        %v2111 = vadd.f32 %v2095, %v1509
        %v2112 = vadd.f32 %v2096, %v1510
        %v2113 = vadd.f32 %v2097, %v1511
        %v2114 = vadd.f32 %v2098, %v1512
        %v2115 = vadd.f32 %v2099, %v1513
        %v2116 = vadd.f32 %v2100, %v1514
        %vm2117 = vcmp.gt.f32.partialorder %v2101, 0.0
        %vm2118 = vcmp.gt.f32.partialorder %v2102, 0.0
        %vm2119 = vcmp.gt.f32.partialorder %v2103, 0.0
        %vm2120 = vcmp.gt.f32.partialorder %v2104, 0.0
        %vm2121 = vcmp.gt.f32.partialorder %v2105, 0.0
        %vm2122 = vcmp.gt.f32.partialorder %v2106, 0.0
        %vm2123 = vcmp.gt.f32.partialorder %v2107, 0.0
        %vm2124 = vcmp.gt.f32.partialorder %v2108, 0.0
        %vm2125 = vcmp.gt.f32.partialorder %v2109, 0.0
        %vm2126 = vcmp.gt.f32.partialorder %v2110, 0.0
        %vm2127 = vcmp.gt.f32.partialorder %v2111, 0.0
        %vm2128 = vcmp.gt.f32.partialorder %v2112, 0.0
        %vm2129 = vcmp.gt.f32.partialorder %v2113, 0.0
        %vm2130 = vcmp.gt.f32.partialorder %v2114, 0.0
        %vm2131 = vcmp.gt.f32.partialorder %v2115, 0.0
        %vm2132 = vcmp.gt.f32.partialorder %v2116, 0.0
        %v2133 = vstv %s1533
        %v2134 = vmul.f32 %v2133, %v2101
        %v2135 = vmul.f32 %v2133, %v2102
        %v2136 = vmul.f32 %v2133, %v2103
        %v2137 = vmul.f32 %v2133, %v2104
        %v2138 = vmul.f32 %v2133, %v2105
        %v2139 = vmul.f32 %v2133, %v2106
        %v2140 = vmul.f32 %v2133, %v2107
        %v2141 = vmul.f32 %v2133, %v2108
        %v2142 = vmul.f32 %v2133, %v2109
        %v2143 = vmul.f32 %v2133, %v2110
        %v2144 = vmul.f32 %v2133, %v2111
        %v2145 = vmul.f32 %v2133, %v2112
        %v2146 = vmul.f32 %v2133, %v2113
        %v2147 = vmul.f32 %v2133, %v2114
        %v2148 = vmul.f32 %v2133, %v2115
        %v2149 = vmul.f32 %v2133, %v2116
        %v2150 = vsel %vm2117, %v2101, %v2134
        %v2151 = vsel %vm2118, %v2102, %v2135
        %v2152 = vsel %vm2119, %v2103, %v2136
        %v2153 = vsel %vm2120, %v2104, %v2137
        %v2154 = vsel %vm2121, %v2105, %v2138
        %v2155 = vsel %vm2122, %v2106, %v2139
        %v2156 = vsel %vm2123, %v2107, %v2140
        %v2157 = vsel %vm2124, %v2108, %v2141
        %v2158 = vsel %vm2125, %v2109, %v2142
        %v2159 = vsel %vm2126, %v2110, %v2143
        %v2160 = vsel %vm2127, %v2111, %v2144
        %v2161 = vsel %vm2128, %v2112, %v2145
        %v2162 = vsel %vm2129, %v2113, %v2146
        %v2163 = vsel %vm2130, %v2114, %v2147
        %v2164 = vsel %vm2131, %v2115, %v2148
        %v2165 = vsel %vm2132, %v2116, %v2149
        %v2166 = vadd.f32 %v1515, %v2085
        %v2167 = vadd.f32 %v1516, %v2086
        %v2168 = vadd.f32 %v1517, %v2087
        %v2169 = vadd.f32 %v1518, %v2088
        %v2170 = vadd.f32 %v1519, %v2089
        %v2171 = vadd.f32 %v1520, %v2090
        %v2172 = vadd.f32 %v1521, %v2091
        %v2173 = vadd.f32 %v1522, %v2092
        %v2174 = vadd.f32 %v1523, %v2093
        %v2175 = vadd.f32 %v1524, %v2094
        %v2176 = vadd.f32 %v1525, %v2095
        %v2177 = vadd.f32 %v1526, %v2096
        %v2178 = vadd.f32 %v1527, %v2097
        %v2179 = vadd.f32 %v1528, %v2098
        %v2180 = vadd.f32 %v1529, %v2099
        %v2181 = vadd.f32 %v1530, %v2100
        %s2182 = sld [smem:[#allocation2 + $0x9]]
        %s2183 = sld [smem:[#allocation2 + $0xa]]
        %s2184 = sld [smem:[#allocation2 + $0xb]]
        %vm2185 = vcmp.ge.s32.totalorder %v382, 4
        %vm2186 = vcmp.ge.s32.totalorder %v383, 4
        %vm2187 = vcmp.ge.s32.totalorder %v384, 4
        %vm2188 = vcmp.ge.s32.totalorder %v385, 4
        %vm2189 = vcmp.ge.s32.totalorder %v386, 4
        %vm2190 = vcmp.ge.s32.totalorder %v387, 4
        %vm2191 = vcmp.ge.s32.totalorder %v388, 4
        %vm2192 = vcmp.ge.s32.totalorder %v389, 4
        %v2193 = vrot.slane %v2150, 4
        %v2194 = vrot.slane %v2151, 4
        %v2195 = vrot.slane %v2152, 4
        %v2196 = vrot.slane %v2153, 4
        %v2197 = vrot.slane %v2154, 4
        %v2198 = vrot.slane %v2155, 4
        %v2199 = vrot.slane %v2156, 4
        %v2200 = vrot.slane %v2157, 4
        %v2201 = vrot.slane %v2158, 4
        %v2202 = vrot.slane %v2159, 4
        %v2203 = vrot.slane %v2160, 4
        %v2204 = vrot.slane %v2161, 4
        %v2205 = vrot.slane %v2162, 4
        %v2206 = vrot.slane %v2163, 4
        %v2207 = vrot.slane %v2164, 4
        %v2208 = vrot.slane %v2165, 4
        %vm2209 = vcmp.lt.s32.totalorder %v382, 4
        %v2210 = vsel %vm2209, %v2207, %v2208
        %v2211 = vsel %vm2209, %v2206, %v2207
        %v2212 = vsel %vm2209, %v2205, %v2206
        %v2213 = vsel %vm2209, %v2204, %v2205
        %v2214 = vsel %vm2209, %v2203, %v2204
        %v2215 = vsel %vm2209, %v2202, %v2203
        %v2216 = vsel %vm2209, %v2201, %v2202
        %v2217 = vsel %vm2209, %v2200, %v2201
        %v2218 = vsel %vm2209, %v2199, %v2200
        %v2219 = vsel %vm2209, %v2198, %v2199
        %v2220 = vsel %vm2209, %v2197, %v2198
        %v2221 = vsel %vm2209, %v2196, %v2197
        %v2222 = vsel %vm2209, %v2195, %v2196
        %v2223 = vsel %vm2209, %v2194, %v2195
        %v2224 = vsel %vm2209, %v2193, %v2194
        %v2225 = vsel %vm2209, %v2208, %v2193
        %v2226 = vsel %vm2185, %v2225, 0.0
        %v2227 = vsel %vm2186, %v2224, 0.0
        %v2228 = vsel %vm2187, %v2223, 0.0
        %v2229 = vsel %vm2188, %v2222, 0.0
        %v2230 = vsel %vm2189, %v2221, 0.0
        %v2231 = vsel %vm2190, %v2220, 0.0
        %v2232 = vsel %vm2191, %v2219, 0.0
        %v2233 = vsel %vm2192, %v2218, 0.0
        %v2234 = vsel %vm2185, %v2217, 0.0
        %v2235 = vsel %vm2186, %v2216, 0.0
        %v2236 = vsel %vm2187, %v2215, 0.0
        %v2237 = vsel %vm2188, %v2214, 0.0
        %v2238 = vsel %vm2189, %v2213, 0.0
        %v2239 = vsel %vm2190, %v2212, 0.0
        %v2240 = vsel %vm2191, %v2211, 0.0
        %v2241 = vsel %vm2192, %v2210, 0.0
        %s2242 = scalar_lea.vmem [#allocation5], 1024
        %v2243 = vld [vmem:[%s2242] sm:$0xff]
        %v2244 = vld [vmem:[%s2242 + $0x8] sm:$0xff]
        %v2245 = vld [vmem:[%s2242 + $0x10] sm:$0xff]
        %v2246 = vld [vmem:[%s2242 + $0x18] sm:$0xff]
        %v2247 = vld [vmem:[%s2242 + $0x20] sm:$0xff]
        %v2248 = vld [vmem:[%s2242 + $0x28] sm:$0xff]
        %v2249 = vld [vmem:[%s2242 + $0x30] sm:$0xff]
        %v2250 = vld [vmem:[%s2242 + $0x38] sm:$0xff]
        %v2251 = vld [vmem:[%s2242 + $0x40] sm:$0xff]
        %v2252 = vld [vmem:[%s2242 + $0x48] sm:$0xff]
        %v2253 = vld [vmem:[%s2242 + $0x50] sm:$0xff]
        %v2254 = vld [vmem:[%s2242 + $0x58] sm:$0xff]
        %v2255 = vld [vmem:[%s2242 + $0x60] sm:$0xff]
        %v2256 = vld [vmem:[%s2242 + $0x68] sm:$0xff]
        %v2257 = vld [vmem:[%s2242 + $0x70] sm:$0xff]
        %v2258 = vld [vmem:[%s2242 + $0x78] sm:$0xff]
        %v2259 = vld [vmem:[%s2242 + $0x80] sm:$0xff]
        %v2260 = vld [vmem:[%s2242 + $0x88] sm:$0xff]
        %v2261 = vld [vmem:[%s2242 + $0x90] sm:$0xff]
        %v2262 = vld [vmem:[%s2242 + $0x98] sm:$0xff]
        %v2263 = vld [vmem:[%s2242 + $0xa0] sm:$0xff]
        %v2264 = vld [vmem:[%s2242 + $0xa8] sm:$0xff]
        %v2265 = vld [vmem:[%s2242 + $0xb0] sm:$0xff]
        %v2266 = vld [vmem:[%s2242 + $0xb8] sm:$0xff]
        %v2267 = vld [vmem:[%s2242 + $0xc0] sm:$0xff]
        %v2268 = vld [vmem:[%s2242 + $0xc8] sm:$0xff]
        %v2269 = vld [vmem:[%s2242 + $0xd0] sm:$0xff]
        %v2270 = vld [vmem:[%s2242 + $0xd8] sm:$0xff]
        %v2271 = vld [vmem:[%s2242 + $0xe0] sm:$0xff]
        %v2272 = vld [vmem:[%s2242 + $0xe8] sm:$0xff]
        %v2273 = vld [vmem:[%s2242 + $0xf0] sm:$0xff]
        %v2274 = vld [vmem:[%s2242 + $0xf8] sm:$0xff]
        %v2275 = vlaneseq
        %v2276 = vshrl.u32 %v2275, 7
        %v2277 = vsub.s32 7, %v2276
        %v2278 = vrot.slane %v363, %v2277
        %2279 = vmatprep.subr.mxu0 0.0
        %2280 = vmatpush1.msra.mxu0 %v2258
        %2281 = vmatprep.subr.mxu0 0.0
        %2282 = vmatpush1.msra.mxu0 %v2257
        %2283 = vmatprep.subr.mxu0 0.0
        %2284 = vmatpush1.msra.mxu0 %v2256
        %2285 = vmatprep.subr.mxu0 0.0
        %2286 = vmatpush1.msra.mxu0 %v2255
        %2287 = vmatprep.subr.mxu0 0.0
        %2288 = vmatpush1.msra.mxu0 %v2254
        %2289 = vmatprep.subr.mxu0 0.0
        %2290 = vmatpush1.msra.mxu0 %v2253
        %2291 = vmatprep.subr.mxu0 0.0
        %2292 = vmatpush1.msra.mxu0 %v2252
        %2293 = vmatprep.subr.mxu0 0.0
        %2294 = vmatpush1.msra.mxu0 %v2251
        %2295 = vmatprep.subr.mxu0 0.0
        %2296 = vmatpush1.msra.mxu0 %v2250
        %2297 = vmatprep.subr.mxu0 0.0
        %2298 = vmatpush1.msra.mxu0 %v2249
        %2299 = vmatprep.subr.mxu0 0.0
        %2300 = vmatpush1.msra.mxu0 %v2248
        %2301 = vmatprep.subr.mxu0 0.0
        %2302 = vmatpush1.msra.mxu0 %v2247
        %2303 = vmatprep.subr.mxu0 0.0
        %2304 = vmatpush1.msra.mxu0 %v2246
        %2305 = vmatprep.subr.mxu0 0.0
        %2306 = vmatpush1.msra.mxu0 %v2245
        %2307 = vmatprep.subr.mxu0 0.0
        %2308 = vmatpush1.msra.mxu0 %v2244
        %2309 = vmatprep.subr.mxu0 0.0
        %2310 = vmatpush1.msra.mxu0 %v2243
        %2311 = vmatprep.subr.mxu0 0.0
        %2312 = vmatpush2.msra.mxu0 %v2274
        %2313 = vmatprep.subr.mxu0 0.0
        %2314 = vmatpush2.msra.mxu0 %v2273
        %2315 = vmatprep.subr.mxu0 0.0
        %2316 = vmatpush2.msra.mxu0 %v2272
        %2317 = vmatprep.subr.mxu0 0.0
        %2318 = vmatpush2.msra.mxu0 %v2271
        %2319 = vmatprep.subr.mxu0 0.0
        %2320 = vmatpush2.msra.mxu0 %v2270
        %2321 = vmatprep.subr.mxu0 0.0
        %2322 = vmatpush2.msra.mxu0 %v2269
        %2323 = vmatprep.subr.mxu0 0.0
        %2324 = vmatpush2.msra.mxu0 %v2268
        %2325 = vmatprep.subr.mxu0 0.0
        %2326 = vmatpush2.msra.mxu0 %v2267
        %2327 = vmatprep.subr.mxu0 0.0
        %2328 = vmatpush2.msra.mxu0 %v2266
        %2329 = vmatprep.subr.mxu0 0.0
        %2330 = vmatpush2.msra.mxu0 %v2265
        %2331 = vmatprep.subr.mxu0 0.0
        %2332 = vmatpush2.msra.mxu0 %v2264
        %2333 = vmatprep.subr.mxu0 0.0
        %2334 = vmatpush2.msra.mxu0 %v2263
        %2335 = vmatprep.subr.mxu0 0.0
        %2336 = vmatpush2.msra.mxu0 %v2262
        %2337 = vmatprep.subr.mxu0 0.0
        %2338 = vmatpush2.msra.mxu0 %v2261
        %2339 = vmatprep.subr.mxu0 0.0
        %2340 = vmatpush2.msra.mxu0 %v2260
        %2341 = vmatprep.subr.mxu0 0.0
        %2342 = vmatpush2.msra.mxu0 %v2259
        %2343 = vmatprep.mubr.f32.mxu0 %v2150
        %2344 = vmatmul.mubr.f32.gmra.mxu0 %v2226
        %v2345 = vpop.f32.mrf.mxu0
        %v2346 = vadd.f32 %v2278, %v2345
        %v2347 = vpop.f32.mrf.mxu0
        %2348 = vmatprep.mubr.f32.mxu0 %v2151
        %2349 = vmatmul.mubr.f32.gmra.mxu0 %v2227
        %v2350 = vpop.f32.mrf.mxu0
        %v2351 = vadd.f32 %v2278, %v2350
        %v2352 = vpop.f32.mrf.mxu0
        %2353 = vmatprep.mubr.f32.mxu0 %v2152
        %2354 = vmatmul.mubr.f32.gmra.mxu0 %v2228
        %v2355 = vpop.f32.mrf.mxu0
        %v2356 = vadd.f32 %v2278, %v2355
        %v2357 = vpop.f32.mrf.mxu0
        %2358 = vmatprep.mubr.f32.mxu0 %v2153
        %2359 = vmatmul.mubr.f32.gmra.mxu0 %v2229
        %v2360 = vpop.f32.mrf.mxu0
        %v2361 = vadd.f32 %v2278, %v2360
        %v2362 = vpop.f32.mrf.mxu0
        %2363 = vmatprep.mubr.f32.mxu0 %v2154
        %2364 = vmatmul.mubr.f32.gmra.mxu0 %v2230
        %v2365 = vpop.f32.mrf.mxu0
        %v2366 = vadd.f32 %v2278, %v2365
        %v2367 = vpop.f32.mrf.mxu0
        %2368 = vmatprep.mubr.f32.mxu0 %v2155
        %2369 = vmatmul.mubr.f32.gmra.mxu0 %v2231
        %v2370 = vpop.f32.mrf.mxu0
        %v2371 = vadd.f32 %v2278, %v2370
        %v2372 = vpop.f32.mrf.mxu0
        %2373 = vmatprep.mubr.f32.mxu0 %v2156
        %2374 = vmatmul.mubr.f32.gmra.mxu0 %v2232
        %v2375 = vpop.f32.mrf.mxu0
        %v2376 = vadd.f32 %v2278, %v2375
        %v2377 = vpop.f32.mrf.mxu0
        %2378 = vmatprep.mubr.f32.mxu0 %v2157
        %2379 = vmatmul.mubr.f32.gmra.mxu0 %v2233
        %v2380 = vpop.f32.mrf.mxu0
        %v2381 = vadd.f32 %v2278, %v2380
        %v2382 = vpop.f32.mrf.mxu0
        %2383 = vmatprep.mubr.f32.mxu0 %v2158
        %2384 = vmatmul.mubr.f32.gmra.mxu0 %v2234
        %v2385 = vpop.f32.mrf.mxu0
        %v2386 = vadd.f32 %v2278, %v2385
        %v2387 = vpop.f32.mrf.mxu0
        %2388 = vmatprep.mubr.f32.mxu0 %v2159
        %2389 = vmatmul.mubr.f32.gmra.mxu0 %v2235
        %v2390 = vpop.f32.mrf.mxu0
        %v2391 = vadd.f32 %v2278, %v2390
        %v2392 = vpop.f32.mrf.mxu0
        %2393 = vmatprep.mubr.f32.mxu0 %v2160
        %2394 = vmatmul.mubr.f32.gmra.mxu0 %v2236
        %v2395 = vpop.f32.mrf.mxu0
        %v2396 = vadd.f32 %v2278, %v2395
        %v2397 = vpop.f32.mrf.mxu0
        %2398 = vmatprep.mubr.f32.mxu0 %v2161
        %2399 = vmatmul.mubr.f32.gmra.mxu0 %v2237
        %v2400 = vpop.f32.mrf.mxu0
        %v2401 = vadd.f32 %v2278, %v2400
        %v2402 = vpop.f32.mrf.mxu0
        %2403 = vmatprep.mubr.f32.mxu0 %v2162
        %2404 = vmatmul.mubr.f32.gmra.mxu0 %v2238
        %v2405 = vpop.f32.mrf.mxu0
        %v2406 = vadd.f32 %v2278, %v2405
        %v2407 = vpop.f32.mrf.mxu0
        %2408 = vmatprep.mubr.f32.mxu0 %v2163
        %2409 = vmatmul.mubr.f32.gmra.mxu0 %v2239
        %v2410 = vpop.f32.mrf.mxu0
        %v2411 = vadd.f32 %v2278, %v2410
        %v2412 = vpop.f32.mrf.mxu0
        %2413 = vmatprep.mubr.f32.mxu0 %v2164
        %2414 = vmatmul.mubr.f32.gmra.mxu0 %v2240
        %v2415 = vpop.f32.mrf.mxu0
        %v2416 = vadd.f32 %v2278, %v2415
        %v2417 = vpop.f32.mrf.mxu0
        %2418 = vmatprep.mubr.f32.mxu0 %v2165
        %2419 = vmatmul.mubr.f32.gmra.mxu0 %v2241
        %v2420 = vpop.f32.mrf.mxu0
        %v2421 = vadd.f32 %v2278, %v2420
        %v2422 = vpop.f32.mrf.mxu0
        %2423 = vdwg.mxu0
        %vm2424 = vcmp.gt.f32.partialorder %v2346, 0.0
        %vm2425 = vcmp.gt.f32.partialorder %v2351, 0.0
        %vm2426 = vcmp.gt.f32.partialorder %v2356, 0.0
        %vm2427 = vcmp.gt.f32.partialorder %v2361, 0.0
        %vm2428 = vcmp.gt.f32.partialorder %v2366, 0.0
        %vm2429 = vcmp.gt.f32.partialorder %v2371, 0.0
        %vm2430 = vcmp.gt.f32.partialorder %v2376, 0.0
        %vm2431 = vcmp.gt.f32.partialorder %v2381, 0.0
        %vm2432 = vcmp.gt.f32.partialorder %v2386, 0.0
        %vm2433 = vcmp.gt.f32.partialorder %v2391, 0.0
        %vm2434 = vcmp.gt.f32.partialorder %v2396, 0.0
        %vm2435 = vcmp.gt.f32.partialorder %v2401, 0.0
        %vm2436 = vcmp.gt.f32.partialorder %v2406, 0.0
        %vm2437 = vcmp.gt.f32.partialorder %v2411, 0.0
        %vm2438 = vcmp.gt.f32.partialorder %v2416, 0.0
        %vm2439 = vcmp.gt.f32.partialorder %v2421, 0.0
        %v2440 = vstv %s2182
        %v2441 = vmul.f32 %v2440, %v2346
        %v2442 = vmul.f32 %v2440, %v2351
        %v2443 = vmul.f32 %v2440, %v2356
        %v2444 = vmul.f32 %v2440, %v2361
        %v2445 = vmul.f32 %v2440, %v2366
        %v2446 = vmul.f32 %v2440, %v2371
        %v2447 = vmul.f32 %v2440, %v2376
        %v2448 = vmul.f32 %v2440, %v2381
        %v2449 = vmul.f32 %v2440, %v2386
        %v2450 = vmul.f32 %v2440, %v2391
        %v2451 = vmul.f32 %v2440, %v2396
        %v2452 = vmul.f32 %v2440, %v2401
        %v2453 = vmul.f32 %v2440, %v2406
        %v2454 = vmul.f32 %v2440, %v2411
        %v2455 = vmul.f32 %v2440, %v2416
        %v2456 = vmul.f32 %v2440, %v2421
        %v2457 = vsel %vm2424, %v2346, %v2441
        %v2458 = vsel %vm2425, %v2351, %v2442
        %v2459 = vsel %vm2426, %v2356, %v2443
        %v2460 = vsel %vm2427, %v2361, %v2444
        %v2461 = vsel %vm2428, %v2366, %v2445
        %v2462 = vsel %vm2429, %v2371, %v2446
        %v2463 = vsel %vm2430, %v2376, %v2447
        %v2464 = vsel %vm2431, %v2381, %v2448
        %v2465 = vsel %vm2432, %v2386, %v2449
        %v2466 = vsel %vm2433, %v2391, %v2450
        %v2467 = vsel %vm2434, %v2396, %v2451
        %v2468 = vsel %vm2435, %v2401, %v2452
        %v2469 = vsel %vm2436, %v2406, %v2453
        %v2470 = vsel %vm2437, %v2411, %v2454
        %v2471 = vsel %vm2438, %v2416, %v2455
        %v2472 = vsel %vm2439, %v2421, %v2456
        %v2473 = vrot.slane %v2457, 4
        %v2474 = vrot.slane %v2458, 4
        %v2475 = vrot.slane %v2459, 4
        %v2476 = vrot.slane %v2460, 4
        %v2477 = vrot.slane %v2461, 4
        %v2478 = vrot.slane %v2462, 4
        %v2479 = vrot.slane %v2463, 4
        %v2480 = vrot.slane %v2464, 4
        %v2481 = vrot.slane %v2465, 4
        %v2482 = vrot.slane %v2466, 4
        %v2483 = vrot.slane %v2467, 4
        %v2484 = vrot.slane %v2468, 4
        %v2485 = vrot.slane %v2469, 4
        %v2486 = vrot.slane %v2470, 4
        %v2487 = vrot.slane %v2471, 4
        %v2488 = vrot.slane %v2472, 4
        %v2489 = vsel %vm2209, %v2487, %v2488
        %v2490 = vsel %vm2209, %v2486, %v2487
        %v2491 = vsel %vm2209, %v2485, %v2486
        %v2492 = vsel %vm2209, %v2484, %v2485
        %v2493 = vsel %vm2209, %v2483, %v2484
        %v2494 = vsel %vm2209, %v2482, %v2483
        %v2495 = vsel %vm2209, %v2481, %v2482
        %v2496 = vsel %vm2209, %v2480, %v2481
        %v2497 = vsel %vm2209, %v2479, %v2480
        %v2498 = vsel %vm2209, %v2478, %v2479
        %v2499 = vsel %vm2209, %v2477, %v2478
        %v2500 = vsel %vm2209, %v2476, %v2477
        %v2501 = vsel %vm2209, %v2475, %v2476
        %v2502 = vsel %vm2209, %v2474, %v2475
        %v2503 = vsel %vm2209, %v2473, %v2474
        %v2504 = vsel %vm2209, %v2488, %v2473
        %v2505 = vsel %vm2185, %v2504, 0.0
        %v2506 = vsel %vm2186, %v2503, 0.0
        %v2507 = vsel %vm2187, %v2502, 0.0
        %v2508 = vsel %vm2188, %v2501, 0.0
        %v2509 = vsel %vm2189, %v2500, 0.0
        %v2510 = vsel %vm2190, %v2499, 0.0
        %v2511 = vsel %vm2191, %v2498, 0.0
        %v2512 = vsel %vm2192, %v2497, 0.0
        %v2513 = vsel %vm2185, %v2496, 0.0
        %v2514 = vsel %vm2186, %v2495, 0.0
        %v2515 = vsel %vm2187, %v2494, 0.0
        %v2516 = vsel %vm2188, %v2493, 0.0
        %v2517 = vsel %vm2189, %v2492, 0.0
        %v2518 = vsel %vm2190, %v2491, 0.0
        %v2519 = vsel %vm2191, %v2490, 0.0
        %v2520 = vsel %vm2192, %v2489, 0.0
        %s2521 = scalar_lea.vmem [#allocation5], 1280
        %v2522 = vld [vmem:[%s2521] sm:$0xff]
        %v2523 = vld [vmem:[%s2521 + $0x8] sm:$0xff]
        %v2524 = vld [vmem:[%s2521 + $0x10] sm:$0xff]
        %v2525 = vld [vmem:[%s2521 + $0x18] sm:$0xff]
        %v2526 = vld [vmem:[%s2521 + $0x20] sm:$0xff]
        %v2527 = vld [vmem:[%s2521 + $0x28] sm:$0xff]
        %v2528 = vld [vmem:[%s2521 + $0x30] sm:$0xff]
        %v2529 = vld [vmem:[%s2521 + $0x38] sm:$0xff]
        %v2530 = vld [vmem:[%s2521 + $0x40] sm:$0xff]
        %v2531 = vld [vmem:[%s2521 + $0x48] sm:$0xff]
        %v2532 = vld [vmem:[%s2521 + $0x50] sm:$0xff]
        %v2533 = vld [vmem:[%s2521 + $0x58] sm:$0xff]
        %v2534 = vld [vmem:[%s2521 + $0x60] sm:$0xff]
        %v2535 = vld [vmem:[%s2521 + $0x68] sm:$0xff]
        %v2536 = vld [vmem:[%s2521 + $0x70] sm:$0xff]
        %v2537 = vld [vmem:[%s2521 + $0x78] sm:$0xff]
        %v2538 = vld [vmem:[%s2521 + $0x80] sm:$0xff]
        %v2539 = vld [vmem:[%s2521 + $0x88] sm:$0xff]
        %v2540 = vld [vmem:[%s2521 + $0x90] sm:$0xff]
        %v2541 = vld [vmem:[%s2521 + $0x98] sm:$0xff]
        %v2542 = vld [vmem:[%s2521 + $0xa0] sm:$0xff]
        %v2543 = vld [vmem:[%s2521 + $0xa8] sm:$0xff]
        %v2544 = vld [vmem:[%s2521 + $0xb0] sm:$0xff]
        %v2545 = vld [vmem:[%s2521 + $0xb8] sm:$0xff]
        %v2546 = vld [vmem:[%s2521 + $0xc0] sm:$0xff]
        %v2547 = vld [vmem:[%s2521 + $0xc8] sm:$0xff]
        %v2548 = vld [vmem:[%s2521 + $0xd0] sm:$0xff]
        %v2549 = vld [vmem:[%s2521 + $0xd8] sm:$0xff]
        %v2550 = vld [vmem:[%s2521 + $0xe0] sm:$0xff]
        %v2551 = vld [vmem:[%s2521 + $0xe8] sm:$0xff]
        %v2552 = vld [vmem:[%s2521 + $0xf0] sm:$0xff]
        %v2553 = vld [vmem:[%s2521 + $0xf8] sm:$0xff]
        %v2554 = vlaneseq
        %v2555 = vshrl.u32 %v2554, 7
        %v2556 = vsub.s32 0, %v2555
        %v2557 = vrot.slane %v364, %v2556
        %2558 = vmatprep.subr.mxu0 0.0
        %2559 = vmatpush1.msra.mxu0 %v2537
        %2560 = vmatprep.subr.mxu0 0.0
        %2561 = vmatpush1.msra.mxu0 %v2536
        %2562 = vmatprep.subr.mxu0 0.0
        %2563 = vmatpush1.msra.mxu0 %v2535
        %2564 = vmatprep.subr.mxu0 0.0
        %2565 = vmatpush1.msra.mxu0 %v2534
        %2566 = vmatprep.subr.mxu0 0.0
        %2567 = vmatpush1.msra.mxu0 %v2533
        %2568 = vmatprep.subr.mxu0 0.0
        %2569 = vmatpush1.msra.mxu0 %v2532
        %2570 = vmatprep.subr.mxu0 0.0
        %2571 = vmatpush1.msra.mxu0 %v2531
        %2572 = vmatprep.subr.mxu0 0.0
        %2573 = vmatpush1.msra.mxu0 %v2530
        %2574 = vmatprep.subr.mxu0 0.0
        %2575 = vmatpush1.msra.mxu0 %v2529
        %2576 = vmatprep.subr.mxu0 0.0
        %2577 = vmatpush1.msra.mxu0 %v2528
        %2578 = vmatprep.subr.mxu0 0.0
        %2579 = vmatpush1.msra.mxu0 %v2527
        %2580 = vmatprep.subr.mxu0 0.0
        %2581 = vmatpush1.msra.mxu0 %v2526
        %2582 = vmatprep.subr.mxu0 0.0
        %2583 = vmatpush1.msra.mxu0 %v2525
        %2584 = vmatprep.subr.mxu0 0.0
        %2585 = vmatpush1.msra.mxu0 %v2524
        %2586 = vmatprep.subr.mxu0 0.0
        %2587 = vmatpush1.msra.mxu0 %v2523
        %2588 = vmatprep.subr.mxu0 0.0
        %2589 = vmatpush1.msra.mxu0 %v2522
        %2590 = vmatprep.subr.mxu0 0.0
        %2591 = vmatpush2.msra.mxu0 %v2553
        %2592 = vmatprep.subr.mxu0 0.0
        %2593 = vmatpush2.msra.mxu0 %v2552
        %2594 = vmatprep.subr.mxu0 0.0
        %2595 = vmatpush2.msra.mxu0 %v2551
        %2596 = vmatprep.subr.mxu0 0.0
        %2597 = vmatpush2.msra.mxu0 %v2550
        %2598 = vmatprep.subr.mxu0 0.0
        %2599 = vmatpush2.msra.mxu0 %v2549
        %2600 = vmatprep.subr.mxu0 0.0
        %2601 = vmatpush2.msra.mxu0 %v2548
        %2602 = vmatprep.subr.mxu0 0.0
        %2603 = vmatpush2.msra.mxu0 %v2547
        %2604 = vmatprep.subr.mxu0 0.0
        %2605 = vmatpush2.msra.mxu0 %v2546
        %2606 = vmatprep.subr.mxu0 0.0
        %2607 = vmatpush2.msra.mxu0 %v2545
        %2608 = vmatprep.subr.mxu0 0.0
        %2609 = vmatpush2.msra.mxu0 %v2544
        %2610 = vmatprep.subr.mxu0 0.0
        %2611 = vmatpush2.msra.mxu0 %v2543
        %2612 = vmatprep.subr.mxu0 0.0
        %2613 = vmatpush2.msra.mxu0 %v2542
        %2614 = vmatprep.subr.mxu0 0.0
        %2615 = vmatpush2.msra.mxu0 %v2541
        %2616 = vmatprep.subr.mxu0 0.0
        %2617 = vmatpush2.msra.mxu0 %v2540
        %2618 = vmatprep.subr.mxu0 0.0
        %2619 = vmatpush2.msra.mxu0 %v2539
        %2620 = vmatprep.subr.mxu0 0.0
        %2621 = vmatpush2.msra.mxu0 %v2538
        %2622 = vmatprep.mubr.f32.mxu0 %v2457
        %2623 = vmatmul.mubr.f32.gmra.mxu0 %v2505
        %v2624 = vpop.f32.mrf.mxu0
        %v2625 = vadd.f32 %v2557, %v2624
        %v2626 = vpop.f32.mrf.mxu0
        %2627 = vmatprep.mubr.f32.mxu0 %v2458
        %2628 = vmatmul.mubr.f32.gmra.mxu0 %v2506
        %v2629 = vpop.f32.mrf.mxu0
        %v2630 = vadd.f32 %v2557, %v2629
        %v2631 = vpop.f32.mrf.mxu0
        %2632 = vmatprep.mubr.f32.mxu0 %v2459
        %2633 = vmatmul.mubr.f32.gmra.mxu0 %v2507
        %v2634 = vpop.f32.mrf.mxu0
        %v2635 = vadd.f32 %v2557, %v2634
        %v2636 = vpop.f32.mrf.mxu0
        %2637 = vmatprep.mubr.f32.mxu0 %v2460
        %2638 = vmatmul.mubr.f32.gmra.mxu0 %v2508
        %v2639 = vpop.f32.mrf.mxu0
        %v2640 = vadd.f32 %v2557, %v2639
        %v2641 = vpop.f32.mrf.mxu0
        %2642 = vmatprep.mubr.f32.mxu0 %v2461
        %2643 = vmatmul.mubr.f32.gmra.mxu0 %v2509
        %v2644 = vpop.f32.mrf.mxu0
        %v2645 = vadd.f32 %v2557, %v2644
        %v2646 = vpop.f32.mrf.mxu0
        %2647 = vmatprep.mubr.f32.mxu0 %v2462
        %2648 = vmatmul.mubr.f32.gmra.mxu0 %v2510
        %v2649 = vpop.f32.mrf.mxu0
        %v2650 = vadd.f32 %v2557, %v2649
        %v2651 = vpop.f32.mrf.mxu0
        %2652 = vmatprep.mubr.f32.mxu0 %v2463
        %2653 = vmatmul.mubr.f32.gmra.mxu0 %v2511
        %v2654 = vpop.f32.mrf.mxu0
        %v2655 = vadd.f32 %v2557, %v2654
        %v2656 = vpop.f32.mrf.mxu0
        %2657 = vmatprep.mubr.f32.mxu0 %v2464
        %2658 = vmatmul.mubr.f32.gmra.mxu0 %v2512
        %v2659 = vpop.f32.mrf.mxu0
        %v2660 = vadd.f32 %v2557, %v2659
        %v2661 = vpop.f32.mrf.mxu0
        %2662 = vmatprep.mubr.f32.mxu0 %v2465
        %2663 = vmatmul.mubr.f32.gmra.mxu0 %v2513
        %v2664 = vpop.f32.mrf.mxu0
        %v2665 = vadd.f32 %v2557, %v2664
        %v2666 = vpop.f32.mrf.mxu0
        %2667 = vmatprep.mubr.f32.mxu0 %v2466
        %2668 = vmatmul.mubr.f32.gmra.mxu0 %v2514
        %v2669 = vpop.f32.mrf.mxu0
        %v2670 = vadd.f32 %v2557, %v2669
        %v2671 = vpop.f32.mrf.mxu0
        %2672 = vmatprep.mubr.f32.mxu0 %v2467
        %2673 = vmatmul.mubr.f32.gmra.mxu0 %v2515
        %v2674 = vpop.f32.mrf.mxu0
        %v2675 = vadd.f32 %v2557, %v2674
        %v2676 = vpop.f32.mrf.mxu0
        %2677 = vmatprep.mubr.f32.mxu0 %v2468
        %2678 = vmatmul.mubr.f32.gmra.mxu0 %v2516
        %v2679 = vpop.f32.mrf.mxu0
        %v2680 = vadd.f32 %v2557, %v2679
        %v2681 = vpop.f32.mrf.mxu0
        %2682 = vmatprep.mubr.f32.mxu0 %v2469
        %2683 = vmatmul.mubr.f32.gmra.mxu0 %v2517
        %v2684 = vpop.f32.mrf.mxu0
        %v2685 = vadd.f32 %v2557, %v2684
        %v2686 = vpop.f32.mrf.mxu0
        %2687 = vmatprep.mubr.f32.mxu0 %v2470
        %2688 = vmatmul.mubr.f32.gmra.mxu0 %v2518
        %v2689 = vpop.f32.mrf.mxu0
        %v2690 = vadd.f32 %v2557, %v2689
        %v2691 = vpop.f32.mrf.mxu0
        %2692 = vmatprep.mubr.f32.mxu0 %v2471
        %2693 = vmatmul.mubr.f32.gmra.mxu0 %v2519
        %v2694 = vpop.f32.mrf.mxu0
        %v2695 = vadd.f32 %v2557, %v2694
        %v2696 = vpop.f32.mrf.mxu0
        %2697 = vmatprep.mubr.f32.mxu0 %v2472
        %2698 = vmatmul.mubr.f32.gmra.mxu0 %v2520
        %v2699 = vpop.f32.mrf.mxu0
        %v2700 = vadd.f32 %v2557, %v2699
        %v2701 = vpop.f32.mrf.mxu0
        %2702 = vdwg.mxu0
        %vm2703 = vcmp.gt.f32.partialorder %v2625, 0.0
        %vm2704 = vcmp.gt.f32.partialorder %v2630, 0.0
        %vm2705 = vcmp.gt.f32.partialorder %v2635, 0.0
        %vm2706 = vcmp.gt.f32.partialorder %v2640, 0.0
        %vm2707 = vcmp.gt.f32.partialorder %v2645, 0.0
        %vm2708 = vcmp.gt.f32.partialorder %v2650, 0.0
        %vm2709 = vcmp.gt.f32.partialorder %v2655, 0.0
        %vm2710 = vcmp.gt.f32.partialorder %v2660, 0.0
        %vm2711 = vcmp.gt.f32.partialorder %v2665, 0.0
        %vm2712 = vcmp.gt.f32.partialorder %v2670, 0.0
        %vm2713 = vcmp.gt.f32.partialorder %v2675, 0.0
        %vm2714 = vcmp.gt.f32.partialorder %v2680, 0.0
        %vm2715 = vcmp.gt.f32.partialorder %v2685, 0.0
        %vm2716 = vcmp.gt.f32.partialorder %v2690, 0.0
        %vm2717 = vcmp.gt.f32.partialorder %v2695, 0.0
        %vm2718 = vcmp.gt.f32.partialorder %v2700, 0.0
        %v2719 = vstv %s2183
        %v2720 = vmul.f32 %v2719, %v2625
        %v2721 = vmul.f32 %v2719, %v2630
        %v2722 = vmul.f32 %v2719, %v2635
        %v2723 = vmul.f32 %v2719, %v2640
        %v2724 = vmul.f32 %v2719, %v2645
        %v2725 = vmul.f32 %v2719, %v2650
        %v2726 = vmul.f32 %v2719, %v2655
        %v2727 = vmul.f32 %v2719, %v2660
        %v2728 = vmul.f32 %v2719, %v2665
        %v2729 = vmul.f32 %v2719, %v2670
        %v2730 = vmul.f32 %v2719, %v2675
        %v2731 = vmul.f32 %v2719, %v2680
        %v2732 = vmul.f32 %v2719, %v2685
        %v2733 = vmul.f32 %v2719, %v2690
        %v2734 = vmul.f32 %v2719, %v2695
        %v2735 = vmul.f32 %v2719, %v2700
        %v2736 = vsel %vm2703, %v2625, %v2720
        %v2737 = vsel %vm2704, %v2630, %v2721
        %v2738 = vsel %vm2705, %v2635, %v2722
        %v2739 = vsel %vm2706, %v2640, %v2723
        %v2740 = vsel %vm2707, %v2645, %v2724
        %v2741 = vsel %vm2708, %v2650, %v2725
        %v2742 = vsel %vm2709, %v2655, %v2726
        %v2743 = vsel %vm2710, %v2660, %v2727
        %v2744 = vsel %vm2711, %v2665, %v2728
        %v2745 = vsel %vm2712, %v2670, %v2729
        %v2746 = vsel %vm2713, %v2675, %v2730
        %v2747 = vsel %vm2714, %v2680, %v2731
        %v2748 = vsel %vm2715, %v2685, %v2732
        %v2749 = vsel %vm2716, %v2690, %v2733
        %v2750 = vsel %vm2717, %v2695, %v2734
        %v2751 = vsel %vm2718, %v2700, %v2735
        %v2752 = vadd.f32 %v2736, %v2150
        %v2753 = vadd.f32 %v2737, %v2151
        %v2754 = vadd.f32 %v2738, %v2152
        %v2755 = vadd.f32 %v2739, %v2153
        %v2756 = vadd.f32 %v2740, %v2154
        %v2757 = vadd.f32 %v2741, %v2155
        %v2758 = vadd.f32 %v2742, %v2156
        %v2759 = vadd.f32 %v2743, %v2157
        %v2760 = vadd.f32 %v2744, %v2158
        %v2761 = vadd.f32 %v2745, %v2159
        %v2762 = vadd.f32 %v2746, %v2160
        %v2763 = vadd.f32 %v2747, %v2161
        %v2764 = vadd.f32 %v2748, %v2162
        %v2765 = vadd.f32 %v2749, %v2163
        %v2766 = vadd.f32 %v2750, %v2164
        %v2767 = vadd.f32 %v2751, %v2165
        %vm2768 = vcmp.gt.f32.partialorder %v2752, 0.0
        %vm2769 = vcmp.gt.f32.partialorder %v2753, 0.0
        %vm2770 = vcmp.gt.f32.partialorder %v2754, 0.0
        %vm2771 = vcmp.gt.f32.partialorder %v2755, 0.0
        %vm2772 = vcmp.gt.f32.partialorder %v2756, 0.0
        %vm2773 = vcmp.gt.f32.partialorder %v2757, 0.0
        %vm2774 = vcmp.gt.f32.partialorder %v2758, 0.0
        %vm2775 = vcmp.gt.f32.partialorder %v2759, 0.0
        %vm2776 = vcmp.gt.f32.partialorder %v2760, 0.0
        %vm2777 = vcmp.gt.f32.partialorder %v2761, 0.0
        %vm2778 = vcmp.gt.f32.partialorder %v2762, 0.0
        %vm2779 = vcmp.gt.f32.partialorder %v2763, 0.0
        %vm2780 = vcmp.gt.f32.partialorder %v2764, 0.0
        %vm2781 = vcmp.gt.f32.partialorder %v2765, 0.0
        %vm2782 = vcmp.gt.f32.partialorder %v2766, 0.0
        %vm2783 = vcmp.gt.f32.partialorder %v2767, 0.0
        %v2784 = vstv %s2184
        %v2785 = vmul.f32 %v2784, %v2752
        %v2786 = vmul.f32 %v2784, %v2753
        %v2787 = vmul.f32 %v2784, %v2754
        %v2788 = vmul.f32 %v2784, %v2755
        %v2789 = vmul.f32 %v2784, %v2756
        %v2790 = vmul.f32 %v2784, %v2757
        %v2791 = vmul.f32 %v2784, %v2758
        %v2792 = vmul.f32 %v2784, %v2759
        %v2793 = vmul.f32 %v2784, %v2760
        %v2794 = vmul.f32 %v2784, %v2761
        %v2795 = vmul.f32 %v2784, %v2762
        %v2796 = vmul.f32 %v2784, %v2763
        %v2797 = vmul.f32 %v2784, %v2764
        %v2798 = vmul.f32 %v2784, %v2765
        %v2799 = vmul.f32 %v2784, %v2766
        %v2800 = vmul.f32 %v2784, %v2767
        %v2801 = vsel %vm2768, %v2752, %v2785
        %v2802 = vsel %vm2769, %v2753, %v2786
        %v2803 = vsel %vm2770, %v2754, %v2787
        %v2804 = vsel %vm2771, %v2755, %v2788
        %v2805 = vsel %vm2772, %v2756, %v2789
        %v2806 = vsel %vm2773, %v2757, %v2790
        %v2807 = vsel %vm2774, %v2758, %v2791
        %v2808 = vsel %vm2775, %v2759, %v2792
        %v2809 = vsel %vm2776, %v2760, %v2793
        %v2810 = vsel %vm2777, %v2761, %v2794
        %v2811 = vsel %vm2778, %v2762, %v2795
        %v2812 = vsel %vm2779, %v2763, %v2796
        %v2813 = vsel %vm2780, %v2764, %v2797
        %v2814 = vsel %vm2781, %v2765, %v2798
        %v2815 = vsel %vm2782, %v2766, %v2799
        %v2816 = vsel %vm2783, %v2767, %v2800
        %v2817 = vadd.f32 %v2166, %v2736
        %v2818 = vadd.f32 %v2167, %v2737
        %v2819 = vadd.f32 %v2168, %v2738
        %v2820 = vadd.f32 %v2169, %v2739
        %v2821 = vadd.f32 %v2170, %v2740
        %v2822 = vadd.f32 %v2171, %v2741
        %v2823 = vadd.f32 %v2172, %v2742
        %v2824 = vadd.f32 %v2173, %v2743
        %v2825 = vadd.f32 %v2174, %v2744
        %v2826 = vadd.f32 %v2175, %v2745
        %v2827 = vadd.f32 %v2176, %v2746
        %v2828 = vadd.f32 %v2177, %v2747
        %v2829 = vadd.f32 %v2178, %v2748
        %v2830 = vadd.f32 %v2179, %v2749
        %v2831 = vadd.f32 %v2180, %v2750
        %v2832 = vadd.f32 %v2181, %v2751
        %s2833 = sld [smem:[#allocation2 + $0xc]]
        %s2834 = sld [smem:[#allocation2 + $0xd]]
        %s2835 = sld [smem:[#allocation2 + $0xe]]
        %vm2836 = vcmp.ge.s32.totalorder %v382, 8
        %vm2837 = vcmp.ge.s32.totalorder %v383, 8
        %vm2838 = vcmp.ge.s32.totalorder %v384, 8
        %vm2839 = vcmp.ge.s32.totalorder %v385, 8
        %vm2840 = vcmp.ge.s32.totalorder %v386, 8
        %vm2841 = vcmp.ge.s32.totalorder %v387, 8
        %vm2842 = vcmp.ge.s32.totalorder %v388, 8
        %vm2843 = vcmp.ge.s32.totalorder %v389, 8
        %v2844 = vsel %vm2836, %v2816, 0.0
        %v2845 = vsel %vm2837, %v2801, 0.0
        %v2846 = vsel %vm2838, %v2802, 0.0
        %v2847 = vsel %vm2839, %v2803, 0.0
        %v2848 = vsel %vm2840, %v2804, 0.0
        %v2849 = vsel %vm2841, %v2805, 0.0
        %v2850 = vsel %vm2842, %v2806, 0.0
        %v2851 = vsel %vm2843, %v2807, 0.0
        %v2852 = vsel %vm2836, %v2808, 0.0
        %v2853 = vsel %vm2837, %v2809, 0.0
        %v2854 = vsel %vm2838, %v2810, 0.0
        %v2855 = vsel %vm2839, %v2811, 0.0
        %v2856 = vsel %vm2840, %v2812, 0.0
        %v2857 = vsel %vm2841, %v2813, 0.0
        %v2858 = vsel %vm2842, %v2814, 0.0
        %v2859 = vsel %vm2843, %v2815, 0.0
        %s2860 = scalar_lea.vmem [#allocation5], 1536
        %v2861 = vld [vmem:[%s2860] sm:$0xff]
        %v2862 = vld [vmem:[%s2860 + $0x8] sm:$0xff]
        %v2863 = vld [vmem:[%s2860 + $0x10] sm:$0xff]
        %v2864 = vld [vmem:[%s2860 + $0x18] sm:$0xff]
        %v2865 = vld [vmem:[%s2860 + $0x20] sm:$0xff]
        %v2866 = vld [vmem:[%s2860 + $0x28] sm:$0xff]
        %v2867 = vld [vmem:[%s2860 + $0x30] sm:$0xff]
        %v2868 = vld [vmem:[%s2860 + $0x38] sm:$0xff]
        %v2869 = vld [vmem:[%s2860 + $0x40] sm:$0xff]
        %v2870 = vld [vmem:[%s2860 + $0x48] sm:$0xff]
        %v2871 = vld [vmem:[%s2860 + $0x50] sm:$0xff]
        %v2872 = vld [vmem:[%s2860 + $0x58] sm:$0xff]
        %v2873 = vld [vmem:[%s2860 + $0x60] sm:$0xff]
        %v2874 = vld [vmem:[%s2860 + $0x68] sm:$0xff]
        %v2875 = vld [vmem:[%s2860 + $0x70] sm:$0xff]
        %v2876 = vld [vmem:[%s2860 + $0x78] sm:$0xff]
        %v2877 = vld [vmem:[%s2860 + $0x80] sm:$0xff]
        %v2878 = vld [vmem:[%s2860 + $0x88] sm:$0xff]
        %v2879 = vld [vmem:[%s2860 + $0x90] sm:$0xff]
        %v2880 = vld [vmem:[%s2860 + $0x98] sm:$0xff]
        %v2881 = vld [vmem:[%s2860 + $0xa0] sm:$0xff]
        %v2882 = vld [vmem:[%s2860 + $0xa8] sm:$0xff]
        %v2883 = vld [vmem:[%s2860 + $0xb0] sm:$0xff]
        %v2884 = vld [vmem:[%s2860 + $0xb8] sm:$0xff]
        %v2885 = vld [vmem:[%s2860 + $0xc0] sm:$0xff]
        %v2886 = vld [vmem:[%s2860 + $0xc8] sm:$0xff]
        %v2887 = vld [vmem:[%s2860 + $0xd0] sm:$0xff]
        %v2888 = vld [vmem:[%s2860 + $0xd8] sm:$0xff]
        %v2889 = vld [vmem:[%s2860 + $0xe0] sm:$0xff]
        %v2890 = vld [vmem:[%s2860 + $0xe8] sm:$0xff]
        %v2891 = vld [vmem:[%s2860 + $0xf0] sm:$0xff]
        %v2892 = vld [vmem:[%s2860 + $0xf8] sm:$0xff]
        %v2893 = vlaneseq
        %v2894 = vshrl.u32 %v2893, 7
        %v2895 = vsub.s32 1, %v2894
        %v2896 = vrot.slane %v364, %v2895
        %2897 = vmatprep.subr.mxu0 0.0
        %2898 = vmatpush1.msra.mxu0 %v2876
        %2899 = vmatprep.subr.mxu0 0.0
        %2900 = vmatpush1.msra.mxu0 %v2875
        %2901 = vmatprep.subr.mxu0 0.0
        %2902 = vmatpush1.msra.mxu0 %v2874
        %2903 = vmatprep.subr.mxu0 0.0
        %2904 = vmatpush1.msra.mxu0 %v2873
        %2905 = vmatprep.subr.mxu0 0.0
        %2906 = vmatpush1.msra.mxu0 %v2872
        %2907 = vmatprep.subr.mxu0 0.0
        %2908 = vmatpush1.msra.mxu0 %v2871
        %2909 = vmatprep.subr.mxu0 0.0
        %2910 = vmatpush1.msra.mxu0 %v2870
        %2911 = vmatprep.subr.mxu0 0.0
        %2912 = vmatpush1.msra.mxu0 %v2869
        %2913 = vmatprep.subr.mxu0 0.0
        %2914 = vmatpush1.msra.mxu0 %v2868
        %2915 = vmatprep.subr.mxu0 0.0
        %2916 = vmatpush1.msra.mxu0 %v2867
        %2917 = vmatprep.subr.mxu0 0.0
        %2918 = vmatpush1.msra.mxu0 %v2866
        %2919 = vmatprep.subr.mxu0 0.0
        %2920 = vmatpush1.msra.mxu0 %v2865
        %2921 = vmatprep.subr.mxu0 0.0
        %2922 = vmatpush1.msra.mxu0 %v2864
        %2923 = vmatprep.subr.mxu0 0.0
        %2924 = vmatpush1.msra.mxu0 %v2863
        %2925 = vmatprep.subr.mxu0 0.0
        %2926 = vmatpush1.msra.mxu0 %v2862
        %2927 = vmatprep.subr.mxu0 0.0
        %2928 = vmatpush1.msra.mxu0 %v2861
        %2929 = vmatprep.subr.mxu0 0.0
        %2930 = vmatpush2.msra.mxu0 %v2892
        %2931 = vmatprep.subr.mxu0 0.0
        %2932 = vmatpush2.msra.mxu0 %v2891
        %2933 = vmatprep.subr.mxu0 0.0
        %2934 = vmatpush2.msra.mxu0 %v2890
        %2935 = vmatprep.subr.mxu0 0.0
        %2936 = vmatpush2.msra.mxu0 %v2889
        %2937 = vmatprep.subr.mxu0 0.0
        %2938 = vmatpush2.msra.mxu0 %v2888
        %2939 = vmatprep.subr.mxu0 0.0
        %2940 = vmatpush2.msra.mxu0 %v2887
        %2941 = vmatprep.subr.mxu0 0.0
        %2942 = vmatpush2.msra.mxu0 %v2886
        %2943 = vmatprep.subr.mxu0 0.0
        %2944 = vmatpush2.msra.mxu0 %v2885
        %2945 = vmatprep.subr.mxu0 0.0
        %2946 = vmatpush2.msra.mxu0 %v2884
        %2947 = vmatprep.subr.mxu0 0.0
        %2948 = vmatpush2.msra.mxu0 %v2883
        %2949 = vmatprep.subr.mxu0 0.0
        %2950 = vmatpush2.msra.mxu0 %v2882
        %2951 = vmatprep.subr.mxu0 0.0
        %2952 = vmatpush2.msra.mxu0 %v2881
        %2953 = vmatprep.subr.mxu0 0.0
        %2954 = vmatpush2.msra.mxu0 %v2880
        %2955 = vmatprep.subr.mxu0 0.0
        %2956 = vmatpush2.msra.mxu0 %v2879
        %2957 = vmatprep.subr.mxu0 0.0
        %2958 = vmatpush2.msra.mxu0 %v2878
        %2959 = vmatprep.subr.mxu0 0.0
        %2960 = vmatpush2.msra.mxu0 %v2877
        %2961 = vmatprep.mubr.f32.mxu0 %v2801
        %2962 = vmatmul.mubr.f32.gmra.mxu0 %v2844
        %v2963 = vpop.f32.mrf.mxu0
        %v2964 = vadd.f32 %v2896, %v2963
        %v2965 = vpop.f32.mrf.mxu0
        %2966 = vmatprep.mubr.f32.mxu0 %v2802
        %2967 = vmatmul.mubr.f32.gmra.mxu0 %v2845
        %v2968 = vpop.f32.mrf.mxu0
        %v2969 = vadd.f32 %v2896, %v2968
        %v2970 = vpop.f32.mrf.mxu0
        %2971 = vmatprep.mubr.f32.mxu0 %v2803
        %2972 = vmatmul.mubr.f32.gmra.mxu0 %v2846
        %v2973 = vpop.f32.mrf.mxu0
        %v2974 = vadd.f32 %v2896, %v2973
        %v2975 = vpop.f32.mrf.mxu0
        %2976 = vmatprep.mubr.f32.mxu0 %v2804
        %2977 = vmatmul.mubr.f32.gmra.mxu0 %v2847
        %v2978 = vpop.f32.mrf.mxu0
        %v2979 = vadd.f32 %v2896, %v2978
        %v2980 = vpop.f32.mrf.mxu0
        %2981 = vmatprep.mubr.f32.mxu0 %v2805
        %2982 = vmatmul.mubr.f32.gmra.mxu0 %v2848
        %v2983 = vpop.f32.mrf.mxu0
        %v2984 = vadd.f32 %v2896, %v2983
        %v2985 = vpop.f32.mrf.mxu0
        %2986 = vmatprep.mubr.f32.mxu0 %v2806
        %2987 = vmatmul.mubr.f32.gmra.mxu0 %v2849
        %v2988 = vpop.f32.mrf.mxu0
        %v2989 = vadd.f32 %v2896, %v2988
        %v2990 = vpop.f32.mrf.mxu0
        %2991 = vmatprep.mubr.f32.mxu0 %v2807
        %2992 = vmatmul.mubr.f32.gmra.mxu0 %v2850
        %v2993 = vpop.f32.mrf.mxu0
        %v2994 = vadd.f32 %v2896, %v2993
        %v2995 = vpop.f32.mrf.mxu0
        %2996 = vmatprep.mubr.f32.mxu0 %v2808
        %2997 = vmatmul.mubr.f32.gmra.mxu0 %v2851
        %v2998 = vpop.f32.mrf.mxu0
        %v2999 = vadd.f32 %v2896, %v2998
        %v3000 = vpop.f32.mrf.mxu0
        %3001 = vmatprep.mubr.f32.mxu0 %v2809
        %3002 = vmatmul.mubr.f32.gmra.mxu0 %v2852
        %v3003 = vpop.f32.mrf.mxu0
        %v3004 = vadd.f32 %v2896, %v3003
        %v3005 = vpop.f32.mrf.mxu0
        %3006 = vmatprep.mubr.f32.mxu0 %v2810
        %3007 = vmatmul.mubr.f32.gmra.mxu0 %v2853
        %v3008 = vpop.f32.mrf.mxu0
        %v3009 = vadd.f32 %v2896, %v3008
        %v3010 = vpop.f32.mrf.mxu0
        %3011 = vmatprep.mubr.f32.mxu0 %v2811
        %3012 = vmatmul.mubr.f32.gmra.mxu0 %v2854
        %v3013 = vpop.f32.mrf.mxu0
        %v3014 = vadd.f32 %v2896, %v3013
        %v3015 = vpop.f32.mrf.mxu0
        %3016 = vmatprep.mubr.f32.mxu0 %v2812
        %3017 = vmatmul.mubr.f32.gmra.mxu0 %v2855
        %v3018 = vpop.f32.mrf.mxu0
        %v3019 = vadd.f32 %v2896, %v3018
        %v3020 = vpop.f32.mrf.mxu0
        %3021 = vmatprep.mubr.f32.mxu0 %v2813
        %3022 = vmatmul.mubr.f32.gmra.mxu0 %v2856
        %v3023 = vpop.f32.mrf.mxu0
        %v3024 = vadd.f32 %v2896, %v3023
        %v3025 = vpop.f32.mrf.mxu0
        %3026 = vmatprep.mubr.f32.mxu0 %v2814
        %3027 = vmatmul.mubr.f32.gmra.mxu0 %v2857
        %v3028 = vpop.f32.mrf.mxu0
        %v3029 = vadd.f32 %v2896, %v3028
        %v3030 = vpop.f32.mrf.mxu0
        %3031 = vmatprep.mubr.f32.mxu0 %v2815
        %3032 = vmatmul.mubr.f32.gmra.mxu0 %v2858
        %v3033 = vpop.f32.mrf.mxu0
        %v3034 = vadd.f32 %v2896, %v3033
        %v3035 = vpop.f32.mrf.mxu0
        %3036 = vmatprep.mubr.f32.mxu0 %v2816
        %3037 = vmatmul.mubr.f32.gmra.mxu0 %v2859
        %v3038 = vpop.f32.mrf.mxu0
        %v3039 = vadd.f32 %v2896, %v3038
        %v3040 = vpop.f32.mrf.mxu0
        %3041 = vdwg.mxu0
        %vm3042 = vcmp.gt.f32.partialorder %v2964, 0.0
        %vm3043 = vcmp.gt.f32.partialorder %v2969, 0.0
        %vm3044 = vcmp.gt.f32.partialorder %v2974, 0.0
        %vm3045 = vcmp.gt.f32.partialorder %v2979, 0.0
        %vm3046 = vcmp.gt.f32.partialorder %v2984, 0.0
        %vm3047 = vcmp.gt.f32.partialorder %v2989, 0.0
        %vm3048 = vcmp.gt.f32.partialorder %v2994, 0.0
        %vm3049 = vcmp.gt.f32.partialorder %v2999, 0.0
        %vm3050 = vcmp.gt.f32.partialorder %v3004, 0.0
        %vm3051 = vcmp.gt.f32.partialorder %v3009, 0.0
        %vm3052 = vcmp.gt.f32.partialorder %v3014, 0.0
        %vm3053 = vcmp.gt.f32.partialorder %v3019, 0.0
        %vm3054 = vcmp.gt.f32.partialorder %v3024, 0.0
        %vm3055 = vcmp.gt.f32.partialorder %v3029, 0.0
        %vm3056 = vcmp.gt.f32.partialorder %v3034, 0.0
        %vm3057 = vcmp.gt.f32.partialorder %v3039, 0.0
        %v3058 = vstv %s2833
        %v3059 = vmul.f32 %v3058, %v2964
        %v3060 = vmul.f32 %v3058, %v2969
        %v3061 = vmul.f32 %v3058, %v2974
        %v3062 = vmul.f32 %v3058, %v2979
        %v3063 = vmul.f32 %v3058, %v2984
        %v3064 = vmul.f32 %v3058, %v2989
        %v3065 = vmul.f32 %v3058, %v2994
        %v3066 = vmul.f32 %v3058, %v2999
        %v3067 = vmul.f32 %v3058, %v3004
        %v3068 = vmul.f32 %v3058, %v3009
        %v3069 = vmul.f32 %v3058, %v3014
        %v3070 = vmul.f32 %v3058, %v3019
        %v3071 = vmul.f32 %v3058, %v3024
        %v3072 = vmul.f32 %v3058, %v3029
        %v3073 = vmul.f32 %v3058, %v3034
        %v3074 = vmul.f32 %v3058, %v3039
        %v3075 = vsel %vm3042, %v2964, %v3059
        %v3076 = vsel %vm3043, %v2969, %v3060
        %v3077 = vsel %vm3044, %v2974, %v3061
        %v3078 = vsel %vm3045, %v2979, %v3062
        %v3079 = vsel %vm3046, %v2984, %v3063
        %v3080 = vsel %vm3047, %v2989, %v3064
        %v3081 = vsel %vm3048, %v2994, %v3065
        %v3082 = vsel %vm3049, %v2999, %v3066
        %v3083 = vsel %vm3050, %v3004, %v3067
        %v3084 = vsel %vm3051, %v3009, %v3068
        %v3085 = vsel %vm3052, %v3014, %v3069
        %v3086 = vsel %vm3053, %v3019, %v3070
        %v3087 = vsel %vm3054, %v3024, %v3071
        %v3088 = vsel %vm3055, %v3029, %v3072
        %v3089 = vsel %vm3056, %v3034, %v3073
        %v3090 = vsel %vm3057, %v3039, %v3074
        %v3091 = vsel %vm2836, %v3090, 0.0
        %v3092 = vsel %vm2837, %v3075, 0.0
        %v3093 = vsel %vm2838, %v3076, 0.0
        %v3094 = vsel %vm2839, %v3077, 0.0
        %v3095 = vsel %vm2840, %v3078, 0.0
        %v3096 = vsel %vm2841, %v3079, 0.0
        %v3097 = vsel %vm2842, %v3080, 0.0
        %v3098 = vsel %vm2843, %v3081, 0.0
        %v3099 = vsel %vm2836, %v3082, 0.0
        %v3100 = vsel %vm2837, %v3083, 0.0
        %v3101 = vsel %vm2838, %v3084, 0.0
        %v3102 = vsel %vm2839, %v3085, 0.0
        %v3103 = vsel %vm2840, %v3086, 0.0
        %v3104 = vsel %vm2841, %v3087, 0.0
        %v3105 = vsel %vm2842, %v3088, 0.0
        %v3106 = vsel %vm2843, %v3089, 0.0
        %s3107 = scalar_lea.vmem [#allocation5], 1792
        %v3108 = vld [vmem:[%s3107] sm:$0xff]
        %v3109 = vld [vmem:[%s3107 + $0x8] sm:$0xff]
        %v3110 = vld [vmem:[%s3107 + $0x10] sm:$0xff]
        %v3111 = vld [vmem:[%s3107 + $0x18] sm:$0xff]
        %v3112 = vld [vmem:[%s3107 + $0x20] sm:$0xff]
        %v3113 = vld [vmem:[%s3107 + $0x28] sm:$0xff]
        %v3114 = vld [vmem:[%s3107 + $0x30] sm:$0xff]
        %v3115 = vld [vmem:[%s3107 + $0x38] sm:$0xff]
        %v3116 = vld [vmem:[%s3107 + $0x40] sm:$0xff]
        %v3117 = vld [vmem:[%s3107 + $0x48] sm:$0xff]
        %v3118 = vld [vmem:[%s3107 + $0x50] sm:$0xff]
        %v3119 = vld [vmem:[%s3107 + $0x58] sm:$0xff]
        %v3120 = vld [vmem:[%s3107 + $0x60] sm:$0xff]
        %v3121 = vld [vmem:[%s3107 + $0x68] sm:$0xff]
        %v3122 = vld [vmem:[%s3107 + $0x70] sm:$0xff]
        %v3123 = vld [vmem:[%s3107 + $0x78] sm:$0xff]
        %v3124 = vld [vmem:[%s3107 + $0x80] sm:$0xff]
        %v3125 = vld [vmem:[%s3107 + $0x88] sm:$0xff]
        %v3126 = vld [vmem:[%s3107 + $0x90] sm:$0xff]
        %v3127 = vld [vmem:[%s3107 + $0x98] sm:$0xff]
        %v3128 = vld [vmem:[%s3107 + $0xa0] sm:$0xff]
        %v3129 = vld [vmem:[%s3107 + $0xa8] sm:$0xff]
        %v3130 = vld [vmem:[%s3107 + $0xb0] sm:$0xff]
        %v3131 = vld [vmem:[%s3107 + $0xb8] sm:$0xff]
        %v3132 = vld [vmem:[%s3107 + $0xc0] sm:$0xff]
        %v3133 = vld [vmem:[%s3107 + $0xc8] sm:$0xff]
        %v3134 = vld [vmem:[%s3107 + $0xd0] sm:$0xff]
        %v3135 = vld [vmem:[%s3107 + $0xd8] sm:$0xff]
        %v3136 = vld [vmem:[%s3107 + $0xe0] sm:$0xff]
        %v3137 = vld [vmem:[%s3107 + $0xe8] sm:$0xff]
        %v3138 = vld [vmem:[%s3107 + $0xf0] sm:$0xff]
        %v3139 = vld [vmem:[%s3107 + $0xf8] sm:$0xff]
        %v3140 = vlaneseq
        %v3141 = vshrl.u32 %v3140, 7
        %v3142 = vsub.s32 2, %v3141
        %v3143 = vrot.slane %v364, %v3142
        %3144 = vmatprep.subr.mxu0 0.0
        %3145 = vmatpush1.msra.mxu0 %v3123
        %3146 = vmatprep.subr.mxu0 0.0
        %3147 = vmatpush1.msra.mxu0 %v3122
        %3148 = vmatprep.subr.mxu0 0.0
        %3149 = vmatpush1.msra.mxu0 %v3121
        %3150 = vmatprep.subr.mxu0 0.0
        %3151 = vmatpush1.msra.mxu0 %v3120
        %3152 = vmatprep.subr.mxu0 0.0
        %3153 = vmatpush1.msra.mxu0 %v3119
        %3154 = vmatprep.subr.mxu0 0.0
        %3155 = vmatpush1.msra.mxu0 %v3118
        %3156 = vmatprep.subr.mxu0 0.0
        %3157 = vmatpush1.msra.mxu0 %v3117
        %3158 = vmatprep.subr.mxu0 0.0
        %3159 = vmatpush1.msra.mxu0 %v3116
        %3160 = vmatprep.subr.mxu0 0.0
        %3161 = vmatpush1.msra.mxu0 %v3115
        %3162 = vmatprep.subr.mxu0 0.0
        %3163 = vmatpush1.msra.mxu0 %v3114
        %3164 = vmatprep.subr.mxu0 0.0
        %3165 = vmatpush1.msra.mxu0 %v3113
        %3166 = vmatprep.subr.mxu0 0.0
        %3167 = vmatpush1.msra.mxu0 %v3112
        %3168 = vmatprep.subr.mxu0 0.0
        %3169 = vmatpush1.msra.mxu0 %v3111
        %3170 = vmatprep.subr.mxu0 0.0
        %3171 = vmatpush1.msra.mxu0 %v3110
        %3172 = vmatprep.subr.mxu0 0.0
        %3173 = vmatpush1.msra.mxu0 %v3109
        %3174 = vmatprep.subr.mxu0 0.0
        %3175 = vmatpush1.msra.mxu0 %v3108
        %3176 = vmatprep.subr.mxu0 0.0
        %3177 = vmatpush2.msra.mxu0 %v3139
        %3178 = vmatprep.subr.mxu0 0.0
        %3179 = vmatpush2.msra.mxu0 %v3138
        %3180 = vmatprep.subr.mxu0 0.0
        %3181 = vmatpush2.msra.mxu0 %v3137
        %3182 = vmatprep.subr.mxu0 0.0
        %3183 = vmatpush2.msra.mxu0 %v3136
        %3184 = vmatprep.subr.mxu0 0.0
        %3185 = vmatpush2.msra.mxu0 %v3135
        %3186 = vmatprep.subr.mxu0 0.0
        %3187 = vmatpush2.msra.mxu0 %v3134
        %3188 = vmatprep.subr.mxu0 0.0
        %3189 = vmatpush2.msra.mxu0 %v3133
        %3190 = vmatprep.subr.mxu0 0.0
        %3191 = vmatpush2.msra.mxu0 %v3132
        %3192 = vmatprep.subr.mxu0 0.0
        %3193 = vmatpush2.msra.mxu0 %v3131
        %3194 = vmatprep.subr.mxu0 0.0
        %3195 = vmatpush2.msra.mxu0 %v3130
        %3196 = vmatprep.subr.mxu0 0.0
        %3197 = vmatpush2.msra.mxu0 %v3129
        %3198 = vmatprep.subr.mxu0 0.0
        %3199 = vmatpush2.msra.mxu0 %v3128
        %3200 = vmatprep.subr.mxu0 0.0
        %3201 = vmatpush2.msra.mxu0 %v3127
        %3202 = vmatprep.subr.mxu0 0.0
        %3203 = vmatpush2.msra.mxu0 %v3126
        %3204 = vmatprep.subr.mxu0 0.0
        %3205 = vmatpush2.msra.mxu0 %v3125
        %3206 = vmatprep.subr.mxu0 0.0
        %3207 = vmatpush2.msra.mxu0 %v3124
        %3208 = vmatprep.mubr.f32.mxu0 %v3075
        %3209 = vmatmul.mubr.f32.gmra.mxu0 %v3091
        %v3210 = vpop.f32.mrf.mxu0
        %v3211 = vadd.f32 %v3143, %v3210
        %v3212 = vpop.f32.mrf.mxu0
        %3213 = vmatprep.mubr.f32.mxu0 %v3076
        %3214 = vmatmul.mubr.f32.gmra.mxu0 %v3092
        %v3215 = vpop.f32.mrf.mxu0
        %v3216 = vadd.f32 %v3143, %v3215
        %v3217 = vpop.f32.mrf.mxu0
        %3218 = vmatprep.mubr.f32.mxu0 %v3077
        %3219 = vmatmul.mubr.f32.gmra.mxu0 %v3093
        %v3220 = vpop.f32.mrf.mxu0
        %v3221 = vadd.f32 %v3143, %v3220
        %v3222 = vpop.f32.mrf.mxu0
        %3223 = vmatprep.mubr.f32.mxu0 %v3078
        %3224 = vmatmul.mubr.f32.gmra.mxu0 %v3094
        %v3225 = vpop.f32.mrf.mxu0
        %v3226 = vadd.f32 %v3143, %v3225
        %v3227 = vpop.f32.mrf.mxu0
        %3228 = vmatprep.mubr.f32.mxu0 %v3079
        %3229 = vmatmul.mubr.f32.gmra.mxu0 %v3095
        %v3230 = vpop.f32.mrf.mxu0
        %v3231 = vadd.f32 %v3143, %v3230
        %v3232 = vpop.f32.mrf.mxu0
        %3233 = vmatprep.mubr.f32.mxu0 %v3080
        %3234 = vmatmul.mubr.f32.gmra.mxu0 %v3096
        %v3235 = vpop.f32.mrf.mxu0
        %v3236 = vadd.f32 %v3143, %v3235
        %v3237 = vpop.f32.mrf.mxu0
        %3238 = vmatprep.mubr.f32.mxu0 %v3081
        %3239 = vmatmul.mubr.f32.gmra.mxu0 %v3097
        %v3240 = vpop.f32.mrf.mxu0
        %v3241 = vadd.f32 %v3143, %v3240
        %v3242 = vpop.f32.mrf.mxu0
        %3243 = vmatprep.mubr.f32.mxu0 %v3082
        %3244 = vmatmul.mubr.f32.gmra.mxu0 %v3098
        %v3245 = vpop.f32.mrf.mxu0
        %v3246 = vadd.f32 %v3143, %v3245
        %v3247 = vpop.f32.mrf.mxu0
        %3248 = vmatprep.mubr.f32.mxu0 %v3083
        %3249 = vmatmul.mubr.f32.gmra.mxu0 %v3099
        %v3250 = vpop.f32.mrf.mxu0
        %v3251 = vadd.f32 %v3143, %v3250
        %v3252 = vpop.f32.mrf.mxu0
        %3253 = vmatprep.mubr.f32.mxu0 %v3084
        %3254 = vmatmul.mubr.f32.gmra.mxu0 %v3100
        %v3255 = vpop.f32.mrf.mxu0
        %v3256 = vadd.f32 %v3143, %v3255
        %v3257 = vpop.f32.mrf.mxu0
        %3258 = vmatprep.mubr.f32.mxu0 %v3085
        %3259 = vmatmul.mubr.f32.gmra.mxu0 %v3101
        %v3260 = vpop.f32.mrf.mxu0
        %v3261 = vadd.f32 %v3143, %v3260
        %v3262 = vpop.f32.mrf.mxu0
        %3263 = vmatprep.mubr.f32.mxu0 %v3086
        %3264 = vmatmul.mubr.f32.gmra.mxu0 %v3102
        %v3265 = vpop.f32.mrf.mxu0
        %v3266 = vadd.f32 %v3143, %v3265
        %v3267 = vpop.f32.mrf.mxu0
        %3268 = vmatprep.mubr.f32.mxu0 %v3087
        %3269 = vmatmul.mubr.f32.gmra.mxu0 %v3103
        %v3270 = vpop.f32.mrf.mxu0
        %v3271 = vadd.f32 %v3143, %v3270
        %v3272 = vpop.f32.mrf.mxu0
        %3273 = vmatprep.mubr.f32.mxu0 %v3088
        %3274 = vmatmul.mubr.f32.gmra.mxu0 %v3104
        %v3275 = vpop.f32.mrf.mxu0
        %v3276 = vadd.f32 %v3143, %v3275
        %v3277 = vpop.f32.mrf.mxu0
        %3278 = vmatprep.mubr.f32.mxu0 %v3089
        %3279 = vmatmul.mubr.f32.gmra.mxu0 %v3105
        %v3280 = vpop.f32.mrf.mxu0
        %v3281 = vadd.f32 %v3143, %v3280
        %v3282 = vpop.f32.mrf.mxu0
        %3283 = vmatprep.mubr.f32.mxu0 %v3090
        %3284 = vmatmul.mubr.f32.gmra.mxu0 %v3106
        %v3285 = vpop.f32.mrf.mxu0
        %v3286 = vadd.f32 %v3143, %v3285
        %v3287 = vpop.f32.mrf.mxu0
        %3288 = vdwg.mxu0
        %vm3289 = vcmp.gt.f32.partialorder %v3211, 0.0
        %vm3290 = vcmp.gt.f32.partialorder %v3216, 0.0
        %vm3291 = vcmp.gt.f32.partialorder %v3221, 0.0
        %vm3292 = vcmp.gt.f32.partialorder %v3226, 0.0
        %vm3293 = vcmp.gt.f32.partialorder %v3231, 0.0
        %vm3294 = vcmp.gt.f32.partialorder %v3236, 0.0
        %vm3295 = vcmp.gt.f32.partialorder %v3241, 0.0
        %vm3296 = vcmp.gt.f32.partialorder %v3246, 0.0
        %vm3297 = vcmp.gt.f32.partialorder %v3251, 0.0
        %vm3298 = vcmp.gt.f32.partialorder %v3256, 0.0
        %vm3299 = vcmp.gt.f32.partialorder %v3261, 0.0
        %vm3300 = vcmp.gt.f32.partialorder %v3266, 0.0
        %vm3301 = vcmp.gt.f32.partialorder %v3271, 0.0
        %vm3302 = vcmp.gt.f32.partialorder %v3276, 0.0
        %vm3303 = vcmp.gt.f32.partialorder %v3281, 0.0
        %vm3304 = vcmp.gt.f32.partialorder %v3286, 0.0
        %v3305 = vstv %s2834
        %v3306 = vmul.f32 %v3305, %v3211
        %v3307 = vmul.f32 %v3305, %v3216
        %v3308 = vmul.f32 %v3305, %v3221
        %v3309 = vmul.f32 %v3305, %v3226
        %v3310 = vmul.f32 %v3305, %v3231
        %v3311 = vmul.f32 %v3305, %v3236
        %v3312 = vmul.f32 %v3305, %v3241
        %v3313 = vmul.f32 %v3305, %v3246
        %v3314 = vmul.f32 %v3305, %v3251
        %v3315 = vmul.f32 %v3305, %v3256
        %v3316 = vmul.f32 %v3305, %v3261
        %v3317 = vmul.f32 %v3305, %v3266
        %v3318 = vmul.f32 %v3305, %v3271
        %v3319 = vmul.f32 %v3305, %v3276
        %v3320 = vmul.f32 %v3305, %v3281
        %v3321 = vmul.f32 %v3305, %v3286
        %v3322 = vsel %vm3289, %v3211, %v3306
        %v3323 = vsel %vm3290, %v3216, %v3307
        %v3324 = vsel %vm3291, %v3221, %v3308
        %v3325 = vsel %vm3292, %v3226, %v3309
        %v3326 = vsel %vm3293, %v3231, %v3310
        %v3327 = vsel %vm3294, %v3236, %v3311
        %v3328 = vsel %vm3295, %v3241, %v3312
        %v3329 = vsel %vm3296, %v3246, %v3313
        %v3330 = vsel %vm3297, %v3251, %v3314
        %v3331 = vsel %vm3298, %v3256, %v3315
        %v3332 = vsel %vm3299, %v3261, %v3316
        %v3333 = vsel %vm3300, %v3266, %v3317
        %v3334 = vsel %vm3301, %v3271, %v3318
        %v3335 = vsel %vm3302, %v3276, %v3319
        %v3336 = vsel %vm3303, %v3281, %v3320
        %v3337 = vsel %vm3304, %v3286, %v3321
        %v3338 = vadd.f32 %v3322, %v2801
        %v3339 = vadd.f32 %v3323, %v2802
        %v3340 = vadd.f32 %v3324, %v2803
        %v3341 = vadd.f32 %v3325, %v2804
        %v3342 = vadd.f32 %v3326, %v2805
        %v3343 = vadd.f32 %v3327, %v2806
        %v3344 = vadd.f32 %v3328, %v2807
        %v3345 = vadd.f32 %v3329, %v2808
        %v3346 = vadd.f32 %v3330, %v2809
        %v3347 = vadd.f32 %v3331, %v2810
        %v3348 = vadd.f32 %v3332, %v2811
        %v3349 = vadd.f32 %v3333, %v2812
        %v3350 = vadd.f32 %v3334, %v2813
        %v3351 = vadd.f32 %v3335, %v2814
        %v3352 = vadd.f32 %v3336, %v2815
        %v3353 = vadd.f32 %v3337, %v2816
        %vm3354 = vcmp.gt.f32.partialorder %v3338, 0.0
        %vm3355 = vcmp.gt.f32.partialorder %v3339, 0.0
        %vm3356 = vcmp.gt.f32.partialorder %v3340, 0.0
        %vm3357 = vcmp.gt.f32.partialorder %v3341, 0.0
        %vm3358 = vcmp.gt.f32.partialorder %v3342, 0.0
        %vm3359 = vcmp.gt.f32.partialorder %v3343, 0.0
        %vm3360 = vcmp.gt.f32.partialorder %v3344, 0.0
        %vm3361 = vcmp.gt.f32.partialorder %v3345, 0.0
        %vm3362 = vcmp.gt.f32.partialorder %v3346, 0.0
        %vm3363 = vcmp.gt.f32.partialorder %v3347, 0.0
        %vm3364 = vcmp.gt.f32.partialorder %v3348, 0.0
        %vm3365 = vcmp.gt.f32.partialorder %v3349, 0.0
        %vm3366 = vcmp.gt.f32.partialorder %v3350, 0.0
        %vm3367 = vcmp.gt.f32.partialorder %v3351, 0.0
        %vm3368 = vcmp.gt.f32.partialorder %v3352, 0.0
        %vm3369 = vcmp.gt.f32.partialorder %v3353, 0.0
        %v3370 = vstv %s2835
        %v3371 = vmul.f32 %v3370, %v3338
        %v3372 = vmul.f32 %v3370, %v3339
        %v3373 = vmul.f32 %v3370, %v3340
        %v3374 = vmul.f32 %v3370, %v3341
        %v3375 = vmul.f32 %v3370, %v3342
        %v3376 = vmul.f32 %v3370, %v3343
        %v3377 = vmul.f32 %v3370, %v3344
        %v3378 = vmul.f32 %v3370, %v3345
        %v3379 = vmul.f32 %v3370, %v3346
        %v3380 = vmul.f32 %v3370, %v3347
        %v3381 = vmul.f32 %v3370, %v3348
        %v3382 = vmul.f32 %v3370, %v3349
        %v3383 = vmul.f32 %v3370, %v3350
        %v3384 = vmul.f32 %v3370, %v3351
        %v3385 = vmul.f32 %v3370, %v3352
        %v3386 = vmul.f32 %v3370, %v3353
        %v3387 = vsel %vm3354, %v3338, %v3371
        %v3388 = vsel %vm3355, %v3339, %v3372
        %v3389 = vsel %vm3356, %v3340, %v3373
        %v3390 = vsel %vm3357, %v3341, %v3374
        %v3391 = vsel %vm3358, %v3342, %v3375
        %v3392 = vsel %vm3359, %v3343, %v3376
        %v3393 = vsel %vm3360, %v3344, %v3377
        %v3394 = vsel %vm3361, %v3345, %v3378
        %v3395 = vsel %vm3362, %v3346, %v3379
        %v3396 = vsel %vm3363, %v3347, %v3380
        %v3397 = vsel %vm3364, %v3348, %v3381
        %v3398 = vsel %vm3365, %v3349, %v3382
        %v3399 = vsel %vm3366, %v3350, %v3383
        %v3400 = vsel %vm3367, %v3351, %v3384
        %v3401 = vsel %vm3368, %v3352, %v3385
        %v3402 = vsel %vm3369, %v3353, %v3386
        %v3403 = vadd.f32 %v2817, %v3322
        %v3404 = vadd.f32 %v2818, %v3323
        %v3405 = vadd.f32 %v2819, %v3324
        %v3406 = vadd.f32 %v2820, %v3325
        %v3407 = vadd.f32 %v2821, %v3326
        %v3408 = vadd.f32 %v2822, %v3327
        %v3409 = vadd.f32 %v2823, %v3328
        %v3410 = vadd.f32 %v2824, %v3329
        %v3411 = vadd.f32 %v2825, %v3330
        %v3412 = vadd.f32 %v2826, %v3331
        %v3413 = vadd.f32 %v2827, %v3332
        %v3414 = vadd.f32 %v2828, %v3333
        %v3415 = vadd.f32 %v2829, %v3334
        %v3416 = vadd.f32 %v2830, %v3335
        %v3417 = vadd.f32 %v2831, %v3336
        %v3418 = vadd.f32 %v2832, %v3337
        %s3419 = sld [smem:[#allocation2 + $0xf]]
        %s3420 = sld [smem:[#allocation2 + $0x10]]
        %s3421 = sld [smem:[#allocation2 + $0x11]]
        %vm3422 = vcmp.ge.s32.totalorder %v382, 16
        %vm3423 = vcmp.ge.s32.totalorder %v383, 16
        %vm3424 = vcmp.ge.s32.totalorder %v384, 16
        %vm3425 = vcmp.ge.s32.totalorder %v385, 16
        %vm3426 = vcmp.ge.s32.totalorder %v386, 16
        %vm3427 = vcmp.ge.s32.totalorder %v387, 16
        %vm3428 = vcmp.ge.s32.totalorder %v388, 16
        %vm3429 = vcmp.ge.s32.totalorder %v389, 16
        %v3430 = vsel %vm3422, %v3401, 0.0
        %v3431 = vsel %vm3423, %v3402, 0.0
        %v3432 = vsel %vm3424, %v3387, 0.0
        %v3433 = vsel %vm3425, %v3388, 0.0
        %v3434 = vsel %vm3426, %v3389, 0.0
        %v3435 = vsel %vm3427, %v3390, 0.0
        %v3436 = vsel %vm3428, %v3391, 0.0
        %v3437 = vsel %vm3429, %v3392, 0.0
        %v3438 = vsel %vm3422, %v3393, 0.0
        %v3439 = vsel %vm3423, %v3394, 0.0
        %v3440 = vsel %vm3424, %v3395, 0.0
        %v3441 = vsel %vm3425, %v3396, 0.0
        %v3442 = vsel %vm3426, %v3397, 0.0
        %v3443 = vsel %vm3427, %v3398, 0.0
        %v3444 = vsel %vm3428, %v3399, 0.0
        %v3445 = vsel %vm3429, %v3400, 0.0
        %s3446 = scalar_lea.vmem [#allocation5], 2048
        %v3447 = vld [vmem:[%s3446] sm:$0xff]
        %v3448 = vld [vmem:[%s3446 + $0x8] sm:$0xff]
        %v3449 = vld [vmem:[%s3446 + $0x10] sm:$0xff]
        %v3450 = vld [vmem:[%s3446 + $0x18] sm:$0xff]
        %v3451 = vld [vmem:[%s3446 + $0x20] sm:$0xff]
        %v3452 = vld [vmem:[%s3446 + $0x28] sm:$0xff]
        %v3453 = vld [vmem:[%s3446 + $0x30] sm:$0xff]
        %v3454 = vld [vmem:[%s3446 + $0x38] sm:$0xff]
        %v3455 = vld [vmem:[%s3446 + $0x40] sm:$0xff]
        %v3456 = vld [vmem:[%s3446 + $0x48] sm:$0xff]
        %v3457 = vld [vmem:[%s3446 + $0x50] sm:$0xff]
        %v3458 = vld [vmem:[%s3446 + $0x58] sm:$0xff]
        %v3459 = vld [vmem:[%s3446 + $0x60] sm:$0xff]
        %v3460 = vld [vmem:[%s3446 + $0x68] sm:$0xff]
        %v3461 = vld [vmem:[%s3446 + $0x70] sm:$0xff]
        %v3462 = vld [vmem:[%s3446 + $0x78] sm:$0xff]
        %v3463 = vld [vmem:[%s3446 + $0x80] sm:$0xff]
        %v3464 = vld [vmem:[%s3446 + $0x88] sm:$0xff]
        %v3465 = vld [vmem:[%s3446 + $0x90] sm:$0xff]
        %v3466 = vld [vmem:[%s3446 + $0x98] sm:$0xff]
        %v3467 = vld [vmem:[%s3446 + $0xa0] sm:$0xff]
        %v3468 = vld [vmem:[%s3446 + $0xa8] sm:$0xff]
        %v3469 = vld [vmem:[%s3446 + $0xb0] sm:$0xff]
        %v3470 = vld [vmem:[%s3446 + $0xb8] sm:$0xff]
        %v3471 = vld [vmem:[%s3446 + $0xc0] sm:$0xff]
        %v3472 = vld [vmem:[%s3446 + $0xc8] sm:$0xff]
        %v3473 = vld [vmem:[%s3446 + $0xd0] sm:$0xff]
        %v3474 = vld [vmem:[%s3446 + $0xd8] sm:$0xff]
        %v3475 = vld [vmem:[%s3446 + $0xe0] sm:$0xff]
        %v3476 = vld [vmem:[%s3446 + $0xe8] sm:$0xff]
        %v3477 = vld [vmem:[%s3446 + $0xf0] sm:$0xff]
        %v3478 = vld [vmem:[%s3446 + $0xf8] sm:$0xff]
        %v3479 = vlaneseq
        %v3480 = vshrl.u32 %v3479, 7
        %v3481 = vsub.s32 3, %v3480
        %v3482 = vrot.slane %v364, %v3481
        %3483 = vmatprep.subr.mxu0 0.0
        %3484 = vmatpush1.msra.mxu0 %v3462
        %3485 = vmatprep.subr.mxu0 0.0
        %3486 = vmatpush1.msra.mxu0 %v3461
        %3487 = vmatprep.subr.mxu0 0.0
        %3488 = vmatpush1.msra.mxu0 %v3460
        %3489 = vmatprep.subr.mxu0 0.0
        %3490 = vmatpush1.msra.mxu0 %v3459
        %3491 = vmatprep.subr.mxu0 0.0
        %3492 = vmatpush1.msra.mxu0 %v3458
        %3493 = vmatprep.subr.mxu0 0.0
        %3494 = vmatpush1.msra.mxu0 %v3457
        %3495 = vmatprep.subr.mxu0 0.0
        %3496 = vmatpush1.msra.mxu0 %v3456
        %3497 = vmatprep.subr.mxu0 0.0
        %3498 = vmatpush1.msra.mxu0 %v3455
        %3499 = vmatprep.subr.mxu0 0.0
        %3500 = vmatpush1.msra.mxu0 %v3454
        %3501 = vmatprep.subr.mxu0 0.0
        %3502 = vmatpush1.msra.mxu0 %v3453
        %3503 = vmatprep.subr.mxu0 0.0
        %3504 = vmatpush1.msra.mxu0 %v3452
        %3505 = vmatprep.subr.mxu0 0.0
        %3506 = vmatpush1.msra.mxu0 %v3451
        %3507 = vmatprep.subr.mxu0 0.0
        %3508 = vmatpush1.msra.mxu0 %v3450
        %3509 = vmatprep.subr.mxu0 0.0
        %3510 = vmatpush1.msra.mxu0 %v3449
        %3511 = vmatprep.subr.mxu0 0.0
        %3512 = vmatpush1.msra.mxu0 %v3448
        %3513 = vmatprep.subr.mxu0 0.0
        %3514 = vmatpush1.msra.mxu0 %v3447
        %3515 = vmatprep.subr.mxu0 0.0
        %3516 = vmatpush2.msra.mxu0 %v3478
        %3517 = vmatprep.subr.mxu0 0.0
        %3518 = vmatpush2.msra.mxu0 %v3477
        %3519 = vmatprep.subr.mxu0 0.0
        %3520 = vmatpush2.msra.mxu0 %v3476
        %3521 = vmatprep.subr.mxu0 0.0
        %3522 = vmatpush2.msra.mxu0 %v3475
        %3523 = vmatprep.subr.mxu0 0.0
        %3524 = vmatpush2.msra.mxu0 %v3474
        %3525 = vmatprep.subr.mxu0 0.0
        %3526 = vmatpush2.msra.mxu0 %v3473
        %3527 = vmatprep.subr.mxu0 0.0
        %3528 = vmatpush2.msra.mxu0 %v3472
        %3529 = vmatprep.subr.mxu0 0.0
        %3530 = vmatpush2.msra.mxu0 %v3471
        %3531 = vmatprep.subr.mxu0 0.0
        %3532 = vmatpush2.msra.mxu0 %v3470
        %3533 = vmatprep.subr.mxu0 0.0
        %3534 = vmatpush2.msra.mxu0 %v3469
        %3535 = vmatprep.subr.mxu0 0.0
        %3536 = vmatpush2.msra.mxu0 %v3468
        %3537 = vmatprep.subr.mxu0 0.0
        %3538 = vmatpush2.msra.mxu0 %v3467
        %3539 = vmatprep.subr.mxu0 0.0
        %3540 = vmatpush2.msra.mxu0 %v3466
        %3541 = vmatprep.subr.mxu0 0.0
        %3542 = vmatpush2.msra.mxu0 %v3465
        %3543 = vmatprep.subr.mxu0 0.0
        %3544 = vmatpush2.msra.mxu0 %v3464
        %3545 = vmatprep.subr.mxu0 0.0
        %3546 = vmatpush2.msra.mxu0 %v3463
        %3547 = vmatprep.mubr.f32.mxu0 %v3387
        %3548 = vmatmul.mubr.f32.gmra.mxu0 %v3430
        %v3549 = vpop.f32.mrf.mxu0
        %v3550 = vadd.f32 %v3482, %v3549
        %v3551 = vpop.f32.mrf.mxu0
        %3552 = vmatprep.mubr.f32.mxu0 %v3388
        %3553 = vmatmul.mubr.f32.gmra.mxu0 %v3431
        %v3554 = vpop.f32.mrf.mxu0
        %v3555 = vadd.f32 %v3482, %v3554
        %v3556 = vpop.f32.mrf.mxu0
        %3557 = vmatprep.mubr.f32.mxu0 %v3389
        %3558 = vmatmul.mubr.f32.gmra.mxu0 %v3432
        %v3559 = vpop.f32.mrf.mxu0
        %v3560 = vadd.f32 %v3482, %v3559
        %v3561 = vpop.f32.mrf.mxu0
        %3562 = vmatprep.mubr.f32.mxu0 %v3390
        %3563 = vmatmul.mubr.f32.gmra.mxu0 %v3433
        %v3564 = vpop.f32.mrf.mxu0
        %v3565 = vadd.f32 %v3482, %v3564
        %v3566 = vpop.f32.mrf.mxu0
        %3567 = vmatprep.mubr.f32.mxu0 %v3391
        %3568 = vmatmul.mubr.f32.gmra.mxu0 %v3434
        %v3569 = vpop.f32.mrf.mxu0
        %v3570 = vadd.f32 %v3482, %v3569
        %v3571 = vpop.f32.mrf.mxu0
        %3572 = vmatprep.mubr.f32.mxu0 %v3392
        %3573 = vmatmul.mubr.f32.gmra.mxu0 %v3435
        %v3574 = vpop.f32.mrf.mxu0
        %v3575 = vadd.f32 %v3482, %v3574
        %v3576 = vpop.f32.mrf.mxu0
        %3577 = vmatprep.mubr.f32.mxu0 %v3393
        %3578 = vmatmul.mubr.f32.gmra.mxu0 %v3436
        %v3579 = vpop.f32.mrf.mxu0
        %v3580 = vadd.f32 %v3482, %v3579
        %v3581 = vpop.f32.mrf.mxu0
        %3582 = vmatprep.mubr.f32.mxu0 %v3394
        %3583 = vmatmul.mubr.f32.gmra.mxu0 %v3437
        %v3584 = vpop.f32.mrf.mxu0
        %v3585 = vadd.f32 %v3482, %v3584
        %v3586 = vpop.f32.mrf.mxu0
        %3587 = vmatprep.mubr.f32.mxu0 %v3395
        %3588 = vmatmul.mubr.f32.gmra.mxu0 %v3438
        %v3589 = vpop.f32.mrf.mxu0
        %v3590 = vadd.f32 %v3482, %v3589
        %v3591 = vpop.f32.mrf.mxu0
        %3592 = vmatprep.mubr.f32.mxu0 %v3396
        %3593 = vmatmul.mubr.f32.gmra.mxu0 %v3439
        %v3594 = vpop.f32.mrf.mxu0
        %v3595 = vadd.f32 %v3482, %v3594
        %v3596 = vpop.f32.mrf.mxu0
        %3597 = vmatprep.mubr.f32.mxu0 %v3397
        %3598 = vmatmul.mubr.f32.gmra.mxu0 %v3440
        %v3599 = vpop.f32.mrf.mxu0
        %v3600 = vadd.f32 %v3482, %v3599
        %v3601 = vpop.f32.mrf.mxu0
        %3602 = vmatprep.mubr.f32.mxu0 %v3398
        %3603 = vmatmul.mubr.f32.gmra.mxu0 %v3441
        %v3604 = vpop.f32.mrf.mxu0
        %v3605 = vadd.f32 %v3482, %v3604
        %v3606 = vpop.f32.mrf.mxu0
        %3607 = vmatprep.mubr.f32.mxu0 %v3399
        %3608 = vmatmul.mubr.f32.gmra.mxu0 %v3442
        %v3609 = vpop.f32.mrf.mxu0
        %v3610 = vadd.f32 %v3482, %v3609
        %v3611 = vpop.f32.mrf.mxu0
        %3612 = vmatprep.mubr.f32.mxu0 %v3400
        %3613 = vmatmul.mubr.f32.gmra.mxu0 %v3443
        %v3614 = vpop.f32.mrf.mxu0
        %v3615 = vadd.f32 %v3482, %v3614
        %v3616 = vpop.f32.mrf.mxu0
        %3617 = vmatprep.mubr.f32.mxu0 %v3401
        %3618 = vmatmul.mubr.f32.gmra.mxu0 %v3444
        %v3619 = vpop.f32.mrf.mxu0
        %v3620 = vadd.f32 %v3482, %v3619
        %v3621 = vpop.f32.mrf.mxu0
        %3622 = vmatprep.mubr.f32.mxu0 %v3402
        %3623 = vmatmul.mubr.f32.gmra.mxu0 %v3445
        %v3624 = vpop.f32.mrf.mxu0
        %v3625 = vadd.f32 %v3482, %v3624
        %v3626 = vpop.f32.mrf.mxu0
        %3627 = vdwg.mxu0
        %vm3628 = vcmp.gt.f32.partialorder %v3550, 0.0
        %vm3629 = vcmp.gt.f32.partialorder %v3555, 0.0
        %vm3630 = vcmp.gt.f32.partialorder %v3560, 0.0
        %vm3631 = vcmp.gt.f32.partialorder %v3565, 0.0
        %vm3632 = vcmp.gt.f32.partialorder %v3570, 0.0
        %vm3633 = vcmp.gt.f32.partialorder %v3575, 0.0
        %vm3634 = vcmp.gt.f32.partialorder %v3580, 0.0
        %vm3635 = vcmp.gt.f32.partialorder %v3585, 0.0
        %vm3636 = vcmp.gt.f32.partialorder %v3590, 0.0
        %vm3637 = vcmp.gt.f32.partialorder %v3595, 0.0
        %vm3638 = vcmp.gt.f32.partialorder %v3600, 0.0
        %vm3639 = vcmp.gt.f32.partialorder %v3605, 0.0
        %vm3640 = vcmp.gt.f32.partialorder %v3610, 0.0
        %vm3641 = vcmp.gt.f32.partialorder %v3615, 0.0
        %vm3642 = vcmp.gt.f32.partialorder %v3620, 0.0
        %vm3643 = vcmp.gt.f32.partialorder %v3625, 0.0
        %v3644 = vstv %s3419
        %v3645 = vmul.f32 %v3644, %v3550
        %v3646 = vmul.f32 %v3644, %v3555
        %v3647 = vmul.f32 %v3644, %v3560
        %v3648 = vmul.f32 %v3644, %v3565
        %v3649 = vmul.f32 %v3644, %v3570
        %v3650 = vmul.f32 %v3644, %v3575
        %v3651 = vmul.f32 %v3644, %v3580
        %v3652 = vmul.f32 %v3644, %v3585
        %v3653 = vmul.f32 %v3644, %v3590
        %v3654 = vmul.f32 %v3644, %v3595
        %v3655 = vmul.f32 %v3644, %v3600
        %v3656 = vmul.f32 %v3644, %v3605
        %v3657 = vmul.f32 %v3644, %v3610
        %v3658 = vmul.f32 %v3644, %v3615
        %v3659 = vmul.f32 %v3644, %v3620
        %v3660 = vmul.f32 %v3644, %v3625
        %v3661 = vsel %vm3628, %v3550, %v3645
        %v3662 = vsel %vm3629, %v3555, %v3646
        %v3663 = vsel %vm3630, %v3560, %v3647
        %v3664 = vsel %vm3631, %v3565, %v3648
        %v3665 = vsel %vm3632, %v3570, %v3649
        %v3666 = vsel %vm3633, %v3575, %v3650
        %v3667 = vsel %vm3634, %v3580, %v3651
        %v3668 = vsel %vm3635, %v3585, %v3652
        %v3669 = vsel %vm3636, %v3590, %v3653
        %v3670 = vsel %vm3637, %v3595, %v3654
        %v3671 = vsel %vm3638, %v3600, %v3655
        %v3672 = vsel %vm3639, %v3605, %v3656
        %v3673 = vsel %vm3640, %v3610, %v3657
        %v3674 = vsel %vm3641, %v3615, %v3658
        %v3675 = vsel %vm3642, %v3620, %v3659
        %v3676 = vsel %vm3643, %v3625, %v3660
        %v3677 = vsel %vm3422, %v3675, 0.0
        %v3678 = vsel %vm3423, %v3676, 0.0
        %v3679 = vsel %vm3424, %v3661, 0.0
        %v3680 = vsel %vm3425, %v3662, 0.0
        %v3681 = vsel %vm3426, %v3663, 0.0
        %v3682 = vsel %vm3427, %v3664, 0.0
        %v3683 = vsel %vm3428, %v3665, 0.0
        %v3684 = vsel %vm3429, %v3666, 0.0
        %v3685 = vsel %vm3422, %v3667, 0.0
        %v3686 = vsel %vm3423, %v3668, 0.0
        %v3687 = vsel %vm3424, %v3669, 0.0
        %v3688 = vsel %vm3425, %v3670, 0.0
        %v3689 = vsel %vm3426, %v3671, 0.0
        %v3690 = vsel %vm3427, %v3672, 0.0
        %v3691 = vsel %vm3428, %v3673, 0.0
        %v3692 = vsel %vm3429, %v3674, 0.0
        %s3693 = scalar_lea.vmem [#allocation5], 2304
        %v3694 = vld [vmem:[%s3693] sm:$0xff]
        %v3695 = vld [vmem:[%s3693 + $0x8] sm:$0xff]
        %v3696 = vld [vmem:[%s3693 + $0x10] sm:$0xff]
        %v3697 = vld [vmem:[%s3693 + $0x18] sm:$0xff]
        %v3698 = vld [vmem:[%s3693 + $0x20] sm:$0xff]
        %v3699 = vld [vmem:[%s3693 + $0x28] sm:$0xff]
        %v3700 = vld [vmem:[%s3693 + $0x30] sm:$0xff]
        %v3701 = vld [vmem:[%s3693 + $0x38] sm:$0xff]
        %v3702 = vld [vmem:[%s3693 + $0x40] sm:$0xff]
        %v3703 = vld [vmem:[%s3693 + $0x48] sm:$0xff]
        %v3704 = vld [vmem:[%s3693 + $0x50] sm:$0xff]
        %v3705 = vld [vmem:[%s3693 + $0x58] sm:$0xff]
        %v3706 = vld [vmem:[%s3693 + $0x60] sm:$0xff]
        %v3707 = vld [vmem:[%s3693 + $0x68] sm:$0xff]
        %v3708 = vld [vmem:[%s3693 + $0x70] sm:$0xff]
        %v3709 = vld [vmem:[%s3693 + $0x78] sm:$0xff]
        %v3710 = vld [vmem:[%s3693 + $0x80] sm:$0xff]
        %v3711 = vld [vmem:[%s3693 + $0x88] sm:$0xff]
        %v3712 = vld [vmem:[%s3693 + $0x90] sm:$0xff]
        %v3713 = vld [vmem:[%s3693 + $0x98] sm:$0xff]
        %v3714 = vld [vmem:[%s3693 + $0xa0] sm:$0xff]
        %v3715 = vld [vmem:[%s3693 + $0xa8] sm:$0xff]
        %v3716 = vld [vmem:[%s3693 + $0xb0] sm:$0xff]
        %v3717 = vld [vmem:[%s3693 + $0xb8] sm:$0xff]
        %v3718 = vld [vmem:[%s3693 + $0xc0] sm:$0xff]
        %v3719 = vld [vmem:[%s3693 + $0xc8] sm:$0xff]
        %v3720 = vld [vmem:[%s3693 + $0xd0] sm:$0xff]
        %v3721 = vld [vmem:[%s3693 + $0xd8] sm:$0xff]
        %v3722 = vld [vmem:[%s3693 + $0xe0] sm:$0xff]
        %v3723 = vld [vmem:[%s3693 + $0xe8] sm:$0xff]
        %v3724 = vld [vmem:[%s3693 + $0xf0] sm:$0xff]
        %v3725 = vld [vmem:[%s3693 + $0xf8] sm:$0xff]
        %v3726 = vlaneseq
        %v3727 = vshrl.u32 %v3726, 7
        %v3728 = vsub.s32 4, %v3727
        %v3729 = vrot.slane %v364, %v3728
        %3730 = vmatprep.subr.mxu0 0.0
        %3731 = vmatpush1.msra.mxu0 %v3709
        %3732 = vmatprep.subr.mxu0 0.0
        %3733 = vmatpush1.msra.mxu0 %v3708
        %3734 = vmatprep.subr.mxu0 0.0
        %3735 = vmatpush1.msra.mxu0 %v3707
        %3736 = vmatprep.subr.mxu0 0.0
        %3737 = vmatpush1.msra.mxu0 %v3706
        %3738 = vmatprep.subr.mxu0 0.0
        %3739 = vmatpush1.msra.mxu0 %v3705
        %3740 = vmatprep.subr.mxu0 0.0
        %3741 = vmatpush1.msra.mxu0 %v3704
        %3742 = vmatprep.subr.mxu0 0.0
        %3743 = vmatpush1.msra.mxu0 %v3703
        %3744 = vmatprep.subr.mxu0 0.0
        %3745 = vmatpush1.msra.mxu0 %v3702
        %3746 = vmatprep.subr.mxu0 0.0
        %3747 = vmatpush1.msra.mxu0 %v3701
        %3748 = vmatprep.subr.mxu0 0.0
        %3749 = vmatpush1.msra.mxu0 %v3700
        %3750 = vmatprep.subr.mxu0 0.0
        %3751 = vmatpush1.msra.mxu0 %v3699
        %3752 = vmatprep.subr.mxu0 0.0
        %3753 = vmatpush1.msra.mxu0 %v3698
        %3754 = vmatprep.subr.mxu0 0.0
        %3755 = vmatpush1.msra.mxu0 %v3697
        %3756 = vmatprep.subr.mxu0 0.0
        %3757 = vmatpush1.msra.mxu0 %v3696
        %3758 = vmatprep.subr.mxu0 0.0
        %3759 = vmatpush1.msra.mxu0 %v3695
        %3760 = vmatprep.subr.mxu0 0.0
        %3761 = vmatpush1.msra.mxu0 %v3694
        %3762 = vmatprep.subr.mxu0 0.0
        %3763 = vmatpush2.msra.mxu0 %v3725
        %3764 = vmatprep.subr.mxu0 0.0
        %3765 = vmatpush2.msra.mxu0 %v3724
        %3766 = vmatprep.subr.mxu0 0.0
        %3767 = vmatpush2.msra.mxu0 %v3723
        %3768 = vmatprep.subr.mxu0 0.0
        %3769 = vmatpush2.msra.mxu0 %v3722
        %3770 = vmatprep.subr.mxu0 0.0
        %3771 = vmatpush2.msra.mxu0 %v3721
        %3772 = vmatprep.subr.mxu0 0.0
        %3773 = vmatpush2.msra.mxu0 %v3720
        %3774 = vmatprep.subr.mxu0 0.0
        %3775 = vmatpush2.msra.mxu0 %v3719
        %3776 = vmatprep.subr.mxu0 0.0
        %3777 = vmatpush2.msra.mxu0 %v3718
        %3778 = vmatprep.subr.mxu0 0.0
        %3779 = vmatpush2.msra.mxu0 %v3717
        %3780 = vmatprep.subr.mxu0 0.0
        %3781 = vmatpush2.msra.mxu0 %v3716
        %3782 = vmatprep.subr.mxu0 0.0
        %3783 = vmatpush2.msra.mxu0 %v3715
        %3784 = vmatprep.subr.mxu0 0.0
        %3785 = vmatpush2.msra.mxu0 %v3714
        %3786 = vmatprep.subr.mxu0 0.0
        %3787 = vmatpush2.msra.mxu0 %v3713
        %3788 = vmatprep.subr.mxu0 0.0
        %3789 = vmatpush2.msra.mxu0 %v3712
        %3790 = vmatprep.subr.mxu0 0.0
        %3791 = vmatpush2.msra.mxu0 %v3711
        %3792 = vmatprep.subr.mxu0 0.0
        %3793 = vmatpush2.msra.mxu0 %v3710
        %3794 = vmatprep.mubr.f32.mxu0 %v3661
        %3795 = vmatmul.mubr.f32.gmra.mxu0 %v3677
        %v3796 = vpop.f32.mrf.mxu0
        %v3797 = vadd.f32 %v3729, %v3796
        %v3798 = vpop.f32.mrf.mxu0
        %3799 = vmatprep.mubr.f32.mxu0 %v3662
        %3800 = vmatmul.mubr.f32.gmra.mxu0 %v3678
        %v3801 = vpop.f32.mrf.mxu0
        %v3802 = vadd.f32 %v3729, %v3801
        %v3803 = vpop.f32.mrf.mxu0
        %3804 = vmatprep.mubr.f32.mxu0 %v3663
        %3805 = vmatmul.mubr.f32.gmra.mxu0 %v3679
        %v3806 = vpop.f32.mrf.mxu0
        %v3807 = vadd.f32 %v3729, %v3806
        %v3808 = vpop.f32.mrf.mxu0
        %3809 = vmatprep.mubr.f32.mxu0 %v3664
        %3810 = vmatmul.mubr.f32.gmra.mxu0 %v3680
        %v3811 = vpop.f32.mrf.mxu0
        %v3812 = vadd.f32 %v3729, %v3811
        %v3813 = vpop.f32.mrf.mxu0
        %3814 = vmatprep.mubr.f32.mxu0 %v3665
        %3815 = vmatmul.mubr.f32.gmra.mxu0 %v3681
        %v3816 = vpop.f32.mrf.mxu0
        %v3817 = vadd.f32 %v3729, %v3816
        %v3818 = vpop.f32.mrf.mxu0
        %3819 = vmatprep.mubr.f32.mxu0 %v3666
        %3820 = vmatmul.mubr.f32.gmra.mxu0 %v3682
        %v3821 = vpop.f32.mrf.mxu0
        %v3822 = vadd.f32 %v3729, %v3821
        %v3823 = vpop.f32.mrf.mxu0
        %3824 = vmatprep.mubr.f32.mxu0 %v3667
        %3825 = vmatmul.mubr.f32.gmra.mxu0 %v3683
        %v3826 = vpop.f32.mrf.mxu0
        %v3827 = vadd.f32 %v3729, %v3826
        %v3828 = vpop.f32.mrf.mxu0
        %3829 = vmatprep.mubr.f32.mxu0 %v3668
        %3830 = vmatmul.mubr.f32.gmra.mxu0 %v3684
        %v3831 = vpop.f32.mrf.mxu0
        %v3832 = vadd.f32 %v3729, %v3831
        %v3833 = vpop.f32.mrf.mxu0
        %3834 = vmatprep.mubr.f32.mxu0 %v3669
        %3835 = vmatmul.mubr.f32.gmra.mxu0 %v3685
        %v3836 = vpop.f32.mrf.mxu0
        %v3837 = vadd.f32 %v3729, %v3836
        %v3838 = vpop.f32.mrf.mxu0
        %3839 = vmatprep.mubr.f32.mxu0 %v3670
        %3840 = vmatmul.mubr.f32.gmra.mxu0 %v3686
        %v3841 = vpop.f32.mrf.mxu0
        %v3842 = vadd.f32 %v3729, %v3841
        %v3843 = vpop.f32.mrf.mxu0
        %3844 = vmatprep.mubr.f32.mxu0 %v3671
        %3845 = vmatmul.mubr.f32.gmra.mxu0 %v3687
        %v3846 = vpop.f32.mrf.mxu0
        %v3847 = vadd.f32 %v3729, %v3846
        %v3848 = vpop.f32.mrf.mxu0
        %3849 = vmatprep.mubr.f32.mxu0 %v3672
        %3850 = vmatmul.mubr.f32.gmra.mxu0 %v3688
        %v3851 = vpop.f32.mrf.mxu0
        %v3852 = vadd.f32 %v3729, %v3851
        %v3853 = vpop.f32.mrf.mxu0
        %3854 = vmatprep.mubr.f32.mxu0 %v3673
        %3855 = vmatmul.mubr.f32.gmra.mxu0 %v3689
        %v3856 = vpop.f32.mrf.mxu0
        %v3857 = vadd.f32 %v3729, %v3856
        %v3858 = vpop.f32.mrf.mxu0
        %3859 = vmatprep.mubr.f32.mxu0 %v3674
        %3860 = vmatmul.mubr.f32.gmra.mxu0 %v3690
        %v3861 = vpop.f32.mrf.mxu0
        %v3862 = vadd.f32 %v3729, %v3861
        %v3863 = vpop.f32.mrf.mxu0
        %3864 = vmatprep.mubr.f32.mxu0 %v3675
        %3865 = vmatmul.mubr.f32.gmra.mxu0 %v3691
        %v3866 = vpop.f32.mrf.mxu0
        %v3867 = vadd.f32 %v3729, %v3866
        %v3868 = vpop.f32.mrf.mxu0
        %3869 = vmatprep.mubr.f32.mxu0 %v3676
        %3870 = vmatmul.mubr.f32.gmra.mxu0 %v3692
        %v3871 = vpop.f32.mrf.mxu0
        %v3872 = vadd.f32 %v3729, %v3871
        %v3873 = vpop.f32.mrf.mxu0
        %3874 = vdwg.mxu0
        %vm3875 = vcmp.gt.f32.partialorder %v3797, 0.0
        %vm3876 = vcmp.gt.f32.partialorder %v3802, 0.0
        %vm3877 = vcmp.gt.f32.partialorder %v3807, 0.0
        %vm3878 = vcmp.gt.f32.partialorder %v3812, 0.0
        %vm3879 = vcmp.gt.f32.partialorder %v3817, 0.0
        %vm3880 = vcmp.gt.f32.partialorder %v3822, 0.0
        %vm3881 = vcmp.gt.f32.partialorder %v3827, 0.0
        %vm3882 = vcmp.gt.f32.partialorder %v3832, 0.0
        %vm3883 = vcmp.gt.f32.partialorder %v3837, 0.0
        %vm3884 = vcmp.gt.f32.partialorder %v3842, 0.0
        %vm3885 = vcmp.gt.f32.partialorder %v3847, 0.0
        %vm3886 = vcmp.gt.f32.partialorder %v3852, 0.0
        %vm3887 = vcmp.gt.f32.partialorder %v3857, 0.0
        %vm3888 = vcmp.gt.f32.partialorder %v3862, 0.0
        %vm3889 = vcmp.gt.f32.partialorder %v3867, 0.0
        %vm3890 = vcmp.gt.f32.partialorder %v3872, 0.0
        %v3891 = vstv %s3420
        %v3892 = vmul.f32 %v3891, %v3797
        %v3893 = vmul.f32 %v3891, %v3802
        %v3894 = vmul.f32 %v3891, %v3807
        %v3895 = vmul.f32 %v3891, %v3812
        %v3896 = vmul.f32 %v3891, %v3817
        %v3897 = vmul.f32 %v3891, %v3822
        %v3898 = vmul.f32 %v3891, %v3827
        %v3899 = vmul.f32 %v3891, %v3832
        %v3900 = vmul.f32 %v3891, %v3837
        %v3901 = vmul.f32 %v3891, %v3842
        %v3902 = vmul.f32 %v3891, %v3847
        %v3903 = vmul.f32 %v3891, %v3852
        %v3904 = vmul.f32 %v3891, %v3857
        %v3905 = vmul.f32 %v3891, %v3862
        %v3906 = vmul.f32 %v3891, %v3867
        %v3907 = vmul.f32 %v3891, %v3872
        %v3908 = vsel %vm3875, %v3797, %v3892
        %v3909 = vsel %vm3876, %v3802, %v3893
        %v3910 = vsel %vm3877, %v3807, %v3894
        %v3911 = vsel %vm3878, %v3812, %v3895
        %v3912 = vsel %vm3879, %v3817, %v3896
        %v3913 = vsel %vm3880, %v3822, %v3897
        %v3914 = vsel %vm3881, %v3827, %v3898
        %v3915 = vsel %vm3882, %v3832, %v3899
        %v3916 = vsel %vm3883, %v3837, %v3900
        %v3917 = vsel %vm3884, %v3842, %v3901
        %v3918 = vsel %vm3885, %v3847, %v3902
        %v3919 = vsel %vm3886, %v3852, %v3903
        %v3920 = vsel %vm3887, %v3857, %v3904
        %v3921 = vsel %vm3888, %v3862, %v3905
        %v3922 = vsel %vm3889, %v3867, %v3906
        %v3923 = vsel %vm3890, %v3872, %v3907
        %v3924 = vadd.f32 %v3908, %v3387
        %v3925 = vadd.f32 %v3909, %v3388
        %v3926 = vadd.f32 %v3910, %v3389
        %v3927 = vadd.f32 %v3911, %v3390
        %v3928 = vadd.f32 %v3912, %v3391
        %v3929 = vadd.f32 %v3913, %v3392
        %v3930 = vadd.f32 %v3914, %v3393
        %v3931 = vadd.f32 %v3915, %v3394
        %v3932 = vadd.f32 %v3916, %v3395
        %v3933 = vadd.f32 %v3917, %v3396
        %v3934 = vadd.f32 %v3918, %v3397
        %v3935 = vadd.f32 %v3919, %v3398
        %v3936 = vadd.f32 %v3920, %v3399
        %v3937 = vadd.f32 %v3921, %v3400
        %v3938 = vadd.f32 %v3922, %v3401
        %v3939 = vadd.f32 %v3923, %v3402
        %vm3940 = vcmp.gt.f32.partialorder %v3924, 0.0
        %vm3941 = vcmp.gt.f32.partialorder %v3925, 0.0
        %vm3942 = vcmp.gt.f32.partialorder %v3926, 0.0
        %vm3943 = vcmp.gt.f32.partialorder %v3927, 0.0
        %vm3944 = vcmp.gt.f32.partialorder %v3928, 0.0
        %vm3945 = vcmp.gt.f32.partialorder %v3929, 0.0
        %vm3946 = vcmp.gt.f32.partialorder %v3930, 0.0
        %vm3947 = vcmp.gt.f32.partialorder %v3931, 0.0
        %vm3948 = vcmp.gt.f32.partialorder %v3932, 0.0
        %vm3949 = vcmp.gt.f32.partialorder %v3933, 0.0
        %vm3950 = vcmp.gt.f32.partialorder %v3934, 0.0
        %vm3951 = vcmp.gt.f32.partialorder %v3935, 0.0
        %vm3952 = vcmp.gt.f32.partialorder %v3936, 0.0
        %vm3953 = vcmp.gt.f32.partialorder %v3937, 0.0
        %vm3954 = vcmp.gt.f32.partialorder %v3938, 0.0
        %vm3955 = vcmp.gt.f32.partialorder %v3939, 0.0
        %v3956 = vstv %s3421
        %v3957 = vmul.f32 %v3956, %v3924
        %v3958 = vmul.f32 %v3956, %v3925
        %v3959 = vmul.f32 %v3956, %v3926
        %v3960 = vmul.f32 %v3956, %v3927
        %v3961 = vmul.f32 %v3956, %v3928
        %v3962 = vmul.f32 %v3956, %v3929
        %v3963 = vmul.f32 %v3956, %v3930
        %v3964 = vmul.f32 %v3956, %v3931
        %v3965 = vmul.f32 %v3956, %v3932
        %v3966 = vmul.f32 %v3956, %v3933
        %v3967 = vmul.f32 %v3956, %v3934
        %v3968 = vmul.f32 %v3956, %v3935
        %v3969 = vmul.f32 %v3956, %v3936
        %v3970 = vmul.f32 %v3956, %v3937
        %v3971 = vmul.f32 %v3956, %v3938
        %v3972 = vmul.f32 %v3956, %v3939
        %v3973 = vsel %vm3940, %v3924, %v3957
        %v3974 = vsel %vm3941, %v3925, %v3958
        %v3975 = vsel %vm3942, %v3926, %v3959
        %v3976 = vsel %vm3943, %v3927, %v3960
        %v3977 = vsel %vm3944, %v3928, %v3961
        %v3978 = vsel %vm3945, %v3929, %v3962
        %v3979 = vsel %vm3946, %v3930, %v3963
        %v3980 = vsel %vm3947, %v3931, %v3964
        %v3981 = vsel %vm3948, %v3932, %v3965
        %v3982 = vsel %vm3949, %v3933, %v3966
        %v3983 = vsel %vm3950, %v3934, %v3967
        %v3984 = vsel %vm3951, %v3935, %v3968
        %v3985 = vsel %vm3952, %v3936, %v3969
        %v3986 = vsel %vm3953, %v3937, %v3970
        %v3987 = vsel %vm3954, %v3938, %v3971
        %v3988 = vsel %vm3955, %v3939, %v3972
        %v3989 = vadd.f32 %v3403, %v3908
        %v3990 = vadd.f32 %v3404, %v3909
        %v3991 = vadd.f32 %v3405, %v3910
        %v3992 = vadd.f32 %v3406, %v3911
        %v3993 = vadd.f32 %v3407, %v3912
        %v3994 = vadd.f32 %v3408, %v3913
        %v3995 = vadd.f32 %v3409, %v3914
        %v3996 = vadd.f32 %v3410, %v3915
        %v3997 = vadd.f32 %v3411, %v3916
        %v3998 = vadd.f32 %v3412, %v3917
        %v3999 = vadd.f32 %v3413, %v3918
        %v4000 = vadd.f32 %v3414, %v3919
        %v4001 = vadd.f32 %v3415, %v3920
        %v4002 = vadd.f32 %v3416, %v3921
        %v4003 = vadd.f32 %v3417, %v3922
        %v4004 = vadd.f32 %v3418, %v3923
        %s4005 = sld [smem:[#allocation2 + $0x12]]
        %s4006 = sld [smem:[#allocation2 + $0x13]]
        %s4007 = sld [smem:[#allocation2 + $0x14]]
        %vm4008 = vcmp.ge.s32.totalorder %v382, 32
        %vm4009 = vcmp.ge.s32.totalorder %v383, 32
        %vm4010 = vcmp.ge.s32.totalorder %v384, 32
        %vm4011 = vcmp.ge.s32.totalorder %v385, 32
        %vm4012 = vcmp.ge.s32.totalorder %v386, 32
        %vm4013 = vcmp.ge.s32.totalorder %v387, 32
        %vm4014 = vcmp.ge.s32.totalorder %v388, 32
        %vm4015 = vcmp.ge.s32.totalorder %v389, 32
        %v4016 = vsel %vm4008, %v3985, 0.0
        %v4017 = vsel %vm4009, %v3986, 0.0
        %v4018 = vsel %vm4010, %v3987, 0.0
        %v4019 = vsel %vm4011, %v3988, 0.0
        %v4020 = vsel %vm4012, %v3973, 0.0
        %v4021 = vsel %vm4013, %v3974, 0.0
        %v4022 = vsel %vm4014, %v3975, 0.0
        %v4023 = vsel %vm4015, %v3976, 0.0
        %v4024 = vsel %vm4008, %v3977, 0.0
        %v4025 = vsel %vm4009, %v3978, 0.0
        %v4026 = vsel %vm4010, %v3979, 0.0
        %v4027 = vsel %vm4011, %v3980, 0.0
        %v4028 = vsel %vm4012, %v3981, 0.0
        %v4029 = vsel %vm4013, %v3982, 0.0
        %v4030 = vsel %vm4014, %v3983, 0.0
        %v4031 = vsel %vm4015, %v3984, 0.0
        %s4032 = scalar_lea.vmem [#allocation5], 2560
        %v4033 = vld [vmem:[%s4032] sm:$0xff]
        %v4034 = vld [vmem:[%s4032 + $0x8] sm:$0xff]
        %v4035 = vld [vmem:[%s4032 + $0x10] sm:$0xff]
        %v4036 = vld [vmem:[%s4032 + $0x18] sm:$0xff]
        %v4037 = vld [vmem:[%s4032 + $0x20] sm:$0xff]
        %v4038 = vld [vmem:[%s4032 + $0x28] sm:$0xff]
        %v4039 = vld [vmem:[%s4032 + $0x30] sm:$0xff]
        %v4040 = vld [vmem:[%s4032 + $0x38] sm:$0xff]
        %v4041 = vld [vmem:[%s4032 + $0x40] sm:$0xff]
        %v4042 = vld [vmem:[%s4032 + $0x48] sm:$0xff]
        %v4043 = vld [vmem:[%s4032 + $0x50] sm:$0xff]
        %v4044 = vld [vmem:[%s4032 + $0x58] sm:$0xff]
        %v4045 = vld [vmem:[%s4032 + $0x60] sm:$0xff]
        %v4046 = vld [vmem:[%s4032 + $0x68] sm:$0xff]
        %v4047 = vld [vmem:[%s4032 + $0x70] sm:$0xff]
        %v4048 = vld [vmem:[%s4032 + $0x78] sm:$0xff]
        %v4049 = vld [vmem:[%s4032 + $0x80] sm:$0xff]
        %v4050 = vld [vmem:[%s4032 + $0x88] sm:$0xff]
        %v4051 = vld [vmem:[%s4032 + $0x90] sm:$0xff]
        %v4052 = vld [vmem:[%s4032 + $0x98] sm:$0xff]
        %v4053 = vld [vmem:[%s4032 + $0xa0] sm:$0xff]
        %v4054 = vld [vmem:[%s4032 + $0xa8] sm:$0xff]
        %v4055 = vld [vmem:[%s4032 + $0xb0] sm:$0xff]
        %v4056 = vld [vmem:[%s4032 + $0xb8] sm:$0xff]
        %v4057 = vld [vmem:[%s4032 + $0xc0] sm:$0xff]
        %v4058 = vld [vmem:[%s4032 + $0xc8] sm:$0xff]
        %v4059 = vld [vmem:[%s4032 + $0xd0] sm:$0xff]
        %v4060 = vld [vmem:[%s4032 + $0xd8] sm:$0xff]
        %v4061 = vld [vmem:[%s4032 + $0xe0] sm:$0xff]
        %v4062 = vld [vmem:[%s4032 + $0xe8] sm:$0xff]
        %v4063 = vld [vmem:[%s4032 + $0xf0] sm:$0xff]
        %v4064 = vld [vmem:[%s4032 + $0xf8] sm:$0xff]
        %v4065 = vlaneseq
        %v4066 = vshrl.u32 %v4065, 7
        %v4067 = vsub.s32 5, %v4066
        %v4068 = vrot.slane %v364, %v4067
        %4069 = vmatprep.subr.mxu0 0.0
        %4070 = vmatpush1.msra.mxu0 %v4048
        %4071 = vmatprep.subr.mxu0 0.0
        %4072 = vmatpush1.msra.mxu0 %v4047
        %4073 = vmatprep.subr.mxu0 0.0
        %4074 = vmatpush1.msra.mxu0 %v4046
        %4075 = vmatprep.subr.mxu0 0.0
        %4076 = vmatpush1.msra.mxu0 %v4045
        %4077 = vmatprep.subr.mxu0 0.0
        %4078 = vmatpush1.msra.mxu0 %v4044
        %4079 = vmatprep.subr.mxu0 0.0
        %4080 = vmatpush1.msra.mxu0 %v4043
        %4081 = vmatprep.subr.mxu0 0.0
        %4082 = vmatpush1.msra.mxu0 %v4042
        %4083 = vmatprep.subr.mxu0 0.0
        %4084 = vmatpush1.msra.mxu0 %v4041
        %4085 = vmatprep.subr.mxu0 0.0
        %4086 = vmatpush1.msra.mxu0 %v4040
        %4087 = vmatprep.subr.mxu0 0.0
        %4088 = vmatpush1.msra.mxu0 %v4039
        %4089 = vmatprep.subr.mxu0 0.0
        %4090 = vmatpush1.msra.mxu0 %v4038
        %4091 = vmatprep.subr.mxu0 0.0
        %4092 = vmatpush1.msra.mxu0 %v4037
        %4093 = vmatprep.subr.mxu0 0.0
        %4094 = vmatpush1.msra.mxu0 %v4036
        %4095 = vmatprep.subr.mxu0 0.0
        %4096 = vmatpush1.msra.mxu0 %v4035
        %4097 = vmatprep.subr.mxu0 0.0
        %4098 = vmatpush1.msra.mxu0 %v4034
        %4099 = vmatprep.subr.mxu0 0.0
        %4100 = vmatpush1.msra.mxu0 %v4033
        %4101 = vmatprep.subr.mxu0 0.0
        %4102 = vmatpush2.msra.mxu0 %v4064
        %4103 = vmatprep.subr.mxu0 0.0
        %4104 = vmatpush2.msra.mxu0 %v4063
        %4105 = vmatprep.subr.mxu0 0.0
        %4106 = vmatpush2.msra.mxu0 %v4062
        %4107 = vmatprep.subr.mxu0 0.0
        %4108 = vmatpush2.msra.mxu0 %v4061
        %4109 = vmatprep.subr.mxu0 0.0
        %4110 = vmatpush2.msra.mxu0 %v4060
        %4111 = vmatprep.subr.mxu0 0.0
        %4112 = vmatpush2.msra.mxu0 %v4059
        %4113 = vmatprep.subr.mxu0 0.0
        %4114 = vmatpush2.msra.mxu0 %v4058
        %4115 = vmatprep.subr.mxu0 0.0
        %4116 = vmatpush2.msra.mxu0 %v4057
        %4117 = vmatprep.subr.mxu0 0.0
        %4118 = vmatpush2.msra.mxu0 %v4056
        %4119 = vmatprep.subr.mxu0 0.0
        %4120 = vmatpush2.msra.mxu0 %v4055
        %4121 = vmatprep.subr.mxu0 0.0
        %4122 = vmatpush2.msra.mxu0 %v4054
        %4123 = vmatprep.subr.mxu0 0.0
        %4124 = vmatpush2.msra.mxu0 %v4053
        %4125 = vmatprep.subr.mxu0 0.0
        %4126 = vmatpush2.msra.mxu0 %v4052
        %4127 = vmatprep.subr.mxu0 0.0
        %4128 = vmatpush2.msra.mxu0 %v4051
        %4129 = vmatprep.subr.mxu0 0.0
        %4130 = vmatpush2.msra.mxu0 %v4050
        %4131 = vmatprep.subr.mxu0 0.0
        %4132 = vmatpush2.msra.mxu0 %v4049
        %4133 = vmatprep.mubr.f32.mxu0 %v3973
        %4134 = vmatmul.mubr.f32.gmra.mxu0 %v4016
        %v4135 = vpop.f32.mrf.mxu0
        %v4136 = vadd.f32 %v4068, %v4135
        %v4137 = vpop.f32.mrf.mxu0
        %4138 = vmatprep.mubr.f32.mxu0 %v3974
        %4139 = vmatmul.mubr.f32.gmra.mxu0 %v4017
        %v4140 = vpop.f32.mrf.mxu0
        %v4141 = vadd.f32 %v4068, %v4140
        %v4142 = vpop.f32.mrf.mxu0
        %4143 = vmatprep.mubr.f32.mxu0 %v3975
        %4144 = vmatmul.mubr.f32.gmra.mxu0 %v4018
        %v4145 = vpop.f32.mrf.mxu0
        %v4146 = vadd.f32 %v4068, %v4145
        %v4147 = vpop.f32.mrf.mxu0
        %4148 = vmatprep.mubr.f32.mxu0 %v3976
        %4149 = vmatmul.mubr.f32.gmra.mxu0 %v4019
        %v4150 = vpop.f32.mrf.mxu0
        %v4151 = vadd.f32 %v4068, %v4150
        %v4152 = vpop.f32.mrf.mxu0
        %4153 = vmatprep.mubr.f32.mxu0 %v3977
        %4154 = vmatmul.mubr.f32.gmra.mxu0 %v4020
        %v4155 = vpop.f32.mrf.mxu0
        %v4156 = vadd.f32 %v4068, %v4155
        %v4157 = vpop.f32.mrf.mxu0
        %4158 = vmatprep.mubr.f32.mxu0 %v3978
        %4159 = vmatmul.mubr.f32.gmra.mxu0 %v4021
        %v4160 = vpop.f32.mrf.mxu0
        %v4161 = vadd.f32 %v4068, %v4160
        %v4162 = vpop.f32.mrf.mxu0
        %4163 = vmatprep.mubr.f32.mxu0 %v3979
        %4164 = vmatmul.mubr.f32.gmra.mxu0 %v4022
        %v4165 = vpop.f32.mrf.mxu0
        %v4166 = vadd.f32 %v4068, %v4165
        %v4167 = vpop.f32.mrf.mxu0
        %4168 = vmatprep.mubr.f32.mxu0 %v3980
        %4169 = vmatmul.mubr.f32.gmra.mxu0 %v4023
        %v4170 = vpop.f32.mrf.mxu0
        %v4171 = vadd.f32 %v4068, %v4170
        %v4172 = vpop.f32.mrf.mxu0
        %4173 = vmatprep.mubr.f32.mxu0 %v3981
        %4174 = vmatmul.mubr.f32.gmra.mxu0 %v4024
        %v4175 = vpop.f32.mrf.mxu0
        %v4176 = vadd.f32 %v4068, %v4175
        %v4177 = vpop.f32.mrf.mxu0
        %4178 = vmatprep.mubr.f32.mxu0 %v3982
        %4179 = vmatmul.mubr.f32.gmra.mxu0 %v4025
        %v4180 = vpop.f32.mrf.mxu0
        %v4181 = vadd.f32 %v4068, %v4180
        %v4182 = vpop.f32.mrf.mxu0
        %4183 = vmatprep.mubr.f32.mxu0 %v3983
        %4184 = vmatmul.mubr.f32.gmra.mxu0 %v4026
        %v4185 = vpop.f32.mrf.mxu0
        %v4186 = vadd.f32 %v4068, %v4185
        %v4187 = vpop.f32.mrf.mxu0
        %4188 = vmatprep.mubr.f32.mxu0 %v3984
        %4189 = vmatmul.mubr.f32.gmra.mxu0 %v4027
        %v4190 = vpop.f32.mrf.mxu0
        %v4191 = vadd.f32 %v4068, %v4190
        %v4192 = vpop.f32.mrf.mxu0
        %4193 = vmatprep.mubr.f32.mxu0 %v3985
        %4194 = vmatmul.mubr.f32.gmra.mxu0 %v4028
        %v4195 = vpop.f32.mrf.mxu0
        %v4196 = vadd.f32 %v4068, %v4195
        %v4197 = vpop.f32.mrf.mxu0
        %4198 = vmatprep.mubr.f32.mxu0 %v3986
        %4199 = vmatmul.mubr.f32.gmra.mxu0 %v4029
        %v4200 = vpop.f32.mrf.mxu0
        %v4201 = vadd.f32 %v4068, %v4200
        %v4202 = vpop.f32.mrf.mxu0
        %4203 = vmatprep.mubr.f32.mxu0 %v3987
        %4204 = vmatmul.mubr.f32.gmra.mxu0 %v4030
        %v4205 = vpop.f32.mrf.mxu0
        %v4206 = vadd.f32 %v4068, %v4205
        %v4207 = vpop.f32.mrf.mxu0
        %4208 = vmatprep.mubr.f32.mxu0 %v3988
        %4209 = vmatmul.mubr.f32.gmra.mxu0 %v4031
        %v4210 = vpop.f32.mrf.mxu0
        %v4211 = vadd.f32 %v4068, %v4210
        %v4212 = vpop.f32.mrf.mxu0
        %4213 = vdwg.mxu0
        %vm4214 = vcmp.gt.f32.partialorder %v4136, 0.0
        %vm4215 = vcmp.gt.f32.partialorder %v4141, 0.0
        %vm4216 = vcmp.gt.f32.partialorder %v4146, 0.0
        %vm4217 = vcmp.gt.f32.partialorder %v4151, 0.0
        %vm4218 = vcmp.gt.f32.partialorder %v4156, 0.0
        %vm4219 = vcmp.gt.f32.partialorder %v4161, 0.0
        %vm4220 = vcmp.gt.f32.partialorder %v4166, 0.0
        %vm4221 = vcmp.gt.f32.partialorder %v4171, 0.0
        %vm4222 = vcmp.gt.f32.partialorder %v4176, 0.0
        %vm4223 = vcmp.gt.f32.partialorder %v4181, 0.0
        %vm4224 = vcmp.gt.f32.partialorder %v4186, 0.0
        %vm4225 = vcmp.gt.f32.partialorder %v4191, 0.0
        %vm4226 = vcmp.gt.f32.partialorder %v4196, 0.0
        %vm4227 = vcmp.gt.f32.partialorder %v4201, 0.0
        %vm4228 = vcmp.gt.f32.partialorder %v4206, 0.0
        %vm4229 = vcmp.gt.f32.partialorder %v4211, 0.0
        %v4230 = vstv %s4005
        %v4231 = vmul.f32 %v4230, %v4136
        %v4232 = vmul.f32 %v4230, %v4141
        %v4233 = vmul.f32 %v4230, %v4146
        %v4234 = vmul.f32 %v4230, %v4151
        %v4235 = vmul.f32 %v4230, %v4156
        %v4236 = vmul.f32 %v4230, %v4161
        %v4237 = vmul.f32 %v4230, %v4166
        %v4238 = vmul.f32 %v4230, %v4171
        %v4239 = vmul.f32 %v4230, %v4176
        %v4240 = vmul.f32 %v4230, %v4181
        %v4241 = vmul.f32 %v4230, %v4186
        %v4242 = vmul.f32 %v4230, %v4191
        %v4243 = vmul.f32 %v4230, %v4196
        %v4244 = vmul.f32 %v4230, %v4201
        %v4245 = vmul.f32 %v4230, %v4206
        %v4246 = vmul.f32 %v4230, %v4211
        %v4247 = vsel %vm4214, %v4136, %v4231
        %v4248 = vsel %vm4215, %v4141, %v4232
        %v4249 = vsel %vm4216, %v4146, %v4233
        %v4250 = vsel %vm4217, %v4151, %v4234
        %v4251 = vsel %vm4218, %v4156, %v4235
        %v4252 = vsel %vm4219, %v4161, %v4236
        %v4253 = vsel %vm4220, %v4166, %v4237
        %v4254 = vsel %vm4221, %v4171, %v4238
        %v4255 = vsel %vm4222, %v4176, %v4239
        %v4256 = vsel %vm4223, %v4181, %v4240
        %v4257 = vsel %vm4224, %v4186, %v4241
        %v4258 = vsel %vm4225, %v4191, %v4242
        %v4259 = vsel %vm4226, %v4196, %v4243
        %v4260 = vsel %vm4227, %v4201, %v4244
        %v4261 = vsel %vm4228, %v4206, %v4245
        %v4262 = vsel %vm4229, %v4211, %v4246
        %v4263 = vsel %vm4008, %v4259, 0.0
        %v4264 = vsel %vm4009, %v4260, 0.0
        %v4265 = vsel %vm4010, %v4261, 0.0
        %v4266 = vsel %vm4011, %v4262, 0.0
        %v4267 = vsel %vm4012, %v4247, 0.0
        %v4268 = vsel %vm4013, %v4248, 0.0
        %v4269 = vsel %vm4014, %v4249, 0.0
        %v4270 = vsel %vm4015, %v4250, 0.0
        %v4271 = vsel %vm4008, %v4251, 0.0
        %v4272 = vsel %vm4009, %v4252, 0.0
        %v4273 = vsel %vm4010, %v4253, 0.0
        %v4274 = vsel %vm4011, %v4254, 0.0
        %v4275 = vsel %vm4012, %v4255, 0.0
        %v4276 = vsel %vm4013, %v4256, 0.0
        %v4277 = vsel %vm4014, %v4257, 0.0
        %v4278 = vsel %vm4015, %v4258, 0.0
        %s4279 = scalar_lea.vmem [#allocation5], 2816
        %v4280 = vld [vmem:[%s4279] sm:$0xff]
        %v4281 = vld [vmem:[%s4279 + $0x8] sm:$0xff]
        %v4282 = vld [vmem:[%s4279 + $0x10] sm:$0xff]
        %v4283 = vld [vmem:[%s4279 + $0x18] sm:$0xff]
        %v4284 = vld [vmem:[%s4279 + $0x20] sm:$0xff]
        %v4285 = vld [vmem:[%s4279 + $0x28] sm:$0xff]
        %v4286 = vld [vmem:[%s4279 + $0x30] sm:$0xff]
        %v4287 = vld [vmem:[%s4279 + $0x38] sm:$0xff]
        %v4288 = vld [vmem:[%s4279 + $0x40] sm:$0xff]
        %v4289 = vld [vmem:[%s4279 + $0x48] sm:$0xff]
        %v4290 = vld [vmem:[%s4279 + $0x50] sm:$0xff]
        %v4291 = vld [vmem:[%s4279 + $0x58] sm:$0xff]
        %v4292 = vld [vmem:[%s4279 + $0x60] sm:$0xff]
        %v4293 = vld [vmem:[%s4279 + $0x68] sm:$0xff]
        %v4294 = vld [vmem:[%s4279 + $0x70] sm:$0xff]
        %v4295 = vld [vmem:[%s4279 + $0x78] sm:$0xff]
        %v4296 = vld [vmem:[%s4279 + $0x80] sm:$0xff]
        %v4297 = vld [vmem:[%s4279 + $0x88] sm:$0xff]
        %v4298 = vld [vmem:[%s4279 + $0x90] sm:$0xff]
        %v4299 = vld [vmem:[%s4279 + $0x98] sm:$0xff]
        %v4300 = vld [vmem:[%s4279 + $0xa0] sm:$0xff]
        %v4301 = vld [vmem:[%s4279 + $0xa8] sm:$0xff]
        %v4302 = vld [vmem:[%s4279 + $0xb0] sm:$0xff]
        %v4303 = vld [vmem:[%s4279 + $0xb8] sm:$0xff]
        %v4304 = vld [vmem:[%s4279 + $0xc0] sm:$0xff]
        %v4305 = vld [vmem:[%s4279 + $0xc8] sm:$0xff]
        %v4306 = vld [vmem:[%s4279 + $0xd0] sm:$0xff]
        %v4307 = vld [vmem:[%s4279 + $0xd8] sm:$0xff]
        %v4308 = vld [vmem:[%s4279 + $0xe0] sm:$0xff]
        %v4309 = vld [vmem:[%s4279 + $0xe8] sm:$0xff]
        %v4310 = vld [vmem:[%s4279 + $0xf0] sm:$0xff]
        %v4311 = vld [vmem:[%s4279 + $0xf8] sm:$0xff]
        %v4312 = vlaneseq
        %v4313 = vshrl.u32 %v4312, 7
        %v4314 = vsub.s32 6, %v4313
        %v4315 = vrot.slane %v364, %v4314
        %4316 = vmatprep.subr.mxu0 0.0
        %4317 = vmatpush1.msra.mxu0 %v4295
        %4318 = vmatprep.subr.mxu0 0.0
        %4319 = vmatpush1.msra.mxu0 %v4294
        %4320 = vmatprep.subr.mxu0 0.0
        %4321 = vmatpush1.msra.mxu0 %v4293
        %4322 = vmatprep.subr.mxu0 0.0
        %4323 = vmatpush1.msra.mxu0 %v4292
        %4324 = vmatprep.subr.mxu0 0.0
        %4325 = vmatpush1.msra.mxu0 %v4291
        %4326 = vmatprep.subr.mxu0 0.0
        %4327 = vmatpush1.msra.mxu0 %v4290
        %4328 = vmatprep.subr.mxu0 0.0
        %4329 = vmatpush1.msra.mxu0 %v4289
        %4330 = vmatprep.subr.mxu0 0.0
        %4331 = vmatpush1.msra.mxu0 %v4288
        %4332 = vmatprep.subr.mxu0 0.0
        %4333 = vmatpush1.msra.mxu0 %v4287
        %4334 = vmatprep.subr.mxu0 0.0
        %4335 = vmatpush1.msra.mxu0 %v4286
        %4336 = vmatprep.subr.mxu0 0.0
        %4337 = vmatpush1.msra.mxu0 %v4285
        %4338 = vmatprep.subr.mxu0 0.0
        %4339 = vmatpush1.msra.mxu0 %v4284
        %4340 = vmatprep.subr.mxu0 0.0
        %4341 = vmatpush1.msra.mxu0 %v4283
        %4342 = vmatprep.subr.mxu0 0.0
        %4343 = vmatpush1.msra.mxu0 %v4282
        %4344 = vmatprep.subr.mxu0 0.0
        %4345 = vmatpush1.msra.mxu0 %v4281
        %4346 = vmatprep.subr.mxu0 0.0
        %4347 = vmatpush1.msra.mxu0 %v4280
        %4348 = vmatprep.subr.mxu0 0.0
        %4349 = vmatpush2.msra.mxu0 %v4311
        %4350 = vmatprep.subr.mxu0 0.0
        %4351 = vmatpush2.msra.mxu0 %v4310
        %4352 = vmatprep.subr.mxu0 0.0
        %4353 = vmatpush2.msra.mxu0 %v4309
        %4354 = vmatprep.subr.mxu0 0.0
        %4355 = vmatpush2.msra.mxu0 %v4308
        %4356 = vmatprep.subr.mxu0 0.0
        %4357 = vmatpush2.msra.mxu0 %v4307
        %4358 = vmatprep.subr.mxu0 0.0
        %4359 = vmatpush2.msra.mxu0 %v4306
        %4360 = vmatprep.subr.mxu0 0.0
        %4361 = vmatpush2.msra.mxu0 %v4305
        %4362 = vmatprep.subr.mxu0 0.0
        %4363 = vmatpush2.msra.mxu0 %v4304
        %4364 = vmatprep.subr.mxu0 0.0
        %4365 = vmatpush2.msra.mxu0 %v4303
        %4366 = vmatprep.subr.mxu0 0.0
        %4367 = vmatpush2.msra.mxu0 %v4302
        %4368 = vmatprep.subr.mxu0 0.0
        %4369 = vmatpush2.msra.mxu0 %v4301
        %4370 = vmatprep.subr.mxu0 0.0
        %4371 = vmatpush2.msra.mxu0 %v4300
        %4372 = vmatprep.subr.mxu0 0.0
        %4373 = vmatpush2.msra.mxu0 %v4299
        %4374 = vmatprep.subr.mxu0 0.0
        %4375 = vmatpush2.msra.mxu0 %v4298
        %4376 = vmatprep.subr.mxu0 0.0
        %4377 = vmatpush2.msra.mxu0 %v4297
        %4378 = vmatprep.subr.mxu0 0.0
        %4379 = vmatpush2.msra.mxu0 %v4296
        %4380 = vmatprep.mubr.f32.mxu0 %v4247
        %4381 = vmatmul.mubr.f32.gmra.mxu0 %v4263
        %v4382 = vpop.f32.mrf.mxu0
        %v4383 = vadd.f32 %v4315, %v4382
        %v4384 = vpop.f32.mrf.mxu0
        %4385 = vmatprep.mubr.f32.mxu0 %v4248
        %4386 = vmatmul.mubr.f32.gmra.mxu0 %v4264
        %v4387 = vpop.f32.mrf.mxu0
        %v4388 = vadd.f32 %v4315, %v4387
        %v4389 = vpop.f32.mrf.mxu0
        %4390 = vmatprep.mubr.f32.mxu0 %v4249
        %4391 = vmatmul.mubr.f32.gmra.mxu0 %v4265
        %v4392 = vpop.f32.mrf.mxu0
        %v4393 = vadd.f32 %v4315, %v4392
        %v4394 = vpop.f32.mrf.mxu0
        %4395 = vmatprep.mubr.f32.mxu0 %v4250
        %4396 = vmatmul.mubr.f32.gmra.mxu0 %v4266
        %v4397 = vpop.f32.mrf.mxu0
        %v4398 = vadd.f32 %v4315, %v4397
        %v4399 = vpop.f32.mrf.mxu0
        %4400 = vmatprep.mubr.f32.mxu0 %v4251
        %4401 = vmatmul.mubr.f32.gmra.mxu0 %v4267
        %v4402 = vpop.f32.mrf.mxu0
        %v4403 = vadd.f32 %v4315, %v4402
        %v4404 = vpop.f32.mrf.mxu0
        %4405 = vmatprep.mubr.f32.mxu0 %v4252
        %4406 = vmatmul.mubr.f32.gmra.mxu0 %v4268
        %v4407 = vpop.f32.mrf.mxu0
        %v4408 = vadd.f32 %v4315, %v4407
        %v4409 = vpop.f32.mrf.mxu0
        %4410 = vmatprep.mubr.f32.mxu0 %v4253
        %4411 = vmatmul.mubr.f32.gmra.mxu0 %v4269
        %v4412 = vpop.f32.mrf.mxu0
        %v4413 = vadd.f32 %v4315, %v4412
        %v4414 = vpop.f32.mrf.mxu0
        %4415 = vmatprep.mubr.f32.mxu0 %v4254
        %4416 = vmatmul.mubr.f32.gmra.mxu0 %v4270
        %v4417 = vpop.f32.mrf.mxu0
        %v4418 = vadd.f32 %v4315, %v4417
        %v4419 = vpop.f32.mrf.mxu0
        %4420 = vmatprep.mubr.f32.mxu0 %v4255
        %4421 = vmatmul.mubr.f32.gmra.mxu0 %v4271
        %v4422 = vpop.f32.mrf.mxu0
        %v4423 = vadd.f32 %v4315, %v4422
        %v4424 = vpop.f32.mrf.mxu0
        %4425 = vmatprep.mubr.f32.mxu0 %v4256
        %4426 = vmatmul.mubr.f32.gmra.mxu0 %v4272
        %v4427 = vpop.f32.mrf.mxu0
        %v4428 = vadd.f32 %v4315, %v4427
        %v4429 = vpop.f32.mrf.mxu0
        %4430 = vmatprep.mubr.f32.mxu0 %v4257
        %4431 = vmatmul.mubr.f32.gmra.mxu0 %v4273
        %v4432 = vpop.f32.mrf.mxu0
        %v4433 = vadd.f32 %v4315, %v4432
        %v4434 = vpop.f32.mrf.mxu0
        %4435 = vmatprep.mubr.f32.mxu0 %v4258
        %4436 = vmatmul.mubr.f32.gmra.mxu0 %v4274
        %v4437 = vpop.f32.mrf.mxu0
        %v4438 = vadd.f32 %v4315, %v4437
        %v4439 = vpop.f32.mrf.mxu0
        %4440 = vmatprep.mubr.f32.mxu0 %v4259
        %4441 = vmatmul.mubr.f32.gmra.mxu0 %v4275
        %v4442 = vpop.f32.mrf.mxu0
        %v4443 = vadd.f32 %v4315, %v4442
        %v4444 = vpop.f32.mrf.mxu0
        %4445 = vmatprep.mubr.f32.mxu0 %v4260
        %4446 = vmatmul.mubr.f32.gmra.mxu0 %v4276
        %v4447 = vpop.f32.mrf.mxu0
        %v4448 = vadd.f32 %v4315, %v4447
        %v4449 = vpop.f32.mrf.mxu0
        %4450 = vmatprep.mubr.f32.mxu0 %v4261
        %4451 = vmatmul.mubr.f32.gmra.mxu0 %v4277
        %v4452 = vpop.f32.mrf.mxu0
        %v4453 = vadd.f32 %v4315, %v4452
        %v4454 = vpop.f32.mrf.mxu0
        %4455 = vmatprep.mubr.f32.mxu0 %v4262
        %4456 = vmatmul.mubr.f32.gmra.mxu0 %v4278
        %v4457 = vpop.f32.mrf.mxu0
        %v4458 = vadd.f32 %v4315, %v4457
        %v4459 = vpop.f32.mrf.mxu0
        %4460 = vdwg.mxu0
        %vm4461 = vcmp.gt.f32.partialorder %v4383, 0.0
        %vm4462 = vcmp.gt.f32.partialorder %v4388, 0.0
        %vm4463 = vcmp.gt.f32.partialorder %v4393, 0.0
        %vm4464 = vcmp.gt.f32.partialorder %v4398, 0.0
        %vm4465 = vcmp.gt.f32.partialorder %v4403, 0.0
        %vm4466 = vcmp.gt.f32.partialorder %v4408, 0.0
        %vm4467 = vcmp.gt.f32.partialorder %v4413, 0.0
        %vm4468 = vcmp.gt.f32.partialorder %v4418, 0.0
        %vm4469 = vcmp.gt.f32.partialorder %v4423, 0.0
        %vm4470 = vcmp.gt.f32.partialorder %v4428, 0.0
        %vm4471 = vcmp.gt.f32.partialorder %v4433, 0.0
        %vm4472 = vcmp.gt.f32.partialorder %v4438, 0.0
        %vm4473 = vcmp.gt.f32.partialorder %v4443, 0.0
        %vm4474 = vcmp.gt.f32.partialorder %v4448, 0.0
        %vm4475 = vcmp.gt.f32.partialorder %v4453, 0.0
        %vm4476 = vcmp.gt.f32.partialorder %v4458, 0.0
        %v4477 = vstv %s4006
        %v4478 = vmul.f32 %v4477, %v4383
        %v4479 = vmul.f32 %v4477, %v4388
        %v4480 = vmul.f32 %v4477, %v4393
        %v4481 = vmul.f32 %v4477, %v4398
        %v4482 = vmul.f32 %v4477, %v4403
        %v4483 = vmul.f32 %v4477, %v4408
        %v4484 = vmul.f32 %v4477, %v4413
        %v4485 = vmul.f32 %v4477, %v4418
        %v4486 = vmul.f32 %v4477, %v4423
        %v4487 = vmul.f32 %v4477, %v4428
        %v4488 = vmul.f32 %v4477, %v4433
        %v4489 = vmul.f32 %v4477, %v4438
        %v4490 = vmul.f32 %v4477, %v4443
        %v4491 = vmul.f32 %v4477, %v4448
        %v4492 = vmul.f32 %v4477, %v4453
        %v4493 = vmul.f32 %v4477, %v4458
        %v4494 = vsel %vm4461, %v4383, %v4478
        %v4495 = vsel %vm4462, %v4388, %v4479
        %v4496 = vsel %vm4463, %v4393, %v4480
        %v4497 = vsel %vm4464, %v4398, %v4481
        %v4498 = vsel %vm4465, %v4403, %v4482
        %v4499 = vsel %vm4466, %v4408, %v4483
        %v4500 = vsel %vm4467, %v4413, %v4484
        %v4501 = vsel %vm4468, %v4418, %v4485
        %v4502 = vsel %vm4469, %v4423, %v4486
        %v4503 = vsel %vm4470, %v4428, %v4487
        %v4504 = vsel %vm4471, %v4433, %v4488
        %v4505 = vsel %vm4472, %v4438, %v4489
        %v4506 = vsel %vm4473, %v4443, %v4490
        %v4507 = vsel %vm4474, %v4448, %v4491
        %v4508 = vsel %vm4475, %v4453, %v4492
        %v4509 = vsel %vm4476, %v4458, %v4493
        %v4510 = vadd.f32 %v4494, %v3973
        %v4511 = vadd.f32 %v4495, %v3974
        %v4512 = vadd.f32 %v4496, %v3975
        %v4513 = vadd.f32 %v4497, %v3976
        %v4514 = vadd.f32 %v4498, %v3977
        %v4515 = vadd.f32 %v4499, %v3978
        %v4516 = vadd.f32 %v4500, %v3979
        %v4517 = vadd.f32 %v4501, %v3980
        %v4518 = vadd.f32 %v4502, %v3981
        %v4519 = vadd.f32 %v4503, %v3982
        %v4520 = vadd.f32 %v4504, %v3983
        %v4521 = vadd.f32 %v4505, %v3984
        %v4522 = vadd.f32 %v4506, %v3985
        %v4523 = vadd.f32 %v4507, %v3986
        %v4524 = vadd.f32 %v4508, %v3987
        %v4525 = vadd.f32 %v4509, %v3988
        %vm4526 = vcmp.gt.f32.partialorder %v4510, 0.0
        %vm4527 = vcmp.gt.f32.partialorder %v4511, 0.0
        %vm4528 = vcmp.gt.f32.partialorder %v4512, 0.0
        %vm4529 = vcmp.gt.f32.partialorder %v4513, 0.0
        %vm4530 = vcmp.gt.f32.partialorder %v4514, 0.0
        %vm4531 = vcmp.gt.f32.partialorder %v4515, 0.0
        %vm4532 = vcmp.gt.f32.partialorder %v4516, 0.0
        %vm4533 = vcmp.gt.f32.partialorder %v4517, 0.0
        %vm4534 = vcmp.gt.f32.partialorder %v4518, 0.0
        %vm4535 = vcmp.gt.f32.partialorder %v4519, 0.0
        %vm4536 = vcmp.gt.f32.partialorder %v4520, 0.0
        %vm4537 = vcmp.gt.f32.partialorder %v4521, 0.0
        %vm4538 = vcmp.gt.f32.partialorder %v4522, 0.0
        %vm4539 = vcmp.gt.f32.partialorder %v4523, 0.0
        %vm4540 = vcmp.gt.f32.partialorder %v4524, 0.0
        %vm4541 = vcmp.gt.f32.partialorder %v4525, 0.0
        %v4542 = vstv %s4007
        %v4543 = vmul.f32 %v4542, %v4510
        %v4544 = vmul.f32 %v4542, %v4511
        %v4545 = vmul.f32 %v4542, %v4512
        %v4546 = vmul.f32 %v4542, %v4513
        %v4547 = vmul.f32 %v4542, %v4514
        %v4548 = vmul.f32 %v4542, %v4515
        %v4549 = vmul.f32 %v4542, %v4516
        %v4550 = vmul.f32 %v4542, %v4517
        %v4551 = vmul.f32 %v4542, %v4518
        %v4552 = vmul.f32 %v4542, %v4519
        %v4553 = vmul.f32 %v4542, %v4520
        %v4554 = vmul.f32 %v4542, %v4521
        %v4555 = vmul.f32 %v4542, %v4522
        %v4556 = vmul.f32 %v4542, %v4523
        %v4557 = vmul.f32 %v4542, %v4524
        %v4558 = vmul.f32 %v4542, %v4525
        %v4559 = vsel %vm4526, %v4510, %v4543
        %v4560 = vsel %vm4527, %v4511, %v4544
        %v4561 = vsel %vm4528, %v4512, %v4545
        %v4562 = vsel %vm4529, %v4513, %v4546
        %v4563 = vsel %vm4530, %v4514, %v4547
        %v4564 = vsel %vm4531, %v4515, %v4548
        %v4565 = vsel %vm4532, %v4516, %v4549
        %v4566 = vsel %vm4533, %v4517, %v4550
        %v4567 = vsel %vm4534, %v4518, %v4551
        %v4568 = vsel %vm4535, %v4519, %v4552
        %v4569 = vsel %vm4536, %v4520, %v4553
        %v4570 = vsel %vm4537, %v4521, %v4554
        %v4571 = vsel %vm4538, %v4522, %v4555
        %v4572 = vsel %vm4539, %v4523, %v4556
        %v4573 = vsel %vm4540, %v4524, %v4557
        %v4574 = vsel %vm4541, %v4525, %v4558
        %v4575 = vadd.f32 %v3989, %v4494
        %v4576 = vadd.f32 %v3990, %v4495
        %v4577 = vadd.f32 %v3991, %v4496
        %v4578 = vadd.f32 %v3992, %v4497
        %v4579 = vadd.f32 %v3993, %v4498
        %v4580 = vadd.f32 %v3994, %v4499
        %v4581 = vadd.f32 %v3995, %v4500
        %v4582 = vadd.f32 %v3996, %v4501
        %v4583 = vadd.f32 %v3997, %v4502
        %v4584 = vadd.f32 %v3998, %v4503
        %v4585 = vadd.f32 %v3999, %v4504
        %v4586 = vadd.f32 %v4000, %v4505
        %v4587 = vadd.f32 %v4001, %v4506
        %v4588 = vadd.f32 %v4002, %v4507
        %v4589 = vadd.f32 %v4003, %v4508
        %v4590 = vadd.f32 %v4004, %v4509
        %s4591 = sld [smem:[#allocation2 + $0x15]]
        %v4592 = vadd.f32 %v4559, %v4575
        %v4593 = vadd.f32 %v4560, %v4576
        %v4594 = vadd.f32 %v4561, %v4577
        %v4595 = vadd.f32 %v4562, %v4578
        %v4596 = vadd.f32 %v4563, %v4579
        %v4597 = vadd.f32 %v4564, %v4580
        %v4598 = vadd.f32 %v4565, %v4581
        %v4599 = vadd.f32 %v4566, %v4582
        %v4600 = vadd.f32 %v4567, %v4583
        %v4601 = vadd.f32 %v4568, %v4584
        %v4602 = vadd.f32 %v4569, %v4585
        %v4603 = vadd.f32 %v4570, %v4586
        %v4604 = vadd.f32 %v4571, %v4587
        %v4605 = vadd.f32 %v4572, %v4588
        %v4606 = vadd.f32 %v4573, %v4589
        %v4607 = vadd.f32 %v4574, %v4590
        %v4608 = vlaneseq
        %v4609 = vshrl.u32 %v4608, 7
        %v4610 = vsub.s32 2, %v4609
        %v4611 = vrot.slane %v362, %v4610
        %v4612 = vmul.f32 %v4592, %v4611
        %v4613 = vmul.f32 %v4593, %v4611
        %v4614 = vmul.f32 %v4594, %v4611
        %v4615 = vmul.f32 %v4595, %v4611
        %v4616 = vmul.f32 %v4596, %v4611
        %v4617 = vmul.f32 %v4597, %v4611
        %v4618 = vmul.f32 %v4598, %v4611
        %v4619 = vmul.f32 %v4599, %v4611
        %v4620 = vmul.f32 %v4600, %v4611
        %v4621 = vmul.f32 %v4601, %v4611
        %v4622 = vmul.f32 %v4602, %v4611
        %v4623 = vmul.f32 %v4603, %v4611
        %v4624 = vmul.f32 %v4604, %v4611
        %v4625 = vmul.f32 %v4605, %v4611
        %v4626 = vmul.f32 %v4606, %v4611
        %v4627 = vmul.f32 %v4607, %v4611
        %4629 = vset.pattern.permute.xlu0 0
        %4630 = vperm.xlu0 %4629, %v365
        %v4631 = vpop.permute.xlu0 %4630
        %4634 = vset.pattern.permute.xlu0 0
        %4635 = vperm.xlu0 %4634, %v366
        %v4636 = vpop.permute.xlu0 %4635
        %4639 = vset.pattern.permute.xlu0 0
        %4640 = vperm.xlu0 %4639, %v367
        %v4641 = vpop.permute.xlu0 %4640
        %4644 = vset.pattern.permute.xlu0 0
        %4645 = vperm.xlu0 %4644, %v368
        %v4646 = vpop.permute.xlu0 %4645
        %4649 = vset.pattern.permute.xlu0 0
        %4650 = vperm.xlu0 %4649, %v369
        %v4651 = vpop.permute.xlu0 %4650
        %4654 = vset.pattern.permute.xlu0 0
        %4655 = vperm.xlu0 %4654, %v370
        %v4656 = vpop.permute.xlu0 %4655
        %4659 = vset.pattern.permute.xlu0 0
        %4660 = vperm.xlu0 %4659, %v371
        %v4661 = vpop.permute.xlu0 %4660
        %4664 = vset.pattern.permute.xlu0 0
        %4665 = vperm.xlu0 %4664, %v372
        %v4666 = vpop.permute.xlu0 %4665
        %4669 = vset.pattern.permute.xlu0 0
        %4670 = vperm.xlu0 %4669, %v373
        %v4671 = vpop.permute.xlu0 %4670
        %4674 = vset.pattern.permute.xlu0 0
        %4675 = vperm.xlu0 %4674, %v374
        %v4676 = vpop.permute.xlu0 %4675
        %4679 = vset.pattern.permute.xlu0 0
        %4680 = vperm.xlu0 %4679, %v375
        %v4681 = vpop.permute.xlu0 %4680
        %4684 = vset.pattern.permute.xlu0 0
        %4685 = vperm.xlu0 %4684, %v376
        %v4686 = vpop.permute.xlu0 %4685
        %4689 = vset.pattern.permute.xlu0 0
        %4690 = vperm.xlu0 %4689, %v377
        %v4691 = vpop.permute.xlu0 %4690
        %4694 = vset.pattern.permute.xlu0 0
        %4695 = vperm.xlu0 %4694, %v378
        %v4696 = vpop.permute.xlu0 %4695
        %4699 = vset.pattern.permute.xlu0 0
        %4700 = vperm.xlu0 %4699, %v379
        %v4701 = vpop.permute.xlu0 %4700
        %4704 = vset.pattern.permute.xlu0 0
        %4705 = vperm.xlu0 %4704, %v380
        %v4706 = vpop.permute.xlu0 %4705
        %v4708 = vmul.f32 %v4612, %v4631
        %v4709 = vmul.f32 %v4613, %v4636
        %v4710 = vmul.f32 %v4614, %v4641
        %v4711 = vmul.f32 %v4615, %v4646
        %v4712 = vmul.f32 %v4616, %v4651
        %v4713 = vmul.f32 %v4617, %v4656
        %v4714 = vmul.f32 %v4618, %v4661
        %v4715 = vmul.f32 %v4619, %v4666
        %v4716 = vmul.f32 %v4620, %v4671
        %v4717 = vmul.f32 %v4621, %v4676
        %v4718 = vmul.f32 %v4622, %v4681
        %v4719 = vmul.f32 %v4623, %v4686
        %v4720 = vmul.f32 %v4624, %v4691
        %v4721 = vmul.f32 %v4625, %v4696
        %v4722 = vmul.f32 %v4626, %v4701
        %v4723 = vmul.f32 %v4627, %v4706
        %v4724 = vadd.f32 %v4708, %v4709
        %v4725 = vadd.f32 %v4724, %v4710
        %v4726 = vadd.f32 %v4725, %v4711
        %v4727 = vadd.f32 %v4726, %v4712
        %v4728 = vadd.f32 %v4727, %v4713
        %v4729 = vadd.f32 %v4728, %v4714
        %v4730 = vadd.f32 %v4729, %v4715
        %v4731 = vrot.slane %v4730, 4
        %v4732 = vadd.f32 %v4730, %v4731
        %v4733 = vrot.slane %v4732, 2
        %v4734 = vadd.f32 %v4732, %v4733
        %v4735 = vrot.slane %v4734, 1
        %v4736 = vadd.f32 %v4734, %v4735
        %v4737 = vadd.f32 %v4716, %v4717
        %v4738 = vadd.f32 %v4737, %v4718
        %v4739 = vadd.f32 %v4738, %v4719
        %v4740 = vadd.f32 %v4739, %v4720
        %v4741 = vadd.f32 %v4740, %v4721
        %v4742 = vadd.f32 %v4741, %v4722
        %v4743 = vadd.f32 %v4742, %v4723
        %v4744 = vrot.slane %v4743, 4
        %v4745 = vadd.f32 %v4743, %v4744
        %v4746 = vrot.slane %v4745, 2
        %v4747 = vadd.f32 %v4745, %v4746
        %v4748 = vrot.slane %v4747, 1
        %v4749 = vadd.f32 %v4747, %v4748
        %vm4752 = vcmask 1041409
        %v4753 = vsel %vm4752, %v4749, %v4736
        %vm4755 = vcmask 1041408
        %v4756 = vsel %vm4755, %v4753, 0.0
        %4757 = vadd.xlane.f32.xlu0 %v4756
        %v4758 = vpop.xlane.xlu0 %4757
        %v4759 = vstv %s4591
        %v4760 = vadd.f32 %v4758, %v4759
        %v4761 = vxor.u32 %v4760, 2147483648
        %v4762 = vmul.f32 %v4761, 1.442695
        %v4763 = vpow.pop %v4762
        %v4764 = vadd.f32 %v4763, 1.0
        %v4765 = vrcp.pop %v4764
        %v4766 = vmul.f32 1.0, %v4765
        %4767 = vst [vmem:[%s345] sm:$0x3] %v4766
        %p4768 = scmp.lt.s32.totalorder %s22, 1
        %s4769 = scalar_select %p4768, %s22, 1
        %s4770 = smul.addr %s4769, 2
        %s4771 = scalar_lea.vmem %s7, %s4770
        // Predicated region
        $region69: #{discriminator_forward.1} parent=47 // pred_check
          %p4772 = pneg %p192
        $region70: #{discriminator_forward.1} parent=47 // pred_check_branch
          %4774 = sbr.rel (%p4772) target = $region72
        $region71: #{discriminator_forward.1} parent=47 // pred_region
          _
        $region72: #{discriminator_forward.1} parent=47 // pred_fallthru
          _
      $region48: #{discriminator_forward.1} parent=5 // pred_fallthru
        _
      %p4775 = scmp.le.s32.totalorder 2, %s17
      // Predicated region
      $region73: #{discriminator_forward.1} parent=5 // pred_check
        %p4776 = pneg %p4775
      $region74: #{discriminator_forward.1} parent=5 // pred_check_branch
        %4778 = sbr.rel (%p4776) target = $region76
      $region75: #{discriminator_forward.1} parent=5 // pred_region
        %s4779 = ssub.s32 %s17, 2
        // Predicated region
        $region77: #{discriminator_forward.1} parent=75 // pred_check
          %p4780 = pneg %p198
        $region78: #{discriminator_forward.1} parent=75 // pred_check_branch
          %4782 = sbr.rel (%p4780) target = $region80
        $region79: #{discriminator_forward.1} parent=75 // pred_region
          %p4783 = scmp.lt.s32.totalorder %s23, 1
          %s4784 = scalar_select %p4783, %s23, 1
          %s4785 = smul.addr %s4784, 2
          %s4786 = scalar_lea.vmem %s7, %s4785
        $region80: #{discriminator_forward.1} parent=75 // pred_fallthru
          _
      $region76: #{discriminator_forward.1} parent=5 // pred_fallthru
        _
    $region6: #{discriminator_forward.1} parent=1 // loop_footer
      %s21 = sadd.s32 1, %s17
    $region7: #{discriminator_forward.1} parent=1 // loop_footer_branch
      %16 = sbr.rel target = $region3
    $region8: #{discriminator_forward.1} parent=1 // loop_exit
      _
    %4787 = vsyncpa [#allocation3], 1
    %s4788 = scalar_lea.sflag [#allocation3], 1
    %4789 = vsyncpa %s4788, 1
    %4790 = vsyncpa [#allocation7], 1
    %4791 = vsyncpa [#allocation10], 1
    %4792 = vsyncpa [#allocation4], 1
    %s4793 = scalar_lea.sflag [#allocation4], 1
    %4794 = vsyncpa %s4793, 1

</llo_original>
